<compile_context>
chip_gen: v7x
topology: tpu7x:2x2x1
jax: 0.10.0
libtpu: 0.0.40
codegen_flags: <defaults>
</compile_context>

<pallas_src>
import numpy as np
import jax
import jax.numpy as jnp
from jax.experimental import pallas as pl
from jax.experimental.pallas import tpu as pltpu

# ---------------- small synthetic config ----------------
T = 8          # sequence length (steps_size)
B = 2          # batch
N_IN = 4       # input_size
E = 128        # encoder_size (module default; keeps all lane slices 128-aligned)
L = 16         # u_latent_size
F = 4          # factor_size
CLIP = 5.0
# AR1_Calcium fixed (non-learnable) parameters from PARAMS
GAIN = 1.0
BIAS = 0.0
TAU = 10.0
DAMP = max((TAU - 1.0) / TAU, 0.0)   # = 0.9

_VMEM = pl.BlockSpec(memory_space=pltpu.MemorySpace.VMEM)


# ---------------- fused Pallas kernel ----------------
def calcium_net_kernel(x_ref, h0_ref, wih_ref, whh_f_ref, whh_b_ref,
                       bi_ref, bhn_f_ref, bhn_b_ref,
                       g_ref, c0_ref, w_spk_ref, b_spk_ref,
                       L_ref, D_ref, bc_ref,
                       enc_ref, cal_ref, spk_ref,
                       xg_ref):
    TB = x_ref.shape[0]                     # T * B (flattened time x batch rows)
    Eh = whh_f_ref.shape[0]                 # encoder hidden size
    Bn = c0_ref.shape[0]                    # batch
    Tn = TB // Bn                           # steps
    n_out = w_spk_ref.shape[1]              # spike / calcium channels (= input_size)

    # ---- batched, time-parallel prologue (2 MXU issues instead of 2*T) ----
    # Both directions' (r,z,n) input projections for ALL steps in ONE matmul -> [TB, 6E]
    bi = jnp.broadcast_to(bi_ref[...], (TB, 6 * Eh))
    xg_ref[...] = jnp.dot(x_ref[...], wih_ref[...],
                          preferred_element_type=jnp.float32) + bi

    # Spike_Generator for all steps: Linear -> exp - 1 -> clamp(min=0)
    b_spk = jnp.broadcast_to(b_spk_ref[...], (TB, n_out))
    logit = jnp.dot(g_ref[...], w_spk_ref[...],
                    preferred_element_type=jnp.float32) + b_spk
    spk = jnp.maximum(jnp.exp(logit) - 1.0, 0.0)
    spk_ref[...] = spk

    # ---- AR1 calcium in closed form (replaces the T-deep serial VPU tail) ----
    #   c_t = damp^(t+1)*c0 + gain*sum_{k<=t} damp^(t-k)*s_k + bias*sum_{j<=t} damp^j
    # L_ref = gain * lower-triangular(damp powers) (x) I_B,  D_ref = damp^(t+1) (x) I_B.
    cal_ref[...] = (jnp.dot(L_ref[...], spk, preferred_element_type=jnp.float32)
                    + jnp.dot(D_ref[...], c0_ref[...],
                              preferred_element_type=jnp.float32)
                    + jnp.broadcast_to(bc_ref[...], (TB, n_out)))

    # ---- bidirectional GRU recurrence: the only remaining serial chain ----
    bhn_f = jnp.broadcast_to(bhn_f_ref[...], (Bn, Eh))   # broadcasts hoisted once
    bhn_b = jnp.broadcast_to(bhn_b_ref[...], (Bn, Eh))

    def gru_step(xg, h, whh_ref_, bhn):
        # TODO(synk): at M=B=2 the per-step [E,3E] RHS push dominates; staging W_hh
        # across the unrolled steps via pltpu.matmul_push_rhs/matmul_acc_lhs would cut
        # it further but needs per-chip MXU-tile handling, so jnp.dot is kept here.
        hg = jnp.dot(h, whh_ref_[...], preferred_element_type=jnp.float32)   # [B, 3E]
        r = jax.nn.sigmoid(xg[:, 0:Eh] + hg[:, 0:Eh])
        z = jax.nn.sigmoid(xg[:, Eh:2 * Eh] + hg[:, Eh:2 * Eh])
        n = jnp.tanh(xg[:, 2 * Eh:3 * Eh] + r * (hg[:, 2 * Eh:3 * Eh] + bhn))
        return (1.0 - z) * n + z * h

    hf = h0_ref[0]                           # [B, E]
    hb = h0_ref[1]
    for t in range(Tn):                      # static, fully unrolled
        tb = Tn - 1 - t
        # load only the needed half of the projection (static row/lane slices)
        xg_f = xg_ref[t * Bn:(t + 1) * Bn, 0:3 * Eh]
        xg_b = xg_ref[tb * Bn:(tb + 1) * Bn, 3 * Eh:6 * Eh]
        # fwd & bwd interleaved: two independent chains hide each other's latency
        hf = gru_step(xg_f, hf, whh_f_ref, bhn_f)
        hb = gru_step(xg_b, hb, whh_b_ref, bhn_b)
        # clamp applies only to the output copy (state stays unclamped, as reference);
        # direct 128-lane-aligned stores, fire-and-forget, off the serial chain.
        enc_ref[t * Bn:(t + 1) * Bn, 0:Eh] = jnp.clip(hf, -CLIP, CLIP)
        enc_ref[tb * Bn:(tb + 1) * Bn, Eh:2 * Eh] = jnp.clip(hb, -CLIP, CLIP)


# ---------------- wrapper ----------------
@jax.jit
def calcium_net_forward(x, h0, wih_all, whh_f, whh_b, bi_all, bhn_f, bhn_b,
                        gen_in, c0, w_spk, b_spk, ar1_L, ar1_D, ar1_bc):
    Tn, Bn, _ = x.shape
    x2d = x.reshape(Tn * Bn, -1)          # free row-major reshapes (layout metadata)
    g2d = gen_in.reshape(Tn * Bn, -1)
    enc, cal, spk = pl.pallas_call(
        calcium_net_kernel,
        out_shape=(jax.ShapeDtypeStruct((Tn * Bn, 2 * E), jnp.float32),
                   jax.ShapeDtypeStruct((Tn * Bn, N_IN), jnp.float32),
                   jax.ShapeDtypeStruct((Tn * Bn, N_IN), jnp.float32)),
        in_specs=[_VMEM] * 15,
        out_specs=(_VMEM, _VMEM, _VMEM),
        scratch_shapes=[pltpu.VMEM((Tn * Bn, 6 * E), jnp.float32)],  # x-projections
    )(x2d, h0, wih_all, whh_f, whh_b, bi_all, bhn_f, bhn_b,
      g2d, c0, w_spk, b_spk, ar1_L, ar1_D, ar1_bc)
    return (enc.reshape(Tn, Bn, 2 * E),
            cal.reshape(Tn, Bn, N_IN),
            spk.reshape(Tn, Bn, N_IN))


# ---------------- AR1 closed-form constants (built once on host) ----------------
def ar1_constants():
    t = np.arange(T)
    low = np.where(t[:, None] >= t[None, :],
                   DAMP ** (t[:, None] - t[None, :]), 0.0)            # [T, T]
    L_c = np.kron(GAIN * low, np.eye(B)).astype(np.float32)           # [T*B, T*B]
    D_c = np.kron((DAMP ** (t + 1))[:, None],
                  np.eye(B)).astype(np.float32)                       # [T*B, B]
    bc = np.repeat(BIAS * np.cumsum(DAMP ** t), B).astype(np.float32)[:, None]  # [T*B,1]
    return jnp.asarray(L_c), jnp.asarray(D_c), jnp.asarray(bc)


# ---------------- deterministic parameter init ----------------
def init_params(key):
    """Mirrors Calcium_Net.initialize_weights: weight ~ N(0, fan_in^-1); biases zero."""
    ks = jax.random.split(key, 5)

    def nrm(k, shape, fan_in):
        return jax.random.normal(k, shape, jnp.float32) * (fan_in ** -0.5)

    # GRU weights, gate order (r, z, n) stacked along the output axis.
    wih_f = nrm(ks[0], (N_IN, 3 * E), N_IN)
    wih_b = nrm(ks[1], (N_IN, 3 * E), N_IN)
    whh_f = nrm(ks[2], (E, 3 * E), E)
    whh_b = nrm(ks[3], (E, 3 * E), E)
    wih_all = jnp.concatenate([wih_f, wih_b], axis=1)          # [N_IN, 6E] (fwd | bwd)

    # Pre-folded biases: [b_ir+b_hr | b_iz+b_hz | b_in] per direction; b_hn kept
    # separate because the n gate needs r * (W_hn h + b_hn). All zero at init.
    bi_all = jnp.zeros((1, 6 * E), jnp.float32)
    bhn_f = jnp.zeros((1, E), jnp.float32)
    bhn_b = jnp.zeros((1, E), jnp.float32)

    # Spike_Generator fc_logspike: in = L + F, out = N_IN
    w_spk = nrm(ks[4], (L + F, N_IN), L + F)
    b_spk = jnp.zeros((1, N_IN), jnp.float32)
    return (wih_all, whh_f, whh_b, bi_all, bhn_f, bhn_b), (w_spk, b_spk)


if __name__ == "__main__":
    key = jax.random.PRNGKey(0)
    k_x, k_g, k_p = jax.random.split(key, 3)

    # input fluorescence trace: [steps, batch, input_size]
    x = jax.random.normal(k_x, (T, B, N_IN), jnp.float32)

    # initialize_hidden_states: encoder_init (zeros param, shape [2, E]) broadcast over batch
    encoder_init = jnp.zeros((2, E), jnp.float32)
    h0 = jnp.broadcast_to(encoder_init[:, None, :], (2, B, E)).astype(jnp.float32)

    enc_params, (w_spk, b_spk) = init_params(k_p)

    # TODO(synk): lfads.LFADS_ControllerCell is not defined in the reference source;
    # the generator input (sampled u latent concat factors) is synthesized here instead.
    gen_in = jax.random.normal(k_g, (T, B, L + F), jnp.float32)
    c0 = jnp.zeros((B, N_IN), jnp.float32)        # initial calcium state

    ar1_L, ar1_D, ar1_bc = ar1_constants()

    enc_out, calcium, spikes = calcium_net_forward(
        x, h0, *enc_params, gen_in, c0, w_spk, b_spk, ar1_L, ar1_D, ar1_bc)
    enc_out, calcium, spikes = jax.block_until_ready((enc_out, calcium, spikes))

    assert enc_out.shape == (T, B, 2 * E)
    assert calcium.shape == (T, B, N_IN) and spikes.shape == (T, B, N_IN)
    print("KERNEL_OK")
</pallas_src>

<mosaic_0001>
module attributes {stable_mosaic.version = 11 : i64} {
  func.func @calcium_net_kernel(%arg0: memref<16x4xf32, #tpu.memory_space<vmem>>, %arg1: memref<2x2x128xf32, #tpu.memory_space<vmem>>, %arg2: memref<4x768xf32, #tpu.memory_space<vmem>>, %arg3: memref<128x384xf32, #tpu.memory_space<vmem>>, %arg4: memref<128x384xf32, #tpu.memory_space<vmem>>, %arg5: memref<1x768xf32, #tpu.memory_space<vmem>>, %arg6: memref<1x128xf32, #tpu.memory_space<vmem>>, %arg7: memref<1x128xf32, #tpu.memory_space<vmem>>, %arg8: memref<16x20xf32, #tpu.memory_space<vmem>>, %arg9: memref<2x4xf32, #tpu.memory_space<vmem>>, %arg10: memref<20x4xf32, #tpu.memory_space<vmem>>, %arg11: memref<1x4xf32, #tpu.memory_space<vmem>>, %arg12: memref<16x16xf32, #tpu.memory_space<vmem>>, %arg13: memref<16x2xf32, #tpu.memory_space<vmem>>, %arg14: memref<16x1xf32, #tpu.memory_space<vmem>>, %arg15: memref<16x256xf32, #tpu.memory_space<vmem>>, %arg16: memref<16x4xf32, #tpu.memory_space<vmem>>, %arg17: memref<16x4xf32, #tpu.memory_space<vmem>>, %arg18: memref<16x768xf32, #tpu.memory_space<vmem>>) attributes {dimension_semantics = [], scalar_prefetch = 0 : i64, scratch_operands = 1 : i64, tpu.core_type = #tpu.core_type<tc>} {
    %c0 = arith.constant 0 : index
    %c0_0 = arith.constant 0 : index
    %0 = vector.load %arg5[%c0, %c0_0] : memref<1x768xf32, #tpu.memory_space<vmem>>, vector<1x768xf32>
    %1 = vector.shape_cast %0 : vector<1x768xf32> to vector<1x768xf32>
    %2 = vector.broadcast %1 : vector<1x768xf32> to vector<16x768xf32>
    %c0_1 = arith.constant 0 : index
    %c0_2 = arith.constant 0 : index
    %3 = vector.load %arg0[%c0_1, %c0_2] : memref<16x4xf32, #tpu.memory_space<vmem>>, vector<16x4xf32>
    %c0_3 = arith.constant 0 : index
    %c0_4 = arith.constant 0 : index
    %4 = vector.load %arg2[%c0_3, %c0_4] : memref<4x768xf32, #tpu.memory_space<vmem>>, vector<4x768xf32>
    %cst = arith.constant dense<0.000000e+00> : vector<16x768xf32>
    %5 = tpu.matmul %3, %4, %cst {dimension_numbers = #tpu.dot_dimension_numbers<[1], [0], [0], [1], [0, 0, 1, 1], [], []>} : vector<16x4xf32>, vector<4x768xf32>, vector<16x768xf32> -> vector<16x768xf32>
    %6 = arith.addf %5, %2 : vector<16x768xf32>
    %c0_5 = arith.constant 0 : index
    %c0_6 = arith.constant 0 : index
    %7 = vector.load %arg18[%c0_5, %c0_6] : memref<16x768xf32, #tpu.memory_space<vmem>>, vector<16x768xf32>
    tpu.vector_store %arg18[%c0_5, %c0_6], %6 {strides = array<i32>} : memref<16x768xf32, #tpu.memory_space<vmem>>, vector<16x768xf32>,
    %c0_7 = arith.constant 0 : index
    %c0_8 = arith.constant 0 : index
    %8 = vector.load %arg11[%c0_7, %c0_8] : memref<1x4xf32, #tpu.memory_space<vmem>>, vector<1x4xf32>
    %9 = vector.shape_cast %8 : vector<1x4xf32> to vector<1x4xf32>
    %10 = vector.broadcast %9 : vector<1x4xf32> to vector<16x4xf32>
    %c0_9 = arith.constant 0 : index
    %c0_10 = arith.constant 0 : index
    %11 = vector.load %arg8[%c0_9, %c0_10] : memref<16x20xf32, #tpu.memory_space<vmem>>, vector<16x20xf32>
    %c0_11 = arith.constant 0 : index
    %c0_12 = arith.constant 0 : index
    %12 = vector.load %arg10[%c0_11, %c0_12] : memref<20x4xf32, #tpu.memory_space<vmem>>, vector<20x4xf32>
    %cst_13 = arith.constant dense<0.000000e+00> : vector<16x4xf32>
    %13 = tpu.matmul %11, %12, %cst_13 {dimension_numbers = #tpu.dot_dimension_numbers<[1], [0], [0], [1], [0, 0, 1, 1], [], []>} : vector<16x20xf32>, vector<20x4xf32>, vector<16x4xf32> -> vector<16x4xf32>
    %14 = arith.addf %13, %10 : vector<16x4xf32>
    %15 = math.exp %14 : vector<16x4xf32>
    %cst_14 = arith.constant 1.000000e+00 : f32
    %16 = vector.broadcast %cst_14 : f32 to vector<16x4xf32>
    %17 = arith.subf %15, %16 : vector<16x4xf32>
    %cst_15 = arith.constant 0.000000e+00 : f32
    %18 = vector.broadcast %cst_15 : f32 to vector<16x4xf32>
    %19 = arith.maximumf %17, %18 : vector<16x4xf32>
    %c0_16 = arith.constant 0 : index
    %c0_17 = arith.constant 0 : index
    %20 = vector.load %arg17[%c0_16, %c0_17] : memref<16x4xf32, #tpu.memory_space<vmem>>, vector<16x4xf32>
    tpu.vector_store %arg17[%c0_16, %c0_17], %19 {strides = array<i32>} : memref<16x4xf32, #tpu.memory_space<vmem>>, vector<16x4xf32>,
    %c0_18 = arith.constant 0 : index
    %c0_19 = arith.constant 0 : index
    %21 = vector.load %arg12[%c0_18, %c0_19] : memref<16x16xf32, #tpu.memory_space<vmem>>, vector<16x16xf32>
    %cst_20 = arith.constant dense<0.000000e+00> : vector<16x4xf32>
    %22 = tpu.matmul %21, %19, %cst_20 {dimension_numbers = #tpu.dot_dimension_numbers<[1], [0], [0], [1], [0, 0, 1, 1], [], []>} : vector<16x16xf32>, vector<16x4xf32>, vector<16x4xf32> -> vector<16x4xf32>
    %c0_21 = arith.constant 0 : index
    %c0_22 = arith.constant 0 : index
    %23 = vector.load %arg13[%c0_21, %c0_22] : memref<16x2xf32, #tpu.memory_space<vmem>>, vector<16x2xf32>
    %c0_23 = arith.constant 0 : index
    %c0_24 = arith.constant 0 : index
    %24 = vector.load %arg9[%c0_23, %c0_24] : memref<2x4xf32, #tpu.memory_space<vmem>>, vector<2x4xf32>
    %cst_25 = arith.constant dense<0.000000e+00> : vector<16x4xf32>
    %25 = tpu.matmul %23, %24, %cst_25 {dimension_numbers = #tpu.dot_dimension_numbers<[1], [0], [0], [1], [0, 0, 1, 1], [], []>} : vector<16x2xf32>, vector<2x4xf32>, vector<16x4xf32> -> vector<16x4xf32>
    %26 = arith.addf %22, %25 : vector<16x4xf32>
    %c0_26 = arith.constant 0 : index
    %c0_27 = arith.constant 0 : index
    %27 = vector.load %arg14[%c0_26, %c0_27] : memref<16x1xf32, #tpu.memory_space<vmem>>, vector<16x1xf32>
    %28 = vector.shape_cast %27 : vector<16x1xf32> to vector<16x1xf32>
    %29 = vector.broadcast %28 : vector<16x1xf32> to vector<16x4xf32>
    %30 = arith.addf %26, %29 : vector<16x4xf32>
    %c0_28 = arith.constant 0 : index
    %c0_29 = arith.constant 0 : index
    %31 = vector.load %arg16[%c0_28, %c0_29] : memref<16x4xf32, #tpu.memory_space<vmem>>, vector<16x4xf32>
    tpu.vector_store %arg16[%c0_28, %c0_29], %30 {strides = array<i32>} : memref<16x4xf32, #tpu.memory_space<vmem>>, vector<16x4xf32>,
    %c0_30 = arith.constant 0 : index
    %c0_31 = arith.constant 0 : index
    %32 = vector.load %arg6[%c0_30, %c0_31] : memref<1x128xf32, #tpu.memory_space<vmem>>, vector<1x128xf32>
    %33 = vector.shape_cast %32 : vector<1x128xf32> to vector<1x128xf32>
    %34 = vector.broadcast %33 : vector<1x128xf32> to vector<2x128xf32>
    %c0_32 = arith.constant 0 : index
    %c0_33 = arith.constant 0 : index
    %35 = vector.load %arg7[%c0_32, %c0_33] : memref<1x128xf32, #tpu.memory_space<vmem>>, vector<1x128xf32>
    %36 = vector.shape_cast %35 : vector<1x128xf32> to vector<1x128xf32>
    %37 = vector.broadcast %36 : vector<1x128xf32> to vector<2x128xf32>
    %c0_34 = arith.constant 0 : index
    %c0_35 = arith.constant 0 : index
    %c0_36 = arith.constant 0 : index
    %38 = vector.load %arg1[%c0_34, %c0_35, %c0_36] : memref<2x2x128xf32, #tpu.memory_space<vmem>>, vector<1x2x128xf32>
    %39 = vector.shape_cast %38 : vector<1x2x128xf32> to vector<2x128xf32>
    %c1 = arith.constant 1 : index
    %c0_37 = arith.constant 0 : index
    %c0_38 = arith.constant 0 : index
    %40 = vector.load %arg1[%c1, %c0_37, %c0_38] : memref<2x2x128xf32, #tpu.memory_space<vmem>>, vector<1x2x128xf32>
    %41 = vector.shape_cast %40 : vector<1x2x128xf32> to vector<2x128xf32>
    %c0_39 = arith.constant 0 : index
    %c0_40 = arith.constant 0 : index
    %42 = vector.load %arg18[%c0_39, %c0_40] : memref<16x768xf32, #tpu.memory_space<vmem>>, vector<2x384xf32>
    %c14 = arith.constant 14 : index
    %c384 = arith.constant 384 : index
    %43 = vector.load %arg18[%c14, %c384] : memref<16x768xf32, #tpu.memory_space<vmem>>, vector<2x384xf32>
    %c0_41 = arith.constant 0 : index
    %c0_42 = arith.constant 0 : index
    %44 = vector.load %arg3[%c0_41, %c0_42] : memref<128x384xf32, #tpu.memory_space<vmem>>, vector<128x384xf32>
    %cst_43 = arith.constant dense<0.000000e+00> : vector<2x384xf32>
    %45 = tpu.matmul %39, %44, %cst_43 {dimension_numbers = #tpu.dot_dimension_numbers<[1], [0], [0], [1], [0, 0, 1, 1], [], []>} : vector<2x128xf32>, vector<128x384xf32>, vector<2x384xf32> -> vector<2x384xf32>
    %46 = vector.extract_strided_slice %42 {offsets = [0, 0], sizes = [2, 128], strides = [1, 1]} : vector<2x384xf32> to vector<2x128xf32>
    %47 = vector.extract_strided_slice %45 {offsets = [0, 0], sizes = [2, 128], strides = [1, 1]} : vector<2x384xf32> to vector<2x128xf32>
    %48 = arith.addf %46, %47 : vector<2x128xf32>
    %49 = arith.negf %48 : vector<2x128xf32>
    %50 = math.exp %49 : vector<2x128xf32>
    %cst_44 = arith.constant 1.000000e+00 : f32
    %51 = vector.broadcast %cst_44 : f32 to vector<2x128xf32>
    %52 = arith.addf %51, %50 : vector<2x128xf32>
    %53 = arith.divf %51, %52 : vector<2x128xf32>
    %54 = vector.extract_strided_slice %42 {offsets = [0, 128], sizes = [2, 128], strides = [1, 1]} : vector<2x384xf32> to vector<2x128xf32>
    %55 = vector.extract_strided_slice %45 {offsets = [0, 128], sizes = [2, 128], strides = [1, 1]} : vector<2x384xf32> to vector<2x128xf32>
    %56 = arith.addf %54, %55 : vector<2x128xf32>
    %57 = arith.negf %56 : vector<2x128xf32>
    %58 = math.exp %57 : vector<2x128xf32>
    %cst_45 = arith.constant 1.000000e+00 : f32
    %59 = vector.broadcast %cst_45 : f32 to vector<2x128xf32>
    %60 = arith.addf %59, %58 : vector<2x128xf32>
    %61 = arith.divf %59, %60 : vector<2x128xf32>
    %62 = vector.extract_strided_slice %42 {offsets = [0, 256], sizes = [2, 128], strides = [1, 1]} : vector<2x384xf32> to vector<2x128xf32>
    %63 = vector.extract_strided_slice %45 {offsets = [0, 256], sizes = [2, 128], strides = [1, 1]} : vector<2x384xf32> to vector<2x128xf32>
    %64 = arith.addf %63, %34 : vector<2x128xf32>
    %65 = arith.mulf %53, %64 : vector<2x128xf32>
    %66 = arith.addf %62, %65 : vector<2x128xf32>
    %67 = math.tanh %66 : vector<2x128xf32>
    %cst_46 = arith.constant 1.000000e+00 : f32
    %68 = vector.broadcast %cst_46 : f32 to vector<2x128xf32>
    %69 = arith.subf %68, %61 : vector<2x128xf32>
    %70 = arith.mulf %69, %67 : vector<2x128xf32>
    %71 = arith.mulf %61, %39 : vector<2x128xf32>
    %72 = arith.addf %70, %71 : vector<2x128xf32>
    %c0_47 = arith.constant 0 : index
    %c0_48 = arith.constant 0 : index
    %73 = vector.load %arg4[%c0_47, %c0_48] : memref<128x384xf32, #tpu.memory_space<vmem>>, vector<128x384xf32>
    %cst_49 = arith.constant dense<0.000000e+00> : vector<2x384xf32>
    %74 = tpu.matmul %41, %73, %cst_49 {dimension_numbers = #tpu.dot_dimension_numbers<[1], [0], [0], [1], [0, 0, 1, 1], [], []>} : vector<2x128xf32>, vector<128x384xf32>, vector<2x384xf32> -> vector<2x384xf32>
    %75 = vector.extract_strided_slice %43 {offsets = [0, 0], sizes = [2, 128], strides = [1, 1]} : vector<2x384xf32> to vector<2x128xf32>
    %76 = vector.extract_strided_slice %74 {offsets = [0, 0], sizes = [2, 128], strides = [1, 1]} : vector<2x384xf32> to vector<2x128xf32>
    %77 = arith.addf %75, %76 : vector<2x128xf32>
    %78 = arith.negf %77 : vector<2x128xf32>
    %79 = math.exp %78 : vector<2x128xf32>
    %cst_50 = arith.constant 1.000000e+00 : f32
    %80 = vector.broadcast %cst_50 : f32 to vector<2x128xf32>
    %81 = arith.addf %80, %79 : vector<2x128xf32>
    %82 = arith.divf %80, %81 : vector<2x128xf32>
    %83 = vector.extract_strided_slice %43 {offsets = [0, 128], sizes = [2, 128], strides = [1, 1]} : vector<2x384xf32> to vector<2x128xf32>
    %84 = vector.extract_strided_slice %74 {offsets = [0, 128], sizes = [2, 128], strides = [1, 1]} : vector<2x384xf32> to vector<2x128xf32>
    %85 = arith.addf %83, %84 : vector<2x128xf32>
    %86 = arith.negf %85 : vector<2x128xf32>
    %87 = math.exp %86 : vector<2x128xf32>
    %cst_51 = arith.constant 1.000000e+00 : f32
    %88 = vector.broadcast %cst_51 : f32 to vector<2x128xf32>
    %89 = arith.addf %88, %87 : vector<2x128xf32>
    %90 = arith.divf %88, %89 : vector<2x128xf32>
    %91 = vector.extract_strided_slice %43 {offsets = [0, 256], sizes = [2, 128], strides = [1, 1]} : vector<2x384xf32> to vector<2x128xf32>
    %92 = vector.extract_strided_slice %74 {offsets = [0, 256], sizes = [2, 128], strides = [1, 1]} : vector<2x384xf32> to vector<2x128xf32>
    %93 = arith.addf %92, %37 : vector<2x128xf32>
    %94 = arith.mulf %82, %93 : vector<2x128xf32>
    %95 = arith.addf %91, %94 : vector<2x128xf32>
    %96 = math.tanh %95 : vector<2x128xf32>
    %cst_52 = arith.constant 1.000000e+00 : f32
    %97 = vector.broadcast %cst_52 : f32 to vector<2x128xf32>
    %98 = arith.subf %97, %90 : vector<2x128xf32>
    %99 = arith.mulf %98, %96 : vector<2x128xf32>
    %100 = arith.mulf %90, %41 : vector<2x128xf32>
    %101 = arith.addf %99, %100 : vector<2x128xf32>
    %cst_53 = arith.constant -5.000000e+00 : f32
    %cst_54 = arith.constant 5.000000e+00 : f32
    %102 = vector.broadcast %cst_53 : f32 to vector<2x128xf32>
    %103 = arith.maximumf %102, %72 : vector<2x128xf32>
    %104 = vector.broadcast %cst_54 : f32 to vector<2x128xf32>
    %105 = arith.minimumf %104, %103 : vector<2x128xf32>
    %c0_55 = arith.constant 0 : index
    %c0_56 = arith.constant 0 : index
    %106 = vector.load %arg15[%c0_55, %c0_56] : memref<16x256xf32, #tpu.memory_space<vmem>>, vector<2x128xf32>
    tpu.vector_store %arg15[%c0_55, %c0_56], %105 {strides = array<i32>} : memref<16x256xf32, #tpu.memory_space<vmem>>, vector<2x128xf32>,
    %cst_57 = arith.constant -5.000000e+00 : f32
    %cst_58 = arith.constant 5.000000e+00 : f32
    %107 = vector.broadcast %cst_57 : f32 to vector<2x128xf32>
    %108 = arith.maximumf %107, %101 : vector<2x128xf32>
    %109 = vector.broadcast %cst_58 : f32 to vector<2x128xf32>
    %110 = arith.minimumf %109, %108 : vector<2x128xf32>
    %c14_59 = arith.constant 14 : index
    %c128 = arith.constant 128 : index
    %111 = vector.load %arg15[%c14_59, %c128] : memref<16x256xf32, #tpu.memory_space<vmem>>, vector<2x128xf32>
    tpu.vector_store %arg15[%c14_59, %c128], %110 {strides = array<i32>} : memref<16x256xf32, #tpu.memory_space<vmem>>, vector<2x128xf32>,
    %c2 = arith.constant 2 : index
    %c0_60 = arith.constant 0 : index
    %112 = vector.load %arg18[%c2, %c0_60] : memref<16x768xf32, #tpu.memory_space<vmem>>, vector<2x384xf32>
    %c12 = arith.constant 12 : index
    %c384_61 = arith.constant 384 : index
    %113 = vector.load %arg18[%c12, %c384_61] : memref<16x768xf32, #tpu.memory_space<vmem>>, vector<2x384xf32>
    %c0_62 = arith.constant 0 : index
    %c0_63 = arith.constant 0 : index
    %114 = vector.load %arg3[%c0_62, %c0_63] : memref<128x384xf32, #tpu.memory_space<vmem>>, vector<128x384xf32>
    %cst_64 = arith.constant dense<0.000000e+00> : vector<2x384xf32>
    %115 = tpu.matmul %72, %114, %cst_64 {dimension_numbers = #tpu.dot_dimension_numbers<[1], [0], [0], [1], [0, 0, 1, 1], [], []>} : vector<2x128xf32>, vector<128x384xf32>, vector<2x384xf32> -> vector<2x384xf32>
    %116 = vector.extract_strided_slice %112 {offsets = [0, 0], sizes = [2, 128], strides = [1, 1]} : vector<2x384xf32> to vector<2x128xf32>
    %117 = vector.extract_strided_slice %115 {offsets = [0, 0], sizes = [2, 128], strides = [1, 1]} : vector<2x384xf32> to vector<2x128xf32>
    %118 = arith.addf %116, %117 : vector<2x128xf32>
    %119 = arith.negf %118 : vector<2x128xf32>
    %120 = math.exp %119 : vector<2x128xf32>
    %cst_65 = arith.constant 1.000000e+00 : f32
    %121 = vector.broadcast %cst_65 : f32 to vector<2x128xf32>
    %122 = arith.addf %121, %120 : vector<2x128xf32>
    %123 = arith.divf %121, %122 : vector<2x128xf32>
    %124 = vector.extract_strided_slice %112 {offsets = [0, 128], sizes = [2, 128], strides = [1, 1]} : vector<2x384xf32> to vector<2x128xf32>
    %125 = vector.extract_strided_slice %115 {offsets = [0, 128], sizes = [2, 128], strides = [1, 1]} : vector<2x384xf32> to vector<2x128xf32>
    %126 = arith.addf %124, %125 : vector<2x128xf32>
    %127 = arith.negf %126 : vector<2x128xf32>
    %128 = math.exp %127 : vector<2x128xf32>
    %cst_66 = arith.constant 1.000000e+00 : f32
    %129 = vector.broadcast %cst_66 : f32 to vector<2x128xf32>
    %130 = arith.addf %129, %128 : vector<2x128xf32>
    %131 = arith.divf %129, %130 : vector<2x128xf32>
    %132 = vector.extract_strided_slice %112 {offsets = [0, 256], sizes = [2, 128], strides = [1, 1]} : vector<2x384xf32> to vector<2x128xf32>
    %133 = vector.extract_strided_slice %115 {offsets = [0, 256], sizes = [2, 128], strides = [1, 1]} : vector<2x384xf32> to vector<2x128xf32>
    %134 = arith.addf %133, %34 : vector<2x128xf32>
    %135 = arith.mulf %123, %134 : vector<2x128xf32>
    %136 = arith.addf %132, %135 : vector<2x128xf32>
    %137 = math.tanh %136 : vector<2x128xf32>
    %cst_67 = arith.constant 1.000000e+00 : f32
    %138 = vector.broadcast %cst_67 : f32 to vector<2x128xf32>
    %139 = arith.subf %138, %131 : vector<2x128xf32>
    %140 = arith.mulf %139, %137 : vector<2x128xf32>
    %141 = arith.mulf %131, %72 : vector<2x128xf32>
    %142 = arith.addf %140, %141 : vector<2x128xf32>
    %c0_68 = arith.constant 0 : index
    %c0_69 = arith.constant 0 : index
    %143 = vector.load %arg4[%c0_68, %c0_69] : memref<128x384xf32, #tpu.memory_space<vmem>>, vector<128x384xf32>
    %cst_70 = arith.constant dense<0.000000e+00> : vector<2x384xf32>
    %144 = tpu.matmul %101, %143, %cst_70 {dimension_numbers = #tpu.dot_dimension_numbers<[1], [0], [0], [1], [0, 0, 1, 1], [], []>} : vector<2x128xf32>, vector<128x384xf32>, vector<2x384xf32> -> vector<2x384xf32>
    %145 = vector.extract_strided_slice %113 {offsets = [0, 0], sizes = [2, 128], strides = [1, 1]} : vector<2x384xf32> to vector<2x128xf32>
    %146 = vector.extract_strided_slice %144 {offsets = [0, 0], sizes = [2, 128], strides = [1, 1]} : vector<2x384xf32> to vector<2x128xf32>
    %147 = arith.addf %145, %146 : vector<2x128xf32>
    %148 = arith.negf %147 : vector<2x128xf32>
    %149 = math.exp %148 : vector<2x128xf32>
    %cst_71 = arith.constant 1.000000e+00 : f32
    %150 = vector.broadcast %cst_71 : f32 to vector<2x128xf32>
    %151 = arith.addf %150, %149 : vector<2x128xf32>
    %152 = arith.divf %150, %151 : vector<2x128xf32>
    %153 = vector.extract_strided_slice %113 {offsets = [0, 128], sizes = [2, 128], strides = [1, 1]} : vector<2x384xf32> to vector<2x128xf32>
    %154 = vector.extract_strided_slice %144 {offsets = [0, 128], sizes = [2, 128], strides = [1, 1]} : vector<2x384xf32> to vector<2x128xf32>
    %155 = arith.addf %153, %154 : vector<2x128xf32>
    %156 = arith.negf %155 : vector<2x128xf32>
    %157 = math.exp %156 : vector<2x128xf32>
    %cst_72 = arith.constant 1.000000e+00 : f32
    %158 = vector.broadcast %cst_72 : f32 to vector<2x128xf32>
    %159 = arith.addf %158, %157 : vector<2x128xf32>
    %160 = arith.divf %158, %159 : vector<2x128xf32>
    %161 = vector.extract_strided_slice %113 {offsets = [0, 256], sizes = [2, 128], strides = [1, 1]} : vector<2x384xf32> to vector<2x128xf32>
    %162 = vector.extract_strided_slice %144 {offsets = [0, 256], sizes = [2, 128], strides = [1, 1]} : vector<2x384xf32> to vector<2x128xf32>
    %163 = arith.addf %162, %37 : vector<2x128xf32>
    %164 = arith.mulf %152, %163 : vector<2x128xf32>
    %165 = arith.addf %161, %164 : vector<2x128xf32>
    %166 = math.tanh %165 : vector<2x128xf32>
    %cst_73 = arith.constant 1.000000e+00 : f32
    %167 = vector.broadcast %cst_73 : f32 to vector<2x128xf32>
    %168 = arith.subf %167, %160 : vector<2x128xf32>
    %169 = arith.mulf %168, %166 : vector<2x128xf32>
    %170 = arith.mulf %160, %101 : vector<2x128xf32>
    %171 = arith.addf %169, %170 : vector<2x128xf32>
    %cst_74 = arith.constant -5.000000e+00 : f32
    %cst_75 = arith.constant 5.000000e+00 : f32
    %172 = vector.broadcast %cst_74 : f32 to vector<2x128xf32>
    %173 = arith.maximumf %172, %142 : vector<2x128xf32>
    %174 = vector.broadcast %cst_75 : f32 to vector<2x128xf32>
    %175 = arith.minimumf %174, %173 : vector<2x128xf32>
    %c2_76 = arith.constant 2 : index
    %c0_77 = arith.constant 0 : index
    %176 = vector.load %arg15[%c2_76, %c0_77] : memref<16x256xf32, #tpu.memory_space<vmem>>, vector<2x128xf32>
    tpu.vector_store %arg15[%c2_76, %c0_77], %175 {strides = array<i32>} : memref<16x256xf32, #tpu.memory_space<vmem>>, vector<2x128xf32>,
    %cst_78 = arith.constant -5.000000e+00 : f32
    %cst_79 = arith.constant 5.000000e+00 : f32
    %177 = vector.broadcast %cst_78 : f32 to vector<2x128xf32>
    %178 = arith.maximumf %177, %171 : vector<2x128xf32>
    %179 = vector.broadcast %cst_79 : f32 to vector<2x128xf32>
    %180 = arith.minimumf %179, %178 : vector<2x128xf32>
    %c12_80 = arith.constant 12 : index
    %c128_81 = arith.constant 128 : index
    %181 = vector.load %arg15[%c12_80, %c128_81] : memref<16x256xf32, #tpu.memory_space<vmem>>, vector<2x128xf32>
    tpu.vector_store %arg15[%c12_80, %c128_81], %180 {strides = array<i32>} : memref<16x256xf32, #tpu.memory_space<vmem>>, vector<2x128xf32>,
    %c4 = arith.constant 4 : index
    %c0_82 = arith.constant 0 : index
    %182 = vector.load %arg18[%c4, %c0_82] : memref<16x768xf32, #tpu.memory_space<vmem>>, vector<2x384xf32>
    %c10 = arith.constant 10 : index
    %c384_83 = arith.constant 384 : index
    %183 = vector.load %arg18[%c10, %c384_83] : memref<16x768xf32, #tpu.memory_space<vmem>>, vector<2x384xf32>
    %c0_84 = arith.constant 0 : index
    %c0_85 = arith.constant 0 : index
    %184 = vector.load %arg3[%c0_84, %c0_85] : memref<128x384xf32, #tpu.memory_space<vmem>>, vector<128x384xf32>
    %cst_86 = arith.constant dense<0.000000e+00> : vector<2x384xf32>
    %185 = tpu.matmul %142, %184, %cst_86 {dimension_numbers = #tpu.dot_dimension_numbers<[1], [0], [0], [1], [0, 0, 1, 1], [], []>} : vector<2x128xf32>, vector<128x384xf32>, vector<2x384xf32> -> vector<2x384xf32>
    %186 = vector.extract_strided_slice %182 {offsets = [0, 0], sizes = [2, 128], strides = [1, 1]} : vector<2x384xf32> to vector<2x128xf32>
    %187 = vector.extract_strided_slice %185 {offsets = [0, 0], sizes = [2, 128], strides = [1, 1]} : vector<2x384xf32> to vector<2x128xf32>
    %188 = arith.addf %186, %187 : vector<2x128xf32>
    %189 = arith.negf %188 : vector<2x128xf32>
    %190 = math.exp %189 : vector<2x128xf32>
    %cst_87 = arith.constant 1.000000e+00 : f32
    %191 = vector.broadcast %cst_87 : f32 to vector<2x128xf32>
    %192 = arith.addf %191, %190 : vector<2x128xf32>
    %193 = arith.divf %191, %192 : vector<2x128xf32>
    %194 = vector.extract_strided_slice %182 {offsets = [0, 128], sizes = [2, 128], strides = [1, 1]} : vector<2x384xf32> to vector<2x128xf32>
    %195 = vector.extract_strided_slice %185 {offsets = [0, 128], sizes = [2, 128], strides = [1, 1]} : vector<2x384xf32> to vector<2x128xf32>
    %196 = arith.addf %194, %195 : vector<2x128xf32>
    %197 = arith.negf %196 : vector<2x128xf32>
    %198 = math.exp %197 : vector<2x128xf32>
    %cst_88 = arith.constant 1.000000e+00 : f32
    %199 = vector.broadcast %cst_88 : f32 to vector<2x128xf32>
    %200 = arith.addf %199, %198 : vector<2x128xf32>
    %201 = arith.divf %199, %200 : vector<2x128xf32>
    %202 = vector.extract_strided_slice %182 {offsets = [0, 256], sizes = [2, 128], strides = [1, 1]} : vector<2x384xf32> to vector<2x128xf32>
    %203 = vector.extract_strided_slice %185 {offsets = [0, 256], sizes = [2, 128], strides = [1, 1]} : vector<2x384xf32> to vector<2x128xf32>
    %204 = arith.addf %203, %34 : vector<2x128xf32>
    %205 = arith.mulf %193, %204 : vector<2x128xf32>
    %206 = arith.addf %202, %205 : vector<2x128xf32>
    %207 = math.tanh %206 : vector<2x128xf32>
    %cst_89 = arith.constant 1.000000e+00 : f32
    %208 = vector.broadcast %cst_89 : f32 to vector<2x128xf32>
    %209 = arith.subf %208, %201 : vector<2x128xf32>
    %210 = arith.mulf %209, %207 : vector<2x128xf32>
    %211 = arith.mulf %201, %142 : vector<2x128xf32>
    %212 = arith.addf %210, %211 : vector<2x128xf32>
    %c0_90 = arith.constant 0 : index
    %c0_91 = arith.constant 0 : index
    %213 = vector.load %arg4[%c0_90, %c0_91] : memref<128x384xf32, #tpu.memory_space<vmem>>, vector<128x384xf32>
    %cst_92 = arith.constant dense<0.000000e+00> : vector<2x384xf32>
    %214 = tpu.matmul %171, %213, %cst_92 {dimension_numbers = #tpu.dot_dimension_numbers<[1], [0], [0], [1], [0, 0, 1, 1], [], []>} : vector<2x128xf32>, vector<128x384xf32>, vector<2x384xf32> -> vector<2x384xf32>
    %215 = vector.extract_strided_slice %183 {offsets = [0, 0], sizes = [2, 128], strides = [1, 1]} : vector<2x384xf32> to vector<2x128xf32>
    %216 = vector.extract_strided_slice %214 {offsets = [0, 0], sizes = [2, 128], strides = [1, 1]} : vector<2x384xf32> to vector<2x128xf32>
    %217 = arith.addf %215, %216 : vector<2x128xf32>
    %218 = arith.negf %217 : vector<2x128xf32>
    %219 = math.exp %218 : vector<2x128xf32>
    %cst_93 = arith.constant 1.000000e+00 : f32
    %220 = vector.broadcast %cst_93 : f32 to vector<2x128xf32>
    %221 = arith.addf %220, %219 : vector<2x128xf32>
    %222 = arith.divf %220, %221 : vector<2x128xf32>
    %223 = vector.extract_strided_slice %183 {offsets = [0, 128], sizes = [2, 128], strides = [1, 1]} : vector<2x384xf32> to vector<2x128xf32>
    %224 = vector.extract_strided_slice %214 {offsets = [0, 128], sizes = [2, 128], strides = [1, 1]} : vector<2x384xf32> to vector<2x128xf32>
    %225 = arith.addf %223, %224 : vector<2x128xf32>
    %226 = arith.negf %225 : vector<2x128xf32>
    %227 = math.exp %226 : vector<2x128xf32>
    %cst_94 = arith.constant 1.000000e+00 : f32
    %228 = vector.broadcast %cst_94 : f32 to vector<2x128xf32>
    %229 = arith.addf %228, %227 : vector<2x128xf32>
    %230 = arith.divf %228, %229 : vector<2x128xf32>
    %231 = vector.extract_strided_slice %183 {offsets = [0, 256], sizes = [2, 128], strides = [1, 1]} : vector<2x384xf32> to vector<2x128xf32>
    %232 = vector.extract_strided_slice %214 {offsets = [0, 256], sizes = [2, 128], strides = [1, 1]} : vector<2x384xf32> to vector<2x128xf32>
    %233 = arith.addf %232, %37 : vector<2x128xf32>
    %234 = arith.mulf %222, %233 : vector<2x128xf32>
    %235 = arith.addf %231, %234 : vector<2x128xf32>
    %236 = math.tanh %235 : vector<2x128xf32>
    %cst_95 = arith.constant 1.000000e+00 : f32
    %237 = vector.broadcast %cst_95 : f32 to vector<2x128xf32>
    %238 = arith.subf %237, %230 : vector<2x128xf32>
    %239 = arith.mulf %238, %236 : vector<2x128xf32>
    %240 = arith.mulf %230, %171 : vector<2x128xf32>
    %241 = arith.addf %239, %240 : vector<2x128xf32>
    %cst_96 = arith.constant -5.000000e+00 : f32
    %cst_97 = arith.constant 5.000000e+00 : f32
    %242 = vector.broadcast %cst_96 : f32 to vector<2x128xf32>
    %243 = arith.maximumf %242, %212 : vector<2x128xf32>
    %244 = vector.broadcast %cst_97 : f32 to vector<2x128xf32>
    %245 = arith.minimumf %244, %243 : vector<2x128xf32>
    %c4_98 = arith.constant 4 : index
    %c0_99 = arith.constant 0 : index
    %246 = vector.load %arg15[%c4_98, %c0_99] : memref<16x256xf32, #tpu.memory_space<vmem>>, vector<2x128xf32>
    tpu.vector_store %arg15[%c4_98, %c0_99], %245 {strides = array<i32>} : memref<16x256xf32, #tpu.memory_space<vmem>>, vector<2x128xf32>,
    %cst_100 = arith.constant -5.000000e+00 : f32
    %cst_101 = arith.constant 5.000000e+00 : f32
    %247 = vector.broadcast %cst_100 : f32 to vector<2x128xf32>
    %248 = arith.maximumf %247, %241 : vector<2x128xf32>
    %249 = vector.broadcast %cst_101 : f32 to vector<2x128xf32>
    %250 = arith.minimumf %249, %248 : vector<2x128xf32>
    %c10_102 = arith.constant 10 : index
    %c128_103 = arith.constant 128 : index
    %251 = vector.load %arg15[%c10_102, %c128_103] : memref<16x256xf32, #tpu.memory_space<vmem>>, vector<2x128xf32>
    tpu.vector_store %arg15[%c10_102, %c128_103], %250 {strides = array<i32>} : memref<16x256xf32, #tpu.memory_space<vmem>>, vector<2x128xf32>,
    %c6 = arith.constant 6 : index
    %c0_104 = arith.constant 0 : index
    %252 = vector.load %arg18[%c6, %c0_104] : memref<16x768xf32, #tpu.memory_space<vmem>>, vector<2x384xf32>
    %c8 = arith.constant 8 : index
    %c384_105 = arith.constant 384 : index
    %253 = vector.load %arg18[%c8, %c384_105] : memref<16x768xf32, #tpu.memory_space<vmem>>, vector<2x384xf32>
    %c0_106 = arith.constant 0 : index
    %c0_107 = arith.constant 0 : index
    %254 = vector.load %arg3[%c0_106, %c0_107] : memref<128x384xf32, #tpu.memory_space<vmem>>, vector<128x384xf32>
    %cst_108 = arith.constant dense<0.000000e+00> : vector<2x384xf32>
    %255 = tpu.matmul %212, %254, %cst_108 {dimension_numbers = #tpu.dot_dimension_numbers<[1], [0], [0], [1], [0, 0, 1, 1], [], []>} : vector<2x128xf32>, vector<128x384xf32>, vector<2x384xf32> -> vector<2x384xf32>
    %256 = vector.extract_strided_slice %252 {offsets = [0, 0], sizes = [2, 128], strides = [1, 1]} : vector<2x384xf32> to vector<2x128xf32>
    %257 = vector.extract_strided_slice %255 {offsets = [0, 0], sizes = [2, 128], strides = [1, 1]} : vector<2x384xf32> to vector<2x128xf32>
    %258 = arith.addf %256, %257 : vector<2x128xf32>
    %259 = arith.negf %258 : vector<2x128xf32>
    %260 = math.exp %259 : vector<2x128xf32>
    %cst_109 = arith.constant 1.000000e+00 : f32
    %261 = vector.broadcast %cst_109 : f32 to vector<2x128xf32>
    %262 = arith.addf %261, %260 : vector<2x128xf32>
    %263 = arith.divf %261, %262 : vector<2x128xf32>
    %264 = vector.extract_strided_slice %252 {offsets = [0, 128], sizes = [2, 128], strides = [1, 1]} : vector<2x384xf32> to vector<2x128xf32>
    %265 = vector.extract_strided_slice %255 {offsets = [0, 128], sizes = [2, 128], strides = [1, 1]} : vector<2x384xf32> to vector<2x128xf32>
    %266 = arith.addf %264, %265 : vector<2x128xf32>
    %267 = arith.negf %266 : vector<2x128xf32>
    %268 = math.exp %267 : vector<2x128xf32>
    %cst_110 = arith.constant 1.000000e+00 : f32
    %269 = vector.broadcast %cst_110 : f32 to vector<2x128xf32>
    %270 = arith.addf %269, %268 : vector<2x128xf32>
    %271 = arith.divf %269, %270 : vector<2x128xf32>
    %272 = vector.extract_strided_slice %252 {offsets = [0, 256], sizes = [2, 128], strides = [1, 1]} : vector<2x384xf32> to vector<2x128xf32>
    %273 = vector.extract_strided_slice %255 {offsets = [0, 256], sizes = [2, 128], strides = [1, 1]} : vector<2x384xf32> to vector<2x128xf32>
    %274 = arith.addf %273, %34 : vector<2x128xf32>
    %275 = arith.mulf %263, %274 : vector<2x128xf32>
    %276 = arith.addf %272, %275 : vector<2x128xf32>
    %277 = math.tanh %276 : vector<2x128xf32>
    %cst_111 = arith.constant 1.000000e+00 : f32
    %278 = vector.broadcast %cst_111 : f32 to vector<2x128xf32>
    %279 = arith.subf %278, %271 : vector<2x128xf32>
    %280 = arith.mulf %279, %277 : vector<2x128xf32>
    %281 = arith.mulf %271, %212 : vector<2x128xf32>
    %282 = arith.addf %280, %281 : vector<2x128xf32>
    %c0_112 = arith.constant 0 : index
    %c0_113 = arith.constant 0 : index
    %283 = vector.load %arg4[%c0_112, %c0_113] : memref<128x384xf32, #tpu.memory_space<vmem>>, vector<128x384xf32>
    %cst_114 = arith.constant dense<0.000000e+00> : vector<2x384xf32>
    %284 = tpu.matmul %241, %283, %cst_114 {dimension_numbers = #tpu.dot_dimension_numbers<[1], [0], [0], [1], [0, 0, 1, 1], [], []>} : vector<2x128xf32>, vector<128x384xf32>, vector<2x384xf32> -> vector<2x384xf32>
    %285 = vector.extract_strided_slice %253 {offsets = [0, 0], sizes = [2, 128], strides = [1, 1]} : vector<2x384xf32> to vector<2x128xf32>
    %286 = vector.extract_strided_slice %284 {offsets = [0, 0], sizes = [2, 128], strides = [1, 1]} : vector<2x384xf32> to vector<2x128xf32>
    %287 = arith.addf %285, %286 : vector<2x128xf32>
    %288 = arith.negf %287 : vector<2x128xf32>
    %289 = math.exp %288 : vector<2x128xf32>
    %cst_115 = arith.constant 1.000000e+00 : f32
    %290 = vector.broadcast %cst_115 : f32 to vector<2x128xf32>
    %291 = arith.addf %290, %289 : vector<2x128xf32>
    %292 = arith.divf %290, %291 : vector<2x128xf32>
    %293 = vector.extract_strided_slice %253 {offsets = [0, 128], sizes = [2, 128], strides = [1, 1]} : vector<2x384xf32> to vector<2x128xf32>
    %294 = vector.extract_strided_slice %284 {offsets = [0, 128], sizes = [2, 128], strides = [1, 1]} : vector<2x384xf32> to vector<2x128xf32>
    %295 = arith.addf %293, %294 : vector<2x128xf32>
    %296 = arith.negf %295 : vector<2x128xf32>
    %297 = math.exp %296 : vector<2x128xf32>
    %cst_116 = arith.constant 1.000000e+00 : f32
    %298 = vector.broadcast %cst_116 : f32 to vector<2x128xf32>
    %299 = arith.addf %298, %297 : vector<2x128xf32>
    %300 = arith.divf %298, %299 : vector<2x128xf32>
    %301 = vector.extract_strided_slice %253 {offsets = [0, 256], sizes = [2, 128], strides = [1, 1]} : vector<2x384xf32> to vector<2x128xf32>
    %302 = vector.extract_strided_slice %284 {offsets = [0, 256], sizes = [2, 128], strides = [1, 1]} : vector<2x384xf32> to vector<2x128xf32>
    %303 = arith.addf %302, %37 : vector<2x128xf32>
    %304 = arith.mulf %292, %303 : vector<2x128xf32>
    %305 = arith.addf %301, %304 : vector<2x128xf32>
    %306 = math.tanh %305 : vector<2x128xf32>
    %cst_117 = arith.constant 1.000000e+00 : f32
    %307 = vector.broadcast %cst_117 : f32 to vector<2x128xf32>
    %308 = arith.subf %307, %300 : vector<2x128xf32>
    %309 = arith.mulf %308, %306 : vector<2x128xf32>
    %310 = arith.mulf %300, %241 : vector<2x128xf32>
    %311 = arith.addf %309, %310 : vector<2x128xf32>
    %cst_118 = arith.constant -5.000000e+00 : f32
    %cst_119 = arith.constant 5.000000e+00 : f32
    %312 = vector.broadcast %cst_118 : f32 to vector<2x128xf32>
    %313 = arith.maximumf %312, %282 : vector<2x128xf32>
    %314 = vector.broadcast %cst_119 : f32 to vector<2x128xf32>
    %315 = arith.minimumf %314, %313 : vector<2x128xf32>
    %c6_120 = arith.constant 6 : index
    %c0_121 = arith.constant 0 : index
    %316 = vector.load %arg15[%c6_120, %c0_121] : memref<16x256xf32, #tpu.memory_space<vmem>>, vector<2x128xf32>
    tpu.vector_store %arg15[%c6_120, %c0_121], %315 {strides = array<i32>} : memref<16x256xf32, #tpu.memory_space<vmem>>, vector<2x128xf32>,
    %cst_122 = arith.constant -5.000000e+00 : f32
    %cst_123 = arith.constant 5.000000e+00 : f32
    %317 = vector.broadcast %cst_122 : f32 to vector<2x128xf32>
    %318 = arith.maximumf %317, %311 : vector<2x128xf32>
    %319 = vector.broadcast %cst_123 : f32 to vector<2x128xf32>
    %320 = arith.minimumf %319, %318 : vector<2x128xf32>
    %c8_124 = arith.constant 8 : index
    %c128_125 = arith.constant 128 : index
    %321 = vector.load %arg15[%c8_124, %c128_125] : memref<16x256xf32, #tpu.memory_space<vmem>>, vector<2x128xf32>
    tpu.vector_store %arg15[%c8_124, %c128_125], %320 {strides = array<i32>} : memref<16x256xf32, #tpu.memory_space<vmem>>, vector<2x128xf32>,
    %c8_126 = arith.constant 8 : index
    %c0_127 = arith.constant 0 : index
    %322 = vector.load %arg18[%c8_126, %c0_127] : memref<16x768xf32, #tpu.memory_space<vmem>>, vector<2x384xf32>
    %c6_128 = arith.constant 6 : index
    %c384_129 = arith.constant 384 : index
    %323 = vector.load %arg18[%c6_128, %c384_129] : memref<16x768xf32, #tpu.memory_space<vmem>>, vector<2x384xf32>
    %c0_130 = arith.constant 0 : index
    %c0_131 = arith.constant 0 : index
    %324 = vector.load %arg3[%c0_130, %c0_131] : memref<128x384xf32, #tpu.memory_space<vmem>>, vector<128x384xf32>
    %cst_132 = arith.constant dense<0.000000e+00> : vector<2x384xf32>
    %325 = tpu.matmul %282, %324, %cst_132 {dimension_numbers = #tpu.dot_dimension_numbers<[1], [0], [0], [1], [0, 0, 1, 1], [], []>} : vector<2x128xf32>, vector<128x384xf32>, vector<2x384xf32> -> vector<2x384xf32>
    %326 = vector.extract_strided_slice %322 {offsets = [0, 0], sizes = [2, 128], strides = [1, 1]} : vector<2x384xf32> to vector<2x128xf32>
    %327 = vector.extract_strided_slice %325 {offsets = [0, 0], sizes = [2, 128], strides = [1, 1]} : vector<2x384xf32> to vector<2x128xf32>
    %328 = arith.addf %326, %327 : vector<2x128xf32>
    %329 = arith.negf %328 : vector<2x128xf32>
    %330 = math.exp %329 : vector<2x128xf32>
    %cst_133 = arith.constant 1.000000e+00 : f32
    %331 = vector.broadcast %cst_133 : f32 to vector<2x128xf32>
    %332 = arith.addf %331, %330 : vector<2x128xf32>
    %333 = arith.divf %331, %332 : vector<2x128xf32>
    %334 = vector.extract_strided_slice %322 {offsets = [0, 128], sizes = [2, 128], strides = [1, 1]} : vector<2x384xf32> to vector<2x128xf32>
    %335 = vector.extract_strided_slice %325 {offsets = [0, 128], sizes = [2, 128], strides = [1, 1]} : vector<2x384xf32> to vector<2x128xf32>
    %336 = arith.addf %334, %335 : vector<2x128xf32>
    %337 = arith.negf %336 : vector<2x128xf32>
    %338 = math.exp %337 : vector<2x128xf32>
    %cst_134 = arith.constant 1.000000e+00 : f32
    %339 = vector.broadcast %cst_134 : f32 to vector<2x128xf32>
    %340 = arith.addf %339, %338 : vector<2x128xf32>
    %341 = arith.divf %339, %340 : vector<2x128xf32>
    %342 = vector.extract_strided_slice %322 {offsets = [0, 256], sizes = [2, 128], strides = [1, 1]} : vector<2x384xf32> to vector<2x128xf32>
    %343 = vector.extract_strided_slice %325 {offsets = [0, 256], sizes = [2, 128], strides = [1, 1]} : vector<2x384xf32> to vector<2x128xf32>
    %344 = arith.addf %343, %34 : vector<2x128xf32>
    %345 = arith.mulf %333, %344 : vector<2x128xf32>
    %346 = arith.addf %342, %345 : vector<2x128xf32>
    %347 = math.tanh %346 : vector<2x128xf32>
    %cst_135 = arith.constant 1.000000e+00 : f32
    %348 = vector.broadcast %cst_135 : f32 to vector<2x128xf32>
    %349 = arith.subf %348, %341 : vector<2x128xf32>
    %350 = arith.mulf %349, %347 : vector<2x128xf32>
    %351 = arith.mulf %341, %282 : vector<2x128xf32>
    %352 = arith.addf %350, %351 : vector<2x128xf32>
    %c0_136 = arith.constant 0 : index
    %c0_137 = arith.constant 0 : index
    %353 = vector.load %arg4[%c0_136, %c0_137] : memref<128x384xf32, #tpu.memory_space<vmem>>, vector<128x384xf32>
    %cst_138 = arith.constant dense<0.000000e+00> : vector<2x384xf32>
    %354 = tpu.matmul %311, %353, %cst_138 {dimension_numbers = #tpu.dot_dimension_numbers<[1], [0], [0], [1], [0, 0, 1, 1], [], []>} : vector<2x128xf32>, vector<128x384xf32>, vector<2x384xf32> -> vector<2x384xf32>
    %355 = vector.extract_strided_slice %323 {offsets = [0, 0], sizes = [2, 128], strides = [1, 1]} : vector<2x384xf32> to vector<2x128xf32>
    %356 = vector.extract_strided_slice %354 {offsets = [0, 0], sizes = [2, 128], strides = [1, 1]} : vector<2x384xf32> to vector<2x128xf32>
    %357 = arith.addf %355, %356 : vector<2x128xf32>
    %358 = arith.negf %357 : vector<2x128xf32>
    %359 = math.exp %358 : vector<2x128xf32>
    %cst_139 = arith.constant 1.000000e+00 : f32
    %360 = vector.broadcast %cst_139 : f32 to vector<2x128xf32>
    %361 = arith.addf %360, %359 : vector<2x128xf32>
    %362 = arith.divf %360, %361 : vector<2x128xf32>
    %363 = vector.extract_strided_slice %323 {offsets = [0, 128], sizes = [2, 128], strides = [1, 1]} : vector<2x384xf32> to vector<2x128xf32>
    %364 = vector.extract_strided_slice %354 {offsets = [0, 128], sizes = [2, 128], strides = [1, 1]} : vector<2x384xf32> to vector<2x128xf32>
    %365 = arith.addf %363, %364 : vector<2x128xf32>
    %366 = arith.negf %365 : vector<2x128xf32>
    %367 = math.exp %366 : vector<2x128xf32>
    %cst_140 = arith.constant 1.000000e+00 : f32
    %368 = vector.broadcast %cst_140 : f32 to vector<2x128xf32>
    %369 = arith.addf %368, %367 : vector<2x128xf32>
    %370 = arith.divf %368, %369 : vector<2x128xf32>
    %371 = vector.extract_strided_slice %323 {offsets = [0, 256], sizes = [2, 128], strides = [1, 1]} : vector<2x384xf32> to vector<2x128xf32>
    %372 = vector.extract_strided_slice %354 {offsets = [0, 256], sizes = [2, 128], strides = [1, 1]} : vector<2x384xf32> to vector<2x128xf32>
    %373 = arith.addf %372, %37 : vector<2x128xf32>
    %374 = arith.mulf %362, %373 : vector<2x128xf32>
    %375 = arith.addf %371, %374 : vector<2x128xf32>
    %376 = math.tanh %375 : vector<2x128xf32>
    %cst_141 = arith.constant 1.000000e+00 : f32
    %377 = vector.broadcast %cst_141 : f32 to vector<2x128xf32>
    %378 = arith.subf %377, %370 : vector<2x128xf32>
    %379 = arith.mulf %378, %376 : vector<2x128xf32>
    %380 = arith.mulf %370, %311 : vector<2x128xf32>
    %381 = arith.addf %379, %380 : vector<2x128xf32>
    %cst_142 = arith.constant -5.000000e+00 : f32
    %cst_143 = arith.constant 5.000000e+00 : f32
    %382 = vector.broadcast %cst_142 : f32 to vector<2x128xf32>
    %383 = arith.maximumf %382, %352 : vector<2x128xf32>
    %384 = vector.broadcast %cst_143 : f32 to vector<2x128xf32>
    %385 = arith.minimumf %384, %383 : vector<2x128xf32>
    %c8_144 = arith.constant 8 : index
    %c0_145 = arith.constant 0 : index
    %386 = vector.load %arg15[%c8_144, %c0_145] : memref<16x256xf32, #tpu.memory_space<vmem>>, vector<2x128xf32>
    tpu.vector_store %arg15[%c8_144, %c0_145], %385 {strides = array<i32>} : memref<16x256xf32, #tpu.memory_space<vmem>>, vector<2x128xf32>,
    %cst_146 = arith.constant -5.000000e+00 : f32
    %cst_147 = arith.constant 5.000000e+00 : f32
    %387 = vector.broadcast %cst_146 : f32 to vector<2x128xf32>
    %388 = arith.maximumf %387, %381 : vector<2x128xf32>
    %389 = vector.broadcast %cst_147 : f32 to vector<2x128xf32>
    %390 = arith.minimumf %389, %388 : vector<2x128xf32>
    %c6_148 = arith.constant 6 : index
    %c128_149 = arith.constant 128 : index
    %391 = vector.load %arg15[%c6_148, %c128_149] : memref<16x256xf32, #tpu.memory_space<vmem>>, vector<2x128xf32>
    tpu.vector_store %arg15[%c6_148, %c128_149], %390 {strides = array<i32>} : memref<16x256xf32, #tpu.memory_space<vmem>>, vector<2x128xf32>,
    %c10_150 = arith.constant 10 : index
    %c0_151 = arith.constant 0 : index
    %392 = vector.load %arg18[%c10_150, %c0_151] : memref<16x768xf32, #tpu.memory_space<vmem>>, vector<2x384xf32>
    %c4_152 = arith.constant 4 : index
    %c384_153 = arith.constant 384 : index
    %393 = vector.load %arg18[%c4_152, %c384_153] : memref<16x768xf32, #tpu.memory_space<vmem>>, vector<2x384xf32>
    %c0_154 = arith.constant 0 : index
    %c0_155 = arith.constant 0 : index
    %394 = vector.load %arg3[%c0_154, %c0_155] : memref<128x384xf32, #tpu.memory_space<vmem>>, vector<128x384xf32>
    %cst_156 = arith.constant dense<0.000000e+00> : vector<2x384xf32>
    %395 = tpu.matmul %352, %394, %cst_156 {dimension_numbers = #tpu.dot_dimension_numbers<[1], [0], [0], [1], [0, 0, 1, 1], [], []>} : vector<2x128xf32>, vector<128x384xf32>, vector<2x384xf32> -> vector<2x384xf32>
    %396 = vector.extract_strided_slice %392 {offsets = [0, 0], sizes = [2, 128], strides = [1, 1]} : vector<2x384xf32> to vector<2x128xf32>
    %397 = vector.extract_strided_slice %395 {offsets = [0, 0], sizes = [2, 128], strides = [1, 1]} : vector<2x384xf32> to vector<2x128xf32>
    %398 = arith.addf %396, %397 : vector<2x128xf32>
    %399 = arith.negf %398 : vector<2x128xf32>
    %400 = math.exp %399 : vector<2x128xf32>
    %cst_157 = arith.constant 1.000000e+00 : f32
    %401 = vector.broadcast %cst_157 : f32 to vector<2x128xf32>
    %402 = arith.addf %401, %400 : vector<2x128xf32>
    %403 = arith.divf %401, %402 : vector<2x128xf32>
    %404 = vector.extract_strided_slice %392 {offsets = [0, 128], sizes = [2, 128], strides = [1, 1]} : vector<2x384xf32> to vector<2x128xf32>
    %405 = vector.extract_strided_slice %395 {offsets = [0, 128], sizes = [2, 128], strides = [1, 1]} : vector<2x384xf32> to vector<2x128xf32>
    %406 = arith.addf %404, %405 : vector<2x128xf32>
    %407 = arith.negf %406 : vector<2x128xf32>
    %408 = math.exp %407 : vector<2x128xf32>
    %cst_158 = arith.constant 1.000000e+00 : f32
    %409 = vector.broadcast %cst_158 : f32 to vector<2x128xf32>
    %410 = arith.addf %409, %408 : vector<2x128xf32>
    %411 = arith.divf %409, %410 : vector<2x128xf32>
    %412 = vector.extract_strided_slice %392 {offsets = [0, 256], sizes = [2, 128], strides = [1, 1]} : vector<2x384xf32> to vector<2x128xf32>
    %413 = vector.extract_strided_slice %395 {offsets = [0, 256], sizes = [2, 128], strides = [1, 1]} : vector<2x384xf32> to vector<2x128xf32>
    %414 = arith.addf %413, %34 : vector<2x128xf32>
    %415 = arith.mulf %403, %414 : vector<2x128xf32>
    %416 = arith.addf %412, %415 : vector<2x128xf32>
    %417 = math.tanh %416 : vector<2x128xf32>
    %cst_159 = arith.constant 1.000000e+00 : f32
    %418 = vector.broadcast %cst_159 : f32 to vector<2x128xf32>
    %419 = arith.subf %418, %411 : vector<2x128xf32>
    %420 = arith.mulf %419, %417 : vector<2x128xf32>
    %421 = arith.mulf %411, %352 : vector<2x128xf32>
    %422 = arith.addf %420, %421 : vector<2x128xf32>
    %c0_160 = arith.constant 0 : index
    %c0_161 = arith.constant 0 : index
    %423 = vector.load %arg4[%c0_160, %c0_161] : memref<128x384xf32, #tpu.memory_space<vmem>>, vector<128x384xf32>
    %cst_162 = arith.constant dense<0.000000e+00> : vector<2x384xf32>
    %424 = tpu.matmul %381, %423, %cst_162 {dimension_numbers = #tpu.dot_dimension_numbers<[1], [0], [0], [1], [0, 0, 1, 1], [], []>} : vector<2x128xf32>, vector<128x384xf32>, vector<2x384xf32> -> vector<2x384xf32>
    %425 = vector.extract_strided_slice %393 {offsets = [0, 0], sizes = [2, 128], strides = [1, 1]} : vector<2x384xf32> to vector<2x128xf32>
    %426 = vector.extract_strided_slice %424 {offsets = [0, 0], sizes = [2, 128], strides = [1, 1]} : vector<2x384xf32> to vector<2x128xf32>
    %427 = arith.addf %425, %426 : vector<2x128xf32>
    %428 = arith.negf %427 : vector<2x128xf32>
    %429 = math.exp %428 : vector<2x128xf32>
    %cst_163 = arith.constant 1.000000e+00 : f32
    %430 = vector.broadcast %cst_163 : f32 to vector<2x128xf32>
    %431 = arith.addf %430, %429 : vector<2x128xf32>
    %432 = arith.divf %430, %431 : vector<2x128xf32>
    %433 = vector.extract_strided_slice %393 {offsets = [0, 128], sizes = [2, 128], strides = [1, 1]} : vector<2x384xf32> to vector<2x128xf32>
    %434 = vector.extract_strided_slice %424 {offsets = [0, 128], sizes = [2, 128], strides = [1, 1]} : vector<2x384xf32> to vector<2x128xf32>
    %435 = arith.addf %433, %434 : vector<2x128xf32>
    %436 = arith.negf %435 : vector<2x128xf32>
    %437 = math.exp %436 : vector<2x128xf32>
    %cst_164 = arith.constant 1.000000e+00 : f32
    %438 = vector.broadcast %cst_164 : f32 to vector<2x128xf32>
    %439 = arith.addf %438, %437 : vector<2x128xf32>
    %440 = arith.divf %438, %439 : vector<2x128xf32>
    %441 = vector.extract_strided_slice %393 {offsets = [0, 256], sizes = [2, 128], strides = [1, 1]} : vector<2x384xf32> to vector<2x128xf32>
    %442 = vector.extract_strided_slice %424 {offsets = [0, 256], sizes = [2, 128], strides = [1, 1]} : vector<2x384xf32> to vector<2x128xf32>
    %443 = arith.addf %442, %37 : vector<2x128xf32>
    %444 = arith.mulf %432, %443 : vector<2x128xf32>
    %445 = arith.addf %441, %444 : vector<2x128xf32>
    %446 = math.tanh %445 : vector<2x128xf32>
    %cst_165 = arith.constant 1.000000e+00 : f32
    %447 = vector.broadcast %cst_165 : f32 to vector<2x128xf32>
    %448 = arith.subf %447, %440 : vector<2x128xf32>
    %449 = arith.mulf %448, %446 : vector<2x128xf32>
    %450 = arith.mulf %440, %381 : vector<2x128xf32>
    %451 = arith.addf %449, %450 : vector<2x128xf32>
    %cst_166 = arith.constant -5.000000e+00 : f32
    %cst_167 = arith.constant 5.000000e+00 : f32
    %452 = vector.broadcast %cst_166 : f32 to vector<2x128xf32>
    %453 = arith.maximumf %452, %422 : vector<2x128xf32>
    %454 = vector.broadcast %cst_167 : f32 to vector<2x128xf32>
    %455 = arith.minimumf %454, %453 : vector<2x128xf32>
    %c10_168 = arith.constant 10 : index
    %c0_169 = arith.constant 0 : index
    %456 = vector.load %arg15[%c10_168, %c0_169] : memref<16x256xf32, #tpu.memory_space<vmem>>, vector<2x128xf32>
    tpu.vector_store %arg15[%c10_168, %c0_169], %455 {strides = array<i32>} : memref<16x256xf32, #tpu.memory_space<vmem>>, vector<2x128xf32>,
    %cst_170 = arith.constant -5.000000e+00 : f32
    %cst_171 = arith.constant 5.000000e+00 : f32
    %457 = vector.broadcast %cst_170 : f32 to vector<2x128xf32>
    %458 = arith.maximumf %457, %451 : vector<2x128xf32>
    %459 = vector.broadcast %cst_171 : f32 to vector<2x128xf32>
    %460 = arith.minimumf %459, %458 : vector<2x128xf32>
    %c4_172 = arith.constant 4 : index
    %c128_173 = arith.constant 128 : index
    %461 = vector.load %arg15[%c4_172, %c128_173] : memref<16x256xf32, #tpu.memory_space<vmem>>, vector<2x128xf32>
    tpu.vector_store %arg15[%c4_172, %c128_173], %460 {strides = array<i32>} : memref<16x256xf32, #tpu.memory_space<vmem>>, vector<2x128xf32>,
    %c12_174 = arith.constant 12 : index
    %c0_175 = arith.constant 0 : index
    %462 = vector.load %arg18[%c12_174, %c0_175] : memref<16x768xf32, #tpu.memory_space<vmem>>, vector<2x384xf32>
    %c2_176 = arith.constant 2 : index
    %c384_177 = arith.constant 384 : index
    %463 = vector.load %arg18[%c2_176, %c384_177] : memref<16x768xf32, #tpu.memory_space<vmem>>, vector<2x384xf32>
    %c0_178 = arith.constant 0 : index
    %c0_179 = arith.constant 0 : index
    %464 = vector.load %arg3[%c0_178, %c0_179] : memref<128x384xf32, #tpu.memory_space<vmem>>, vector<128x384xf32>
    %cst_180 = arith.constant dense<0.000000e+00> : vector<2x384xf32>
    %465 = tpu.matmul %422, %464, %cst_180 {dimension_numbers = #tpu.dot_dimension_numbers<[1], [0], [0], [1], [0, 0, 1, 1], [], []>} : vector<2x128xf32>, vector<128x384xf32>, vector<2x384xf32> -> vector<2x384xf32>
    %466 = vector.extract_strided_slice %462 {offsets = [0, 0], sizes = [2, 128], strides = [1, 1]} : vector<2x384xf32> to vector<2x128xf32>
    %467 = vector.extract_strided_slice %465 {offsets = [0, 0], sizes = [2, 128], strides = [1, 1]} : vector<2x384xf32> to vector<2x128xf32>
    %468 = arith.addf %466, %467 : vector<2x128xf32>
    %469 = arith.negf %468 : vector<2x128xf32>
    %470 = math.exp %469 : vector<2x128xf32>
    %cst_181 = arith.constant 1.000000e+00 : f32
    %471 = vector.broadcast %cst_181 : f32 to vector<2x128xf32>
    %472 = arith.addf %471, %470 : vector<2x128xf32>
    %473 = arith.divf %471, %472 : vector<2x128xf32>
    %474 = vector.extract_strided_slice %462 {offsets = [0, 128], sizes = [2, 128], strides = [1, 1]} : vector<2x384xf32> to vector<2x128xf32>
    %475 = vector.extract_strided_slice %465 {offsets = [0, 128], sizes = [2, 128], strides = [1, 1]} : vector<2x384xf32> to vector<2x128xf32>
    %476 = arith.addf %474, %475 : vector<2x128xf32>
    %477 = arith.negf %476 : vector<2x128xf32>
    %478 = math.exp %477 : vector<2x128xf32>
    %cst_182 = arith.constant 1.000000e+00 : f32
    %479 = vector.broadcast %cst_182 : f32 to vector<2x128xf32>
    %480 = arith.addf %479, %478 : vector<2x128xf32>
    %481 = arith.divf %479, %480 : vector<2x128xf32>
    %482 = vector.extract_strided_slice %462 {offsets = [0, 256], sizes = [2, 128], strides = [1, 1]} : vector<2x384xf32> to vector<2x128xf32>
    %483 = vector.extract_strided_slice %465 {offsets = [0, 256], sizes = [2, 128], strides = [1, 1]} : vector<2x384xf32> to vector<2x128xf32>
    %484 = arith.addf %483, %34 : vector<2x128xf32>
    %485 = arith.mulf %473, %484 : vector<2x128xf32>
    %486 = arith.addf %482, %485 : vector<2x128xf32>
    %487 = math.tanh %486 : vector<2x128xf32>
    %cst_183 = arith.constant 1.000000e+00 : f32
    %488 = vector.broadcast %cst_183 : f32 to vector<2x128xf32>
    %489 = arith.subf %488, %481 : vector<2x128xf32>
    %490 = arith.mulf %489, %487 : vector<2x128xf32>
    %491 = arith.mulf %481, %422 : vector<2x128xf32>
    %492 = arith.addf %490, %491 : vector<2x128xf32>
    %c0_184 = arith.constant 0 : index
    %c0_185 = arith.constant 0 : index
    %493 = vector.load %arg4[%c0_184, %c0_185] : memref<128x384xf32, #tpu.memory_space<vmem>>, vector<128x384xf32>
    %cst_186 = arith.constant dense<0.000000e+00> : vector<2x384xf32>
    %494 = tpu.matmul %451, %493, %cst_186 {dimension_numbers = #tpu.dot_dimension_numbers<[1], [0], [0], [1], [0, 0, 1, 1], [], []>} : vector<2x128xf32>, vector<128x384xf32>, vector<2x384xf32> -> vector<2x384xf32>
    %495 = vector.extract_strided_slice %463 {offsets = [0, 0], sizes = [2, 128], strides = [1, 1]} : vector<2x384xf32> to vector<2x128xf32>
    %496 = vector.extract_strided_slice %494 {offsets = [0, 0], sizes = [2, 128], strides = [1, 1]} : vector<2x384xf32> to vector<2x128xf32>
    %497 = arith.addf %495, %496 : vector<2x128xf32>
    %498 = arith.negf %497 : vector<2x128xf32>
    %499 = math.exp %498 : vector<2x128xf32>
    %cst_187 = arith.constant 1.000000e+00 : f32
    %500 = vector.broadcast %cst_187 : f32 to vector<2x128xf32>
    %501 = arith.addf %500, %499 : vector<2x128xf32>
    %502 = arith.divf %500, %501 : vector<2x128xf32>
    %503 = vector.extract_strided_slice %463 {offsets = [0, 128], sizes = [2, 128], strides = [1, 1]} : vector<2x384xf32> to vector<2x128xf32>
    %504 = vector.extract_strided_slice %494 {offsets = [0, 128], sizes = [2, 128], strides = [1, 1]} : vector<2x384xf32> to vector<2x128xf32>
    %505 = arith.addf %503, %504 : vector<2x128xf32>
    %506 = arith.negf %505 : vector<2x128xf32>
    %507 = math.exp %506 : vector<2x128xf32>
    %cst_188 = arith.constant 1.000000e+00 : f32
    %508 = vector.broadcast %cst_188 : f32 to vector<2x128xf32>
    %509 = arith.addf %508, %507 : vector<2x128xf32>
    %510 = arith.divf %508, %509 : vector<2x128xf32>
    %511 = vector.extract_strided_slice %463 {offsets = [0, 256], sizes = [2, 128], strides = [1, 1]} : vector<2x384xf32> to vector<2x128xf32>
    %512 = vector.extract_strided_slice %494 {offsets = [0, 256], sizes = [2, 128], strides = [1, 1]} : vector<2x384xf32> to vector<2x128xf32>
    %513 = arith.addf %512, %37 : vector<2x128xf32>
    %514 = arith.mulf %502, %513 : vector<2x128xf32>
    %515 = arith.addf %511, %514 : vector<2x128xf32>
    %516 = math.tanh %515 : vector<2x128xf32>
    %cst_189 = arith.constant 1.000000e+00 : f32
    %517 = vector.broadcast %cst_189 : f32 to vector<2x128xf32>
    %518 = arith.subf %517, %510 : vector<2x128xf32>
    %519 = arith.mulf %518, %516 : vector<2x128xf32>
    %520 = arith.mulf %510, %451 : vector<2x128xf32>
    %521 = arith.addf %519, %520 : vector<2x128xf32>
    %cst_190 = arith.constant -5.000000e+00 : f32
    %cst_191 = arith.constant 5.000000e+00 : f32
    %522 = vector.broadcast %cst_190 : f32 to vector<2x128xf32>
    %523 = arith.maximumf %522, %492 : vector<2x128xf32>
    %524 = vector.broadcast %cst_191 : f32 to vector<2x128xf32>
    %525 = arith.minimumf %524, %523 : vector<2x128xf32>
    %c12_192 = arith.constant 12 : index
    %c0_193 = arith.constant 0 : index
    %526 = vector.load %arg15[%c12_192, %c0_193] : memref<16x256xf32, #tpu.memory_space<vmem>>, vector<2x128xf32>
    tpu.vector_store %arg15[%c12_192, %c0_193], %525 {strides = array<i32>} : memref<16x256xf32, #tpu.memory_space<vmem>>, vector<2x128xf32>,
    %cst_194 = arith.constant -5.000000e+00 : f32
    %cst_195 = arith.constant 5.000000e+00 : f32
    %527 = vector.broadcast %cst_194 : f32 to vector<2x128xf32>
    %528 = arith.maximumf %527, %521 : vector<2x128xf32>
    %529 = vector.broadcast %cst_195 : f32 to vector<2x128xf32>
    %530 = arith.minimumf %529, %528 : vector<2x128xf32>
    %c2_196 = arith.constant 2 : index
    %c128_197 = arith.constant 128 : index
    %531 = vector.load %arg15[%c2_196, %c128_197] : memref<16x256xf32, #tpu.memory_space<vmem>>, vector<2x128xf32>
    tpu.vector_store %arg15[%c2_196, %c128_197], %530 {strides = array<i32>} : memref<16x256xf32, #tpu.memory_space<vmem>>, vector<2x128xf32>,
    %c14_198 = arith.constant 14 : index
    %c0_199 = arith.constant 0 : index
    %532 = vector.load %arg18[%c14_198, %c0_199] : memref<16x768xf32, #tpu.memory_space<vmem>>, vector<2x384xf32>
    %c0_200 = arith.constant 0 : index
    %c384_201 = arith.constant 384 : index
    %533 = vector.load %arg18[%c0_200, %c384_201] : memref<16x768xf32, #tpu.memory_space<vmem>>, vector<2x384xf32>
    %c0_202 = arith.constant 0 : index
    %c0_203 = arith.constant 0 : index
    %534 = vector.load %arg3[%c0_202, %c0_203] : memref<128x384xf32, #tpu.memory_space<vmem>>, vector<128x384xf32>
    %cst_204 = arith.constant dense<0.000000e+00> : vector<2x384xf32>
    %535 = tpu.matmul %492, %534, %cst_204 {dimension_numbers = #tpu.dot_dimension_numbers<[1], [0], [0], [1], [0, 0, 1, 1], [], []>} : vector<2x128xf32>, vector<128x384xf32>, vector<2x384xf32> -> vector<2x384xf32>
    %536 = vector.extract_strided_slice %532 {offsets = [0, 0], sizes = [2, 128], strides = [1, 1]} : vector<2x384xf32> to vector<2x128xf32>
    %537 = vector.extract_strided_slice %535 {offsets = [0, 0], sizes = [2, 128], strides = [1, 1]} : vector<2x384xf32> to vector<2x128xf32>
    %538 = arith.addf %536, %537 : vector<2x128xf32>
    %539 = arith.negf %538 : vector<2x128xf32>
    %540 = math.exp %539 : vector<2x128xf32>
    %cst_205 = arith.constant 1.000000e+00 : f32
    %541 = vector.broadcast %cst_205 : f32 to vector<2x128xf32>
    %542 = arith.addf %541, %540 : vector<2x128xf32>
    %543 = arith.divf %541, %542 : vector<2x128xf32>
    %544 = vector.extract_strided_slice %532 {offsets = [0, 128], sizes = [2, 128], strides = [1, 1]} : vector<2x384xf32> to vector<2x128xf32>
    %545 = vector.extract_strided_slice %535 {offsets = [0, 128], sizes = [2, 128], strides = [1, 1]} : vector<2x384xf32> to vector<2x128xf32>
    %546 = arith.addf %544, %545 : vector<2x128xf32>
    %547 = arith.negf %546 : vector<2x128xf32>
    %548 = math.exp %547 : vector<2x128xf32>
    %cst_206 = arith.constant 1.000000e+00 : f32
    %549 = vector.broadcast %cst_206 : f32 to vector<2x128xf32>
    %550 = arith.addf %549, %548 : vector<2x128xf32>
    %551 = arith.divf %549, %550 : vector<2x128xf32>
    %552 = vector.extract_strided_slice %532 {offsets = [0, 256], sizes = [2, 128], strides = [1, 1]} : vector<2x384xf32> to vector<2x128xf32>
    %553 = vector.extract_strided_slice %535 {offsets = [0, 256], sizes = [2, 128], strides = [1, 1]} : vector<2x384xf32> to vector<2x128xf32>
    %554 = arith.addf %553, %34 : vector<2x128xf32>
    %555 = arith.mulf %543, %554 : vector<2x128xf32>
    %556 = arith.addf %552, %555 : vector<2x128xf32>
    %557 = math.tanh %556 : vector<2x128xf32>
    %cst_207 = arith.constant 1.000000e+00 : f32
    %558 = vector.broadcast %cst_207 : f32 to vector<2x128xf32>
    %559 = arith.subf %558, %551 : vector<2x128xf32>
    %560 = arith.mulf %559, %557 : vector<2x128xf32>
    %561 = arith.mulf %551, %492 : vector<2x128xf32>
    %562 = arith.addf %560, %561 : vector<2x128xf32>
    %c0_208 = arith.constant 0 : index
    %c0_209 = arith.constant 0 : index
    %563 = vector.load %arg4[%c0_208, %c0_209] : memref<128x384xf32, #tpu.memory_space<vmem>>, vector<128x384xf32>
    %cst_210 = arith.constant dense<0.000000e+00> : vector<2x384xf32>
    %564 = tpu.matmul %521, %563, %cst_210 {dimension_numbers = #tpu.dot_dimension_numbers<[1], [0], [0], [1], [0, 0, 1, 1], [], []>} : vector<2x128xf32>, vector<128x384xf32>, vector<2x384xf32> -> vector<2x384xf32>
    %565 = vector.extract_strided_slice %533 {offsets = [0, 0], sizes = [2, 128], strides = [1, 1]} : vector<2x384xf32> to vector<2x128xf32>
    %566 = vector.extract_strided_slice %564 {offsets = [0, 0], sizes = [2, 128], strides = [1, 1]} : vector<2x384xf32> to vector<2x128xf32>
    %567 = arith.addf %565, %566 : vector<2x128xf32>
    %568 = arith.negf %567 : vector<2x128xf32>
    %569 = math.exp %568 : vector<2x128xf32>
    %cst_211 = arith.constant 1.000000e+00 : f32
    %570 = vector.broadcast %cst_211 : f32 to vector<2x128xf32>
    %571 = arith.addf %570, %569 : vector<2x128xf32>
    %572 = arith.divf %570, %571 : vector<2x128xf32>
    %573 = vector.extract_strided_slice %533 {offsets = [0, 128], sizes = [2, 128], strides = [1, 1]} : vector<2x384xf32> to vector<2x128xf32>
    %574 = vector.extract_strided_slice %564 {offsets = [0, 128], sizes = [2, 128], strides = [1, 1]} : vector<2x384xf32> to vector<2x128xf32>
    %575 = arith.addf %573, %574 : vector<2x128xf32>
    %576 = arith.negf %575 : vector<2x128xf32>
    %577 = math.exp %576 : vector<2x128xf32>
    %cst_212 = arith.constant 1.000000e+00 : f32
    %578 = vector.broadcast %cst_212 : f32 to vector<2x128xf32>
    %579 = arith.addf %578, %577 : vector<2x128xf32>
    %580 = arith.divf %578, %579 : vector<2x128xf32>
    %581 = vector.extract_strided_slice %533 {offsets = [0, 256], sizes = [2, 128], strides = [1, 1]} : vector<2x384xf32> to vector<2x128xf32>
    %582 = vector.extract_strided_slice %564 {offsets = [0, 256], sizes = [2, 128], strides = [1, 1]} : vector<2x384xf32> to vector<2x128xf32>
    %583 = arith.addf %582, %37 : vector<2x128xf32>
    %584 = arith.mulf %572, %583 : vector<2x128xf32>
    %585 = arith.addf %581, %584 : vector<2x128xf32>
    %586 = math.tanh %585 : vector<2x128xf32>
    %cst_213 = arith.constant 1.000000e+00 : f32
    %587 = vector.broadcast %cst_213 : f32 to vector<2x128xf32>
    %588 = arith.subf %587, %580 : vector<2x128xf32>
    %589 = arith.mulf %588, %586 : vector<2x128xf32>
    %590 = arith.mulf %580, %521 : vector<2x128xf32>
    %591 = arith.addf %589, %590 : vector<2x128xf32>
    %cst_214 = arith.constant -5.000000e+00 : f32
    %cst_215 = arith.constant 5.000000e+00 : f32
    %592 = vector.broadcast %cst_214 : f32 to vector<2x128xf32>
    %593 = arith.maximumf %592, %562 : vector<2x128xf32>
    %594 = vector.broadcast %cst_215 : f32 to vector<2x128xf32>
    %595 = arith.minimumf %594, %593 : vector<2x128xf32>
    %c14_216 = arith.constant 14 : index
    %c0_217 = arith.constant 0 : index
    %596 = vector.load %arg15[%c14_216, %c0_217] : memref<16x256xf32, #tpu.memory_space<vmem>>, vector<2x128xf32>
    tpu.vector_store %arg15[%c14_216, %c0_217], %595 {strides = array<i32>} : memref<16x256xf32, #tpu.memory_space<vmem>>, vector<2x128xf32>,
    %cst_218 = arith.constant -5.000000e+00 : f32
    %cst_219 = arith.constant 5.000000e+00 : f32
    %597 = vector.broadcast %cst_218 : f32 to vector<2x128xf32>
    %598 = arith.maximumf %597, %591 : vector<2x128xf32>
    %599 = vector.broadcast %cst_219 : f32 to vector<2x128xf32>
    %600 = arith.minimumf %599, %598 : vector<2x128xf32>
    %c0_220 = arith.constant 0 : index
    %c128_221 = arith.constant 128 : index
    %601 = vector.load %arg15[%c0_220, %c128_221] : memref<16x256xf32, #tpu.memory_space<vmem>>, vector<2x128xf32>
    tpu.vector_store %arg15[%c0_220, %c128_221], %600 {strides = array<i32>} : memref<16x256xf32, #tpu.memory_space<vmem>>, vector<2x128xf32>,
    return
  }
}

</mosaic_0001>

<llo_original>
// kernel: calcium_net_forward.1
$region0: #{calcium_net_forward.1}
  #allocation0 [shape = 'u32[]', space=smem, size = 0x4, offset = 0x4, fixed_abs, tag = 'smem constant byte address 0x4 - core index']
  #allocation1 [shape = 'u32[144,128]{1,0:T(1,128)}', space=vmem, size = 0x12000, scoped, tag = 'internal scratch']
  #allocation2 [shape = 'f32[16,768]{1,0:T(8,128)}', space=vmem, size = 0xc000, scoped, tag = 'scratch operand']
  %s0 = inlined_call_operand.vmem [shape: f32[16,4], index: 0, kind: input, shape index: {}]
  %s1 = inlined_call_operand.vmem [shape: f32[2,2,128], index: 1, kind: input, shape index: {}]
  %s2 = inlined_call_operand.vmem [shape: f32[4,768], index: 2, kind: input, shape index: {}]
  %s3 = inlined_call_operand.hbm [shape: f32[128,384], index: 3, kind: input, shape index: {}]
  %s4 = inlined_call_operand.hbm [shape: f32[128,384], index: 4, kind: input, shape index: {}]
  %s5 = inlined_call_operand.vmem [shape: f32[1,768], index: 5, kind: input, shape index: {}]
  %s6 = inlined_call_operand.vmem [shape: f32[1,128], index: 6, kind: input, shape index: {}]
  %s7 = inlined_call_operand.vmem [shape: f32[1,128], index: 7, kind: input, shape index: {}]
  %s8 = inlined_call_operand.vmem [shape: f32[16,20], index: 8, kind: input, shape index: {}]
  %s9 = inlined_call_operand.vmem [shape: f32[2,4], index: 9, kind: input, shape index: {}]
  %s10 = inlined_call_operand.vmem [shape: f32[20,4], index: 10, kind: input, shape index: {}]
  %s11 = inlined_call_operand.vmem [shape: f32[1,4], index: 11, kind: input, shape index: {}]
  %s12 = inlined_call_operand.vmem [shape: f32[16,16], index: 12, kind: input, shape index: {}]
  %s13 = inlined_call_operand.vmem [shape: f32[16,2], index: 13, kind: input, shape index: {}]
  %s14 = inlined_call_operand.vmem [shape: f32[16,1], index: 14, kind: input, shape index: {}]
  %s15 = inlined_call_operand.vmem [shape: f32[16,256], index: 15, kind: output, shape index: {0}]
  %s16 = inlined_call_operand.vmem [shape: f32[16,4], index: 16, kind: output, shape index: {1}]
  %s17 = inlined_call_operand.vmem [shape: f32[16,4], index: 17, kind: output, shape index: {2}]
  %18 = xla_tuple %s15, %s16, %s17
  %s19 = sld [smem:[#allocation0]]
  $region94: #{calcium_net_forward.1} parent=0
    _
  %s21 = ssub.s32 1, %s19
  %s22 = scalar_select 0, %s21, %s19
  $region1: #{calcium_net_forward.1} parent=0
    #allocation3 [shape = 'u8[196608]{0}', space=vmem, size = 0x30000, scoped, tag = 'input window, operand 3, single buffered']
    #allocation4 [shape = 's32[1]{0}', space=sflag, size = 0x4, scoped, tag = 'scoped memory for calcium_net_forward.1']
    #allocation5 [shape = 'u8[196608]{0}', space=vmem, size = 0x30000, scoped, tag = 'input window, operand 4, single buffered']
    #allocation6 [shape = 's32[1]{0}', space=sflag, size = 0x4, scoped, tag = 'scoped memory for calcium_net_forward.1']
    %23 = vsyncpa [#allocation4], 0
    %24 = vsyncpa [#allocation6], 0
    // Predicated region
    $region2: #{calcium_net_forward.1} parent=1 // pred_check
      _
    $region3: #{calcium_net_forward.1} parent=1 // pred_check_branch
      %26 = sbr.rel (0) target = $region5
    $region4: #{calcium_net_forward.1} parent=1 // pred_region
      _
    $region5: #{calcium_net_forward.1} parent=1 // pred_fallthru
      _
    // Predicated region
    $region6: #{calcium_net_forward.1} parent=1 // pred_check
      _
    $region7: #{calcium_net_forward.1} parent=1 // pred_check_branch
      %28 = sbr.rel (0) target = $region9
    $region8: #{calcium_net_forward.1} parent=1 // pred_region
      _
    $region9: #{calcium_net_forward.1} parent=1 // pred_fallthru
      _
    // Predicated region
    $region10: #{calcium_net_forward.1} parent=1 // pred_check
      _
    $region11: #{calcium_net_forward.1} parent=1 // pred_check_branch
      %30 = sbr.rel (0) target = $region13
    $region12: #{calcium_net_forward.1} parent=1 // pred_region
      _
    $region13: #{calcium_net_forward.1} parent=1 // pred_fallthru
      _
    // Predicated region
    $region14: #{calcium_net_forward.1} parent=1 // pred_check
      _
    $region15: #{calcium_net_forward.1} parent=1 // pred_check_branch
      %32 = sbr.rel (0) target = $region17
    $region16: #{calcium_net_forward.1} parent=1 // pred_region
      %s34 = ssub.s32 6144, 6144
      %35 = vsyncadd [#allocation4], %s34
      %s36 = sshll.u32 [#allocation3], 4
      %s37 = int_to_ptr.vmem [resolvable:$true] %s36
      %42 = dma.hbm_to_vmem [thread:$0]  %s3, 6144, %s37, [#allocation4], 384, 384, 24
    $region17: #{calcium_net_forward.1} parent=1 // pred_fallthru
      _
    // Predicated region
    $region18: #{calcium_net_forward.1} parent=1 // pred_check
      _
    $region19: #{calcium_net_forward.1} parent=1 // pred_check_branch
      %44 = sbr.rel (0) target = $region21
    $region20: #{calcium_net_forward.1} parent=1 // pred_region
      %s46 = ssub.s32 6144, 6144
      %47 = vsyncadd [#allocation6], %s46
      %s48 = sshll.u32 [#allocation5], 4
      %s49 = int_to_ptr.vmem [resolvable:$true] %s48
      %54 = dma.hbm_to_vmem [thread:$0]  %s4, 6144, %s49, [#allocation6], 384, 384, 24
    $region21: #{calcium_net_forward.1} parent=1 // pred_fallthru
      _
    // Predicated region
    $region22: #{calcium_net_forward.1} parent=1 // pred_check
      _
    $region23: #{calcium_net_forward.1} parent=1 // pred_check_branch
      %56 = sbr.rel (0) target = $region25
    $region24: #{calcium_net_forward.1} parent=1 // pred_region
      _
    $region25: #{calcium_net_forward.1} parent=1 // pred_fallthru
      _
    // Predicated region
    $region26: #{calcium_net_forward.1} parent=1 // pred_check
      _
    $region27: #{calcium_net_forward.1} parent=1 // pred_check_branch
      %58 = sbr.rel (0) target = $region29
    $region28: #{calcium_net_forward.1} parent=1 // pred_region
      _
    $region29: #{calcium_net_forward.1} parent=1 // pred_fallthru
      _
    // Predicated region
    $region30: #{calcium_net_forward.1} parent=1 // pred_check
      _
    $region31: #{calcium_net_forward.1} parent=1 // pred_check_branch
      %60 = sbr.rel (0) target = $region33
    $region32: #{calcium_net_forward.1} parent=1 // pred_region
      _
    $region33: #{calcium_net_forward.1} parent=1 // pred_fallthru
      _
    // Predicated region
    $region34: #{calcium_net_forward.1} parent=1 // pred_check
      _
    $region35: #{calcium_net_forward.1} parent=1 // pred_check_branch
      %62 = sbr.rel (0) target = $region37
    $region36: #{calcium_net_forward.1} parent=1 // pred_region
      _
    $region37: #{calcium_net_forward.1} parent=1 // pred_fallthru
      _
    // Predicated region
    $region38: #{calcium_net_forward.1} parent=1 // pred_check
      _
    $region39: #{calcium_net_forward.1} parent=1 // pred_check_branch
      %64 = sbr.rel (0) target = $region41
    $region40: #{calcium_net_forward.1} parent=1 // pred_region
      _
    $region41: #{calcium_net_forward.1} parent=1 // pred_fallthru
      _
    // Predicated region
    $region42: #{calcium_net_forward.1} parent=1 // pred_check
      _
    $region43: #{calcium_net_forward.1} parent=1 // pred_check_branch
      %66 = sbr.rel (0) target = $region45
    $region44: #{calcium_net_forward.1} parent=1 // pred_region
      _
    $region45: #{calcium_net_forward.1} parent=1 // pred_fallthru
      _
    // Predicated region
    $region46: #{calcium_net_forward.1} parent=1 // pred_check
      _
    $region47: #{calcium_net_forward.1} parent=1 // pred_check_branch
      %68 = sbr.rel (0) target = $region49
    $region48: #{calcium_net_forward.1} parent=1 // pred_region
      _
    $region49: #{calcium_net_forward.1} parent=1 // pred_fallthru
      _
    // Predicated region
    $region50: #{calcium_net_forward.1} parent=1 // pred_check
      _
    $region51: #{calcium_net_forward.1} parent=1 // pred_check_branch
      %70 = sbr.rel (0) target = $region53
    $region52: #{calcium_net_forward.1} parent=1 // pred_region
      _
    $region53: #{calcium_net_forward.1} parent=1 // pred_fallthru
      _
    // Predicated region
    $region54: #{calcium_net_forward.1} parent=1 // pred_check
      _
    $region55: #{calcium_net_forward.1} parent=1 // pred_check_branch
      %72 = sbr.rel (0) target = $region57
    $region56: #{calcium_net_forward.1} parent=1 // pred_region
      _
    $region57: #{calcium_net_forward.1} parent=1 // pred_fallthru
      _
    // Predicated region
    $region58: #{calcium_net_forward.1} parent=1 // pred_check
      _
    $region59: #{calcium_net_forward.1} parent=1 // pred_check_branch
      %74 = sbr.rel (0) target = $region61
    $region60: #{calcium_net_forward.1} parent=1 // pred_region
      _
    $region61: #{calcium_net_forward.1} parent=1 // pred_fallthru
      _
    // Predicated region
    $region62: #{calcium_net_forward.1} parent=1 // pred_check
      _
    $region63: #{calcium_net_forward.1} parent=1 // pred_check_branch
      %76 = sbr.rel (0) target = $region65
    $region64: #{calcium_net_forward.1} parent=1 // pred_region
      %77 = dma.done [#allocation4], 6144
    $region65: #{calcium_net_forward.1} parent=1 // pred_fallthru
      _
    // Predicated region
    $region66: #{calcium_net_forward.1} parent=1 // pred_check
      _
    $region67: #{calcium_net_forward.1} parent=1 // pred_check_branch
      %79 = sbr.rel (0) target = $region69
    $region68: #{calcium_net_forward.1} parent=1 // pred_region
      %80 = dma.done [#allocation6], 6144
    $region69: #{calcium_net_forward.1} parent=1 // pred_fallthru
      _
    %v81 = vld [vmem:[%s5] sm:$0x3f]
    %v83 = vlaneseq
    %v84 = vshrl.u32 %v83, 7
    %v85 = vsub.s32 0, %v84
    %v86 = vrot.slane %v81, %v85
    %v87 = vlaneseq
    %v88 = vshrl.u32 %v87, 7
    %v89 = vsub.s32 1, %v88
    %v90 = vrot.slane %v81, %v89
    %v91 = vlaneseq
    %v92 = vshrl.u32 %v91, 7
    %v93 = vsub.s32 2, %v92
    %v94 = vrot.slane %v81, %v93
    %v95 = vlaneseq
    %v96 = vshrl.u32 %v95, 7
    %v97 = vsub.s32 3, %v96
    %v98 = vrot.slane %v81, %v97
    %v99 = vlaneseq
    %v100 = vshrl.u32 %v99, 7
    %v101 = vsub.s32 4, %v100
    %v102 = vrot.slane %v81, %v101
    %v103 = vlaneseq
    %v104 = vshrl.u32 %v103, 7
    %v105 = vsub.s32 5, %v104
    %v106 = vrot.slane %v81, %v105
    %v113 = vld [vmem:[%s0] sm:$0xff]
    %v114 = vld [vmem:[%s0 + $0x8] sm:$0xff]
    %v115 = vld [vmem:[%s2] sm:$0xff]
    %v116 = vld [vmem:[%s2 + $0x8] sm:$0xff]
    %v117 = vld [vmem:[%s2 + $0x10] sm:$0xff]
    %v121 = vcombine.high %v115, %v115
    %v122 = vcombine.high %v116, %v116
    %v123 = vcombine.high %v117, %v117
    %vm124 = vcmask 31744
    %v126 = vsel %vm124, %v113, 0
    %v129 = vsel %vm124, %v114, 0
    %vm131 = vcmask 1043456
    %v132 = vsel %vm131, %v115, 0
    %v134 = vsel %vm131, %v121, 0
    %v136 = vsel %vm131, %v116, 0
    %v138 = vsel %vm131, %v122, 0
    %v140 = vsel %vm131, %v117, 0
    %v142 = vsel %vm131, %v123, 0
    %144 = vmatprep.subr.mxu0 %v134
    %145 = vmatpush1.msra.mxu0 %v132
    %146 = vmatprep.subr.mxu0 0.0
    %147 = vmatpush1.msra.mxu0 0.0
    %148 = vmatprep.subr.mxu0 0.0
    %149 = vmatpush1.msra.mxu0 0.0
    %150 = vmatprep.subr.mxu0 0.0
    %151 = vmatpush1.msra.mxu0 0.0
    %152 = vmatprep.subr.mxu0 0.0
    %153 = vmatpush1.msra.mxu0 0.0
    %154 = vmatprep.subr.mxu0 0.0
    %155 = vmatpush1.msra.mxu0 0.0
    %156 = vmatprep.subr.mxu0 0.0
    %157 = vmatpush1.msra.mxu0 0.0
    %158 = vmatprep.subr.mxu0 0.0
    %159 = vmatpush1.msra.mxu0 0.0
    %160 = vmatprep.subr.mxu0 0.0
    %161 = vmatpush1.msra.mxu0 0.0
    %162 = vmatprep.subr.mxu0 0.0
    %163 = vmatpush1.msra.mxu0 0.0
    %164 = vmatprep.subr.mxu0 0.0
    %165 = vmatpush1.msra.mxu0 0.0
    %166 = vmatprep.subr.mxu0 0.0
    %167 = vmatpush1.msra.mxu0 0.0
    %168 = vmatprep.subr.mxu0 0.0
    %169 = vmatpush1.msra.mxu0 0.0
    %170 = vmatprep.subr.mxu0 0.0
    %171 = vmatpush1.msra.mxu0 0.0
    %172 = vmatprep.subr.mxu0 0.0
    %173 = vmatpush1.msra.mxu0 0.0
    %174 = vmatprep.subr.mxu0 0.0
    %175 = vmatpush1.msra.mxu0 0.0
    %176 = vmatprep.subr.mxu0 0.0
    %177 = vmatpush1.msra.mxu0 0.0
    %178 = vmatprep.subr.mxu0 0.0
    %179 = vmatpush1.msra.mxu0 0.0
    %180 = vmatprep.subr.mxu0 0.0
    %181 = vmatpush1.msra.mxu0 0.0
    %182 = vmatprep.subr.mxu0 0.0
    %183 = vmatpush1.msra.mxu0 0.0
    %184 = vmatprep.subr.mxu0 0.0
    %185 = vmatpush1.msra.mxu0 0.0
    %186 = vmatprep.subr.mxu0 0.0
    %187 = vmatpush1.msra.mxu0 0.0
    %188 = vmatprep.subr.mxu0 0.0
    %189 = vmatpush1.msra.mxu0 0.0
    %190 = vmatprep.subr.mxu0 0.0
    %191 = vmatpush1.msra.mxu0 0.0
    %192 = vmatprep.subr.mxu0 0.0
    %193 = vmatpush1.msra.mxu0 0.0
    %194 = vmatprep.subr.mxu0 0.0
    %195 = vmatpush1.msra.mxu0 0.0
    %196 = vmatprep.subr.mxu0 0.0
    %197 = vmatpush1.msra.mxu0 0.0
    %198 = vmatprep.subr.mxu0 0.0
    %199 = vmatpush1.msra.mxu0 0.0
    %200 = vmatprep.subr.mxu0 0.0
    %201 = vmatpush1.msra.mxu0 0.0
    %202 = vmatprep.subr.mxu0 0.0
    %203 = vmatpush1.msra.mxu0 0.0
    %204 = vmatprep.subr.mxu0 0.0
    %205 = vmatpush1.msra.mxu0 0.0
    %206 = vmatprep.subr.mxu0 0.0
    %207 = vmatpush1.msra.mxu0 0.0
    %208 = vmatprep.mubr.f32.mxu0 0.0
    %209 = vmatmul.mubr.f32.gmra.mrb[0].mxu0 %v126
    %v210 = vpop.f32.mrb[0].mxu0
    %v211 = vadd.f32 %v86, %v210
    %v212 = vpop.f32.mrb[0].mxu0
    %v213 = vadd.f32 %v90, %v212
    %214 = vmatprep.mubr.f32.mxu0 0.0
    %215 = vmatmul.mubr.f32.gmra.mrb[0].mxu0 %v129
    %v216 = vpop.f32.mrb[0].mxu0
    %v217 = vadd.f32 %v86, %v216
    %v218 = vpop.f32.mrb[0].mxu0
    %v219 = vadd.f32 %v90, %v218
    %220 = vdwg.mxu0
    %221 = vmatprep.subr.mxu0 %v138
    %222 = vmatpush1.msra.mxu0 %v136
    %223 = vmatprep.subr.mxu0 0.0
    %224 = vmatpush1.msra.mxu0 0.0
    %225 = vmatprep.subr.mxu0 0.0
    %226 = vmatpush1.msra.mxu0 0.0
    %227 = vmatprep.subr.mxu0 0.0
    %228 = vmatpush1.msra.mxu0 0.0
    %229 = vmatprep.subr.mxu0 0.0
    %230 = vmatpush1.msra.mxu0 0.0
    %231 = vmatprep.subr.mxu0 0.0
    %232 = vmatpush1.msra.mxu0 0.0
    %233 = vmatprep.subr.mxu0 0.0
    %234 = vmatpush1.msra.mxu0 0.0
    %235 = vmatprep.subr.mxu0 0.0
    %236 = vmatpush1.msra.mxu0 0.0
    %237 = vmatprep.subr.mxu0 0.0
    %238 = vmatpush1.msra.mxu0 0.0
    %239 = vmatprep.subr.mxu0 0.0
    %240 = vmatpush1.msra.mxu0 0.0
    %241 = vmatprep.subr.mxu0 0.0
    %242 = vmatpush1.msra.mxu0 0.0
    %243 = vmatprep.subr.mxu0 0.0
    %244 = vmatpush1.msra.mxu0 0.0
    %245 = vmatprep.subr.mxu0 0.0
    %246 = vmatpush1.msra.mxu0 0.0
    %247 = vmatprep.subr.mxu0 0.0
    %248 = vmatpush1.msra.mxu0 0.0
    %249 = vmatprep.subr.mxu0 0.0
    %250 = vmatpush1.msra.mxu0 0.0
    %251 = vmatprep.subr.mxu0 0.0
    %252 = vmatpush1.msra.mxu0 0.0
    %253 = vmatprep.subr.mxu0 0.0
    %254 = vmatpush1.msra.mxu0 0.0
    %255 = vmatprep.subr.mxu0 0.0
    %256 = vmatpush1.msra.mxu0 0.0
    %257 = vmatprep.subr.mxu0 0.0
    %258 = vmatpush1.msra.mxu0 0.0
    %259 = vmatprep.subr.mxu0 0.0
    %260 = vmatpush1.msra.mxu0 0.0
    %261 = vmatprep.subr.mxu0 0.0
    %262 = vmatpush1.msra.mxu0 0.0
    %263 = vmatprep.subr.mxu0 0.0
    %264 = vmatpush1.msra.mxu0 0.0
    %265 = vmatprep.subr.mxu0 0.0
    %266 = vmatpush1.msra.mxu0 0.0
    %267 = vmatprep.subr.mxu0 0.0
    %268 = vmatpush1.msra.mxu0 0.0
    %269 = vmatprep.subr.mxu0 0.0
    %270 = vmatpush1.msra.mxu0 0.0
    %271 = vmatprep.subr.mxu0 0.0
    %272 = vmatpush1.msra.mxu0 0.0
    %273 = vmatprep.subr.mxu0 0.0
    %274 = vmatpush1.msra.mxu0 0.0
    %275 = vmatprep.subr.mxu0 0.0
    %276 = vmatpush1.msra.mxu0 0.0
    %277 = vmatprep.subr.mxu0 0.0
    %278 = vmatpush1.msra.mxu0 0.0
    %279 = vmatprep.subr.mxu0 0.0
    %280 = vmatpush1.msra.mxu0 0.0
    %281 = vmatprep.subr.mxu0 0.0
    %282 = vmatpush1.msra.mxu0 0.0
    %283 = vmatprep.subr.mxu0 0.0
    %284 = vmatpush1.msra.mxu0 0.0
    %285 = vmatprep.mubr.f32.mxu0 0.0
    %286 = vmatmul.mubr.f32.gmra.mrb[0].mxu0 %v126
    %v287 = vpop.f32.mrb[0].mxu0
    %v288 = vadd.f32 %v94, %v287
    %v289 = vpop.f32.mrb[0].mxu0
    %v290 = vadd.f32 %v98, %v289
    %291 = vmatprep.mubr.f32.mxu0 0.0
    %292 = vmatmul.mubr.f32.gmra.mrb[0].mxu0 %v129
    %v293 = vpop.f32.mrb[0].mxu0
    %v294 = vadd.f32 %v94, %v293
    %v295 = vpop.f32.mrb[0].mxu0
    %v296 = vadd.f32 %v98, %v295
    %297 = vdwg.mxu0
    %298 = vmatprep.subr.mxu0 %v142
    %299 = vmatpush1.msra.mxu0 %v140
    %300 = vmatprep.subr.mxu0 0.0
    %301 = vmatpush1.msra.mxu0 0.0
    %302 = vmatprep.subr.mxu0 0.0
    %303 = vmatpush1.msra.mxu0 0.0
    %304 = vmatprep.subr.mxu0 0.0
    %305 = vmatpush1.msra.mxu0 0.0
    %306 = vmatprep.subr.mxu0 0.0
    %307 = vmatpush1.msra.mxu0 0.0
    %308 = vmatprep.subr.mxu0 0.0
    %309 = vmatpush1.msra.mxu0 0.0
    %310 = vmatprep.subr.mxu0 0.0
    %311 = vmatpush1.msra.mxu0 0.0
    %312 = vmatprep.subr.mxu0 0.0
    %313 = vmatpush1.msra.mxu0 0.0
    %314 = vmatprep.subr.mxu0 0.0
    %315 = vmatpush1.msra.mxu0 0.0
    %316 = vmatprep.subr.mxu0 0.0
    %317 = vmatpush1.msra.mxu0 0.0
    %318 = vmatprep.subr.mxu0 0.0
    %319 = vmatpush1.msra.mxu0 0.0
    %320 = vmatprep.subr.mxu0 0.0
    %321 = vmatpush1.msra.mxu0 0.0
    %322 = vmatprep.subr.mxu0 0.0
    %323 = vmatpush1.msra.mxu0 0.0
    %324 = vmatprep.subr.mxu0 0.0
    %325 = vmatpush1.msra.mxu0 0.0
    %326 = vmatprep.subr.mxu0 0.0
    %327 = vmatpush1.msra.mxu0 0.0
    %328 = vmatprep.subr.mxu0 0.0
    %329 = vmatpush1.msra.mxu0 0.0
    %330 = vmatprep.subr.mxu0 0.0
    %331 = vmatpush1.msra.mxu0 0.0
    %332 = vmatprep.subr.mxu0 0.0
    %333 = vmatpush1.msra.mxu0 0.0
    %334 = vmatprep.subr.mxu0 0.0
    %335 = vmatpush1.msra.mxu0 0.0
    %336 = vmatprep.subr.mxu0 0.0
    %337 = vmatpush1.msra.mxu0 0.0
    %338 = vmatprep.subr.mxu0 0.0
    %339 = vmatpush1.msra.mxu0 0.0
    %340 = vmatprep.subr.mxu0 0.0
    %341 = vmatpush1.msra.mxu0 0.0
    %342 = vmatprep.subr.mxu0 0.0
    %343 = vmatpush1.msra.mxu0 0.0
    %344 = vmatprep.subr.mxu0 0.0
    %345 = vmatpush1.msra.mxu0 0.0
    %346 = vmatprep.subr.mxu0 0.0
    %347 = vmatpush1.msra.mxu0 0.0
    %348 = vmatprep.subr.mxu0 0.0
    %349 = vmatpush1.msra.mxu0 0.0
    %350 = vmatprep.subr.mxu0 0.0
    %351 = vmatpush1.msra.mxu0 0.0
    %352 = vmatprep.subr.mxu0 0.0
    %353 = vmatpush1.msra.mxu0 0.0
    %354 = vmatprep.subr.mxu0 0.0
    %355 = vmatpush1.msra.mxu0 0.0
    %356 = vmatprep.subr.mxu0 0.0
    %357 = vmatpush1.msra.mxu0 0.0
    %358 = vmatprep.subr.mxu0 0.0
    %359 = vmatpush1.msra.mxu0 0.0
    %360 = vmatprep.subr.mxu0 0.0
    %361 = vmatpush1.msra.mxu0 0.0
    %362 = vmatprep.mubr.f32.mxu0 0.0
    %363 = vmatmul.mubr.f32.gmra.mrb[0].mxu0 %v126
    %v364 = vpop.f32.mrb[0].mxu0
    %v365 = vadd.f32 %v102, %v364
    %v366 = vpop.f32.mrb[0].mxu0
    %v367 = vadd.f32 %v106, %v366
    %368 = vmatprep.mubr.f32.mxu0 0.0
    %369 = vmatmul.mubr.f32.gmra.mrb[0].mxu0 %v129
    %v370 = vpop.f32.mrb[0].mxu0
    %v371 = vadd.f32 %v102, %v370
    %v372 = vpop.f32.mrb[0].mxu0
    %v373 = vadd.f32 %v106, %v372
    %374 = vdwg.mxu0
    %375 = vst [vmem:[#allocation2] sm:$0xff] %v211
    %376 = vst [vmem:[#allocation2 + $0x8] sm:$0xff] %v213
    %377 = vst [vmem:[#allocation2 + $0x10] sm:$0xff] %v288
    %378 = vst [vmem:[#allocation2 + $0x18] sm:$0xff] %v290
    %379 = vst [vmem:[#allocation2 + $0x20] sm:$0xff] %v365
    %380 = vst [vmem:[#allocation2 + $0x28] sm:$0xff] %v367
    %381 = vst [vmem:[#allocation2 + $0x30] sm:$0xff] %v217
    %382 = vst [vmem:[#allocation2 + $0x38] sm:$0xff] %v219
    %383 = vst [vmem:[#allocation2 + $0x40] sm:$0xff] %v294
    %384 = vst [vmem:[#allocation2 + $0x48] sm:$0xff] %v296
    %385 = vst [vmem:[#allocation2 + $0x50] sm:$0xff] %v371
    %386 = vst [vmem:[#allocation2 + $0x58] sm:$0xff] %v373
    %v387 = vld [vmem:[%s11] sm:$0x1]
    %v389 = vlaneseq
    %v390 = vshrl.u32 %v389, 7
    %v391 = vsub.s32 0, %v390
    %v392 = vrot.slane %v387, %v391
    %v394 = vld [vmem:[%s8] sm:$0xff]
    %v395 = vld [vmem:[%s8 + $0x8] sm:$0xff]
    %v396 = vld [vmem:[%s10] sm:$0xff]
    %v397 = vld [vmem:[%s10 + $0x8] sm:$0xff]
    %v398 = vld [vmem:[%s10 + $0x10] sm:$0xf]
    %vm399 = vcmask 162816
    %v401 = vsel %vm399, %v394, 0
    %v404 = vsel %vm399, %v395, 0
    %v407 = vsel %vm131, %v398, 0
    %409 = vmatprep.subr.mxu0 0.0
    %410 = vmatpush1.msra.mxu0 %v396
    %411 = vmatprep.subr.mxu0 0.0
    %412 = vmatpush1.msra.mxu0 %v397
    %413 = vmatprep.subr.mxu0 0.0
    %414 = vmatpush1.msra.mxu0 %v407
    %415 = vmatprep.subr.mxu0 0.0
    %416 = vmatpush1.msra.mxu0 0.0
    %417 = vmatprep.subr.mxu0 0.0
    %418 = vmatpush1.msra.mxu0 0.0
    %419 = vmatprep.subr.mxu0 0.0
    %420 = vmatpush1.msra.mxu0 0.0
    %421 = vmatprep.subr.mxu0 0.0
    %422 = vmatpush1.msra.mxu0 0.0
    %423 = vmatprep.subr.mxu0 0.0
    %424 = vmatpush1.msra.mxu0 0.0
    %425 = vmatprep.subr.mxu0 0.0
    %426 = vmatpush1.msra.mxu0 0.0
    %427 = vmatprep.subr.mxu0 0.0
    %428 = vmatpush1.msra.mxu0 0.0
    %429 = vmatprep.subr.mxu0 0.0
    %430 = vmatpush1.msra.mxu0 0.0
    %431 = vmatprep.subr.mxu0 0.0
    %432 = vmatpush1.msra.mxu0 0.0
    %433 = vmatprep.subr.mxu0 0.0
    %434 = vmatpush1.msra.mxu0 0.0
    %435 = vmatprep.subr.mxu0 0.0
    %436 = vmatpush1.msra.mxu0 0.0
    %437 = vmatprep.subr.mxu0 0.0
    %438 = vmatpush1.msra.mxu0 0.0
    %439 = vmatprep.subr.mxu0 0.0
    %440 = vmatpush1.msra.mxu0 0.0
    %441 = vmatprep.subr.mxu0 0.0
    %442 = vmatpush1.msra.mxu0 0.0
    %443 = vmatprep.subr.mxu0 0.0
    %444 = vmatpush1.msra.mxu0 0.0
    %445 = vmatprep.subr.mxu0 0.0
    %446 = vmatpush1.msra.mxu0 0.0
    %447 = vmatprep.subr.mxu0 0.0
    %448 = vmatpush1.msra.mxu0 0.0
    %449 = vmatprep.subr.mxu0 0.0
    %450 = vmatpush1.msra.mxu0 0.0
    %451 = vmatprep.subr.mxu0 0.0
    %452 = vmatpush1.msra.mxu0 0.0
    %453 = vmatprep.subr.mxu0 0.0
    %454 = vmatpush1.msra.mxu0 0.0
    %455 = vmatprep.subr.mxu0 0.0
    %456 = vmatpush1.msra.mxu0 0.0
    %457 = vmatprep.subr.mxu0 0.0
    %458 = vmatpush1.msra.mxu0 0.0
    %459 = vmatprep.subr.mxu0 0.0
    %460 = vmatpush1.msra.mxu0 0.0
    %461 = vmatprep.subr.mxu0 0.0
    %462 = vmatpush1.msra.mxu0 0.0
    %463 = vmatprep.subr.mxu0 0.0
    %464 = vmatpush1.msra.mxu0 0.0
    %465 = vmatprep.subr.mxu0 0.0
    %466 = vmatpush1.msra.mxu0 0.0
    %467 = vmatprep.subr.mxu0 0.0
    %468 = vmatpush1.msra.mxu0 0.0
    %469 = vmatprep.subr.mxu0 0.0
    %470 = vmatpush1.msra.mxu0 0.0
    %471 = vmatprep.subr.mxu0 0.0
    %472 = vmatpush1.msra.mxu0 0.0
    %473 = vmatprep.mubr.f32.mxu0 0.0
    %474 = vmatmul.mubr.f32.gmra.mrb[0].mxu0 %v401
    %v475 = vpop.f32.mrb[0].mxu0
    %v476 = vadd.f32 %v392, %v475
    %v477 = vpop.f32.mrb[0].mxu0
    %478 = vmatprep.mubr.f32.mxu0 0.0
    %479 = vmatmul.mubr.f32.gmra.mrb[0].mxu0 %v404
    %v480 = vpop.f32.mrb[0].mxu0
    %v481 = vadd.f32 %v392, %v480
    %v482 = vpop.f32.mrb[0].mxu0
    %483 = vdwg.mxu0
    %v484 = vmul.f32 %v476, 1.442695
    %v485 = vpow.pop %v484
    %v486 = vmul.f32 %v481, 1.442695
    %v487 = vpow.pop %v486
    %v488 = vsub.f32 %v485, 1.0
    %v489 = vsub.f32 %v487, 1.0
    %v490 = vmax.f32 %v488, 0.0
    %v491 = vmax.f32 %v489, 0.0
    %492 = vst.msk [vmem:[%s17] sm:$0xff] %vm124, %v490
    %493 = vst.msk [vmem:[%s17 + $0x8] sm:$0xff] %vm124, %v491
    %v494 = vld [vmem:[%s12] sm:$0xff]
    %v495 = vld [vmem:[%s12 + $0x8] sm:$0xff]
    %v496 = vld [vmem:[%s13] sm:$0xff]
    %v497 = vld [vmem:[%s13 + $0x8] sm:$0xff]
    %v498 = vld [vmem:[%s9] sm:$0x3]
    %vm499 = vcmask 15360
    %v501 = vsel %vm499, %v496, 0
    %v504 = vsel %vm499, %v497, 0
    %vm506 = vcmask 1041408
    %v508 = vsel %vm506, %v498, 0
    %510 = vmatprep.subr.mxu0 0.0
    %511 = vmatpush1.msra.mxu0 %v508
    %512 = vmatprep.subr.mxu0 0.0
    %513 = vmatpush1.msra.mxu0 0.0
    %514 = vmatprep.subr.mxu0 0.0
    %515 = vmatpush1.msra.mxu0 0.0
    %516 = vmatprep.subr.mxu0 0.0
    %517 = vmatpush1.msra.mxu0 0.0
    %518 = vmatprep.subr.mxu0 0.0
    %519 = vmatpush1.msra.mxu0 0.0
    %520 = vmatprep.subr.mxu0 0.0
    %521 = vmatpush1.msra.mxu0 0.0
    %522 = vmatprep.subr.mxu0 0.0
    %523 = vmatpush1.msra.mxu0 0.0
    %524 = vmatprep.subr.mxu0 0.0
    %525 = vmatpush1.msra.mxu0 0.0
    %526 = vmatprep.subr.mxu0 0.0
    %527 = vmatpush1.msra.mxu0 0.0
    %528 = vmatprep.subr.mxu0 0.0
    %529 = vmatpush1.msra.mxu0 0.0
    %530 = vmatprep.subr.mxu0 0.0
    %531 = vmatpush1.msra.mxu0 0.0
    %532 = vmatprep.subr.mxu0 0.0
    %533 = vmatpush1.msra.mxu0 0.0
    %534 = vmatprep.subr.mxu0 0.0
    %535 = vmatpush1.msra.mxu0 0.0
    %536 = vmatprep.subr.mxu0 0.0
    %537 = vmatpush1.msra.mxu0 0.0
    %538 = vmatprep.subr.mxu0 0.0
    %539 = vmatpush1.msra.mxu0 0.0
    %540 = vmatprep.subr.mxu0 0.0
    %541 = vmatpush1.msra.mxu0 0.0
    %542 = vmatprep.subr.mxu0 0.0
    %543 = vmatpush1.msra.mxu0 0.0
    %544 = vmatprep.subr.mxu0 0.0
    %545 = vmatpush1.msra.mxu0 0.0
    %546 = vmatprep.subr.mxu0 0.0
    %547 = vmatpush1.msra.mxu0 0.0
    %548 = vmatprep.subr.mxu0 0.0
    %549 = vmatpush1.msra.mxu0 0.0
    %550 = vmatprep.subr.mxu0 0.0
    %551 = vmatpush1.msra.mxu0 0.0
    %552 = vmatprep.subr.mxu0 0.0
    %553 = vmatpush1.msra.mxu0 0.0
    %554 = vmatprep.subr.mxu0 0.0
    %555 = vmatpush1.msra.mxu0 0.0
    %556 = vmatprep.subr.mxu0 0.0
    %557 = vmatpush1.msra.mxu0 0.0
    %558 = vmatprep.subr.mxu0 0.0
    %559 = vmatpush1.msra.mxu0 0.0
    %560 = vmatprep.subr.mxu0 0.0
    %561 = vmatpush1.msra.mxu0 0.0
    %562 = vmatprep.subr.mxu0 0.0
    %563 = vmatpush1.msra.mxu0 0.0
    %564 = vmatprep.subr.mxu0 0.0
    %565 = vmatpush1.msra.mxu0 0.0
    %566 = vmatprep.subr.mxu0 0.0
    %567 = vmatpush1.msra.mxu0 0.0
    %568 = vmatprep.subr.mxu0 0.0
    %569 = vmatpush1.msra.mxu0 0.0
    %570 = vmatprep.subr.mxu0 0.0
    %571 = vmatpush1.msra.mxu0 0.0
    %572 = vmatprep.subr.mxu0 0.0
    %573 = vmatpush1.msra.mxu0 0.0
    %574 = vmatprep.mubr.f32.mxu0 0.0
    %575 = vmatmul.mubr.f32.gmra.mrb[0].mxu0 %v501
    %v576 = vpop.f32.mrb[0].mxu0
    %v577 = vadd.f32 0.0, %v576
    %v578 = vpop.f32.mrb[0].mxu0
    %579 = vmatprep.mubr.f32.mxu0 0.0
    %580 = vmatmul.mubr.f32.gmra.mrb[0].mxu0 %v504
    %v581 = vpop.f32.mrb[0].mxu0
    %v582 = vadd.f32 0.0, %v581
    %v583 = vpop.f32.mrb[0].mxu0
    %584 = vdwg.mxu0
    %vm585 = vcmask 130048
    %v587 = vsel %vm585, %v494, 0
    %v590 = vsel %vm585, %v495, 0
    %592 = vmatprep.subr.mxu0 0.0
    %593 = vmatpush1.msra.mxu0 %v490
    %594 = vmatprep.subr.mxu0 0.0
    %595 = vmatpush1.msra.mxu0 %v491
    %596 = vmatprep.subr.mxu0 0.0
    %597 = vmatpush1.msra.mxu0 0.0
    %598 = vmatprep.subr.mxu0 0.0
    %599 = vmatpush1.msra.mxu0 0.0
    %600 = vmatprep.subr.mxu0 0.0
    %601 = vmatpush1.msra.mxu0 0.0
    %602 = vmatprep.subr.mxu0 0.0
    %603 = vmatpush1.msra.mxu0 0.0
    %604 = vmatprep.subr.mxu0 0.0
    %605 = vmatpush1.msra.mxu0 0.0
    %606 = vmatprep.subr.mxu0 0.0
    %607 = vmatpush1.msra.mxu0 0.0
    %608 = vmatprep.subr.mxu0 0.0
    %609 = vmatpush1.msra.mxu0 0.0
    %610 = vmatprep.subr.mxu0 0.0
    %611 = vmatpush1.msra.mxu0 0.0
    %612 = vmatprep.subr.mxu0 0.0
    %613 = vmatpush1.msra.mxu0 0.0
    %614 = vmatprep.subr.mxu0 0.0
    %615 = vmatpush1.msra.mxu0 0.0
    %616 = vmatprep.subr.mxu0 0.0
    %617 = vmatpush1.msra.mxu0 0.0
    %618 = vmatprep.subr.mxu0 0.0
    %619 = vmatpush1.msra.mxu0 0.0
    %620 = vmatprep.subr.mxu0 0.0
    %621 = vmatpush1.msra.mxu0 0.0
    %622 = vmatprep.subr.mxu0 0.0
    %623 = vmatpush1.msra.mxu0 0.0
    %624 = vmatprep.subr.mxu0 0.0
    %625 = vmatpush1.msra.mxu0 0.0
    %626 = vmatprep.subr.mxu0 0.0
    %627 = vmatpush1.msra.mxu0 0.0
    %628 = vmatprep.subr.mxu0 0.0
    %629 = vmatpush1.msra.mxu0 0.0
    %630 = vmatprep.subr.mxu0 0.0
    %631 = vmatpush1.msra.mxu0 0.0
    %632 = vmatprep.subr.mxu0 0.0
    %633 = vmatpush1.msra.mxu0 0.0
    %634 = vmatprep.subr.mxu0 0.0
    %635 = vmatpush1.msra.mxu0 0.0
    %636 = vmatprep.subr.mxu0 0.0
    %637 = vmatpush1.msra.mxu0 0.0
    %638 = vmatprep.subr.mxu0 0.0
    %639 = vmatpush1.msra.mxu0 0.0
    %640 = vmatprep.subr.mxu0 0.0
    %641 = vmatpush1.msra.mxu0 0.0
    %642 = vmatprep.subr.mxu0 0.0
    %643 = vmatpush1.msra.mxu0 0.0
    %644 = vmatprep.subr.mxu0 0.0
    %645 = vmatpush1.msra.mxu0 0.0
    %646 = vmatprep.subr.mxu0 0.0
    %647 = vmatpush1.msra.mxu0 0.0
    %648 = vmatprep.subr.mxu0 0.0
    %649 = vmatpush1.msra.mxu0 0.0
    %650 = vmatprep.subr.mxu0 0.0
    %651 = vmatpush1.msra.mxu0 0.0
    %652 = vmatprep.subr.mxu0 0.0
    %653 = vmatpush1.msra.mxu0 0.0
    %654 = vmatprep.subr.mxu0 0.0
    %655 = vmatpush1.msra.mxu0 0.0
    %656 = vmatprep.mubr.f32.mxu0 0.0
    %657 = vmatmul.mubr.f32.gmra.mrb[0].mxu0 %v587
    %v658 = vpop.f32.mrb[0].mxu0
    %v659 = vadd.f32 %v577, %v658
    %v660 = vpop.f32.mrb[0].mxu0
    %661 = vmatprep.mubr.f32.mxu0 0.0
    %662 = vmatmul.mubr.f32.gmra.mrb[0].mxu0 %v590
    %v663 = vpop.f32.mrb[0].mxu0
    %v664 = vadd.f32 %v582, %v663
    %v665 = vpop.f32.mrb[0].mxu0
    %666 = vdwg.mxu0
    %v667 = vld [vmem:[%s14] sm:$0xff]
    %v668 = vld [vmem:[%s14 + $0x8] sm:$0xff]
    %670 = vset.pattern.permute.xlu0 0
    %671 = vperm.xlu0 %670, %v667
    %v672 = vpop.permute.xlu0 %671
    %675 = vset.pattern.permute.xlu0 0
    %676 = vperm.xlu0 %675, %v668
    %v677 = vpop.permute.xlu0 %676
    %v679 = vadd.f32 %v659, %v672
    %v680 = vadd.f32 %v664, %v677
    %681 = vst.msk [vmem:[%s16] sm:$0xff] %vm124, %v679
    %682 = vst.msk [vmem:[%s16 + $0x8] sm:$0xff] %vm124, %v680
    %v683 = vld [vmem:[%s6] sm:$0x1]
    %v685 = vlaneseq
    %v686 = vshrl.u32 %v685, 7
    %v687 = vsub.s32 0, %v686
    %v688 = vrot.slane %v683, %v687
    %v690 = vld [vmem:[%s7] sm:$0x1]
    %v692 = vlaneseq
    %v693 = vshrl.u32 %v692, 7
    %v694 = vsub.s32 0, %v693
    %v695 = vrot.slane %v690, %v694
    %v697 = vld [vmem:[%s1] sm:$0x3]
    %s698 = scalar_lea.vmem %s1, 2
    %v699 = vld [vmem:[%s698] sm:$0x3]
    %v700 = vld [vmem:[#allocation2] sm:$0x3]
    %v701 = vld [vmem:[#allocation2 + $0x8] sm:$0x3]
    %v702 = vld [vmem:[#allocation2 + $0x10] sm:$0x3]
    %v703 = vld [vmem:[#allocation2 + $0x48] sm:$0xc0]
    %v704 = vld [vmem:[#allocation2 + $0x50] sm:$0xc0]
    %v705 = vld [vmem:[#allocation2 + $0x58] sm:$0xc0]
    %v706 = vld [vmem:[#allocation3] sm:$0xff]
    %v707 = vld [vmem:[#allocation3 + $0x8] sm:$0xff]
    %v708 = vld [vmem:[#allocation3 + $0x10] sm:$0xff]
    %v709 = vld [vmem:[#allocation3 + $0x18] sm:$0xff]
    %v710 = vld [vmem:[#allocation3 + $0x20] sm:$0xff]
    %v711 = vld [vmem:[#allocation3 + $0x28] sm:$0xff]
    %v712 = vld [vmem:[#allocation3 + $0x30] sm:$0xff]
    %v713 = vld [vmem:[#allocation3 + $0x38] sm:$0xff]
    %v714 = vld [vmem:[#allocation3 + $0x40] sm:$0xff]
    %v715 = vld [vmem:[#allocation3 + $0x48] sm:$0xff]
    %v716 = vld [vmem:[#allocation3 + $0x50] sm:$0xff]
    %v717 = vld [vmem:[#allocation3 + $0x58] sm:$0xff]
    %v718 = vld [vmem:[#allocation3 + $0x60] sm:$0xff]
    %v719 = vld [vmem:[#allocation3 + $0x68] sm:$0xff]
    %v720 = vld [vmem:[#allocation3 + $0x70] sm:$0xff]
    %v721 = vld [vmem:[#allocation3 + $0x78] sm:$0xff]
    %v722 = vld [vmem:[#allocation3 + $0x80] sm:$0xff]
    %v723 = vld [vmem:[#allocation3 + $0x88] sm:$0xff]
    %v724 = vld [vmem:[#allocation3 + $0x90] sm:$0xff]
    %v725 = vld [vmem:[#allocation3 + $0x98] sm:$0xff]
    %v726 = vld [vmem:[#allocation3 + $0xa0] sm:$0xff]
    %v727 = vld [vmem:[#allocation3 + $0xa8] sm:$0xff]
    %v728 = vld [vmem:[#allocation3 + $0xb0] sm:$0xff]
    %v729 = vld [vmem:[#allocation3 + $0xb8] sm:$0xff]
    %v730 = vld [vmem:[#allocation3 + $0xc0] sm:$0xff]
    %v731 = vld [vmem:[#allocation3 + $0xc8] sm:$0xff]
    %v732 = vld [vmem:[#allocation3 + $0xd0] sm:$0xff]
    %v733 = vld [vmem:[#allocation3 + $0xd8] sm:$0xff]
    %v734 = vld [vmem:[#allocation3 + $0xe0] sm:$0xff]
    %v735 = vld [vmem:[#allocation3 + $0xe8] sm:$0xff]
    %v736 = vld [vmem:[#allocation3 + $0xf0] sm:$0xff]
    %v737 = vld [vmem:[#allocation3 + $0xf8] sm:$0xff]
    %v738 = vld [vmem:[#allocation3 + $0x100] sm:$0xff]
    %v739 = vld [vmem:[#allocation3 + $0x108] sm:$0xff]
    %v740 = vld [vmem:[#allocation3 + $0x110] sm:$0xff]
    %v741 = vld [vmem:[#allocation3 + $0x118] sm:$0xff]
    %v742 = vld [vmem:[#allocation3 + $0x120] sm:$0xff]
    %v743 = vld [vmem:[#allocation3 + $0x128] sm:$0xff]
    %v744 = vld [vmem:[#allocation3 + $0x130] sm:$0xff]
    %v745 = vld [vmem:[#allocation3 + $0x138] sm:$0xff]
    %v746 = vld [vmem:[#allocation3 + $0x140] sm:$0xff]
    %v747 = vld [vmem:[#allocation3 + $0x148] sm:$0xff]
    %v748 = vld [vmem:[#allocation3 + $0x150] sm:$0xff]
    %v749 = vld [vmem:[#allocation3 + $0x158] sm:$0xff]
    %v750 = vld [vmem:[#allocation3 + $0x160] sm:$0xff]
    %v751 = vld [vmem:[#allocation3 + $0x168] sm:$0xff]
    %v752 = vld [vmem:[#allocation3 + $0x170] sm:$0xff]
    %v753 = vld [vmem:[#allocation3 + $0x178] sm:$0xff]
    %754 = vmatprep.subr.mxu0 %v707
    %755 = vmatpush1.msra.mxu0 %v706
    %756 = vmatprep.subr.mxu0 %v710
    %757 = vmatpush1.msra.mxu0 %v709
    %758 = vmatprep.subr.mxu0 %v713
    %759 = vmatpush1.msra.mxu0 %v712
    %760 = vmatprep.subr.mxu0 %v716
    %761 = vmatpush1.msra.mxu0 %v715
    %762 = vmatprep.subr.mxu0 %v719
    %763 = vmatpush1.msra.mxu0 %v718
    %764 = vmatprep.subr.mxu0 %v722
    %765 = vmatpush1.msra.mxu0 %v721
    %766 = vmatprep.subr.mxu0 %v725
    %767 = vmatpush1.msra.mxu0 %v724
    %768 = vmatprep.subr.mxu0 %v728
    %769 = vmatpush1.msra.mxu0 %v727
    %770 = vmatprep.subr.mxu0 %v731
    %771 = vmatpush1.msra.mxu0 %v730
    %772 = vmatprep.subr.mxu0 %v734
    %773 = vmatpush1.msra.mxu0 %v733
    %774 = vmatprep.subr.mxu0 %v737
    %775 = vmatpush1.msra.mxu0 %v736
    %776 = vmatprep.subr.mxu0 %v740
    %777 = vmatpush1.msra.mxu0 %v739
    %778 = vmatprep.subr.mxu0 %v743
    %779 = vmatpush1.msra.mxu0 %v742
    %780 = vmatprep.subr.mxu0 %v746
    %781 = vmatpush1.msra.mxu0 %v745
    %782 = vmatprep.subr.mxu0 %v749
    %783 = vmatpush1.msra.mxu0 %v748
    %784 = vmatprep.subr.mxu0 %v752
    %785 = vmatpush1.msra.mxu0 %v751
    %786 = vmatprep.subr.mxu0 0.0
    %787 = vmatpush1.msra.mxu0 0.0
    %788 = vmatprep.subr.mxu0 0.0
    %789 = vmatpush1.msra.mxu0 0.0
    %790 = vmatprep.subr.mxu0 0.0
    %791 = vmatpush1.msra.mxu0 0.0
    %792 = vmatprep.subr.mxu0 0.0
    %793 = vmatpush1.msra.mxu0 0.0
    %794 = vmatprep.subr.mxu0 0.0
    %795 = vmatpush1.msra.mxu0 0.0
    %796 = vmatprep.subr.mxu0 0.0
    %797 = vmatpush1.msra.mxu0 0.0
    %798 = vmatprep.subr.mxu0 0.0
    %799 = vmatpush1.msra.mxu0 0.0
    %800 = vmatprep.subr.mxu0 0.0
    %801 = vmatpush1.msra.mxu0 0.0
    %802 = vmatprep.subr.mxu0 0.0
    %803 = vmatpush1.msra.mxu0 0.0
    %804 = vmatprep.subr.mxu0 0.0
    %805 = vmatpush1.msra.mxu0 0.0
    %806 = vmatprep.subr.mxu0 0.0
    %807 = vmatpush1.msra.mxu0 0.0
    %808 = vmatprep.subr.mxu0 0.0
    %809 = vmatpush1.msra.mxu0 0.0
    %810 = vmatprep.subr.mxu0 0.0
    %811 = vmatpush1.msra.mxu0 0.0
    %812 = vmatprep.subr.mxu0 0.0
    %813 = vmatpush1.msra.mxu0 0.0
    %814 = vmatprep.subr.mxu0 0.0
    %815 = vmatpush1.msra.mxu0 0.0
    %816 = vmatprep.subr.mxu0 0.0
    %817 = vmatpush1.msra.mxu0 0.0
    %818 = vmatprep.mubr.f32.mxu0 0.0
    %819 = vmatmul.mubr.f32.gmra.mrb[0].mxu0 %v697
    %v820 = vpop.f32.mrb[0].mxu0
    %v821 = vadd.f32 0.0, %v820
    %v822 = vpop.f32.mrb[0].mxu0
    %v823 = vadd.f32 0.0, %v822
    %824 = vdwg.mxu0
    %825 = vmatprep.subr.mxu0 0.0
    %826 = vmatpush1.msra.mxu0 %v708
    %827 = vmatprep.subr.mxu0 0.0
    %828 = vmatpush1.msra.mxu0 %v711
    %829 = vmatprep.subr.mxu0 0.0
    %830 = vmatpush1.msra.mxu0 %v714
    %831 = vmatprep.subr.mxu0 0.0
    %832 = vmatpush1.msra.mxu0 %v717
    %833 = vmatprep.subr.mxu0 0.0
    %834 = vmatpush1.msra.mxu0 %v720
    %835 = vmatprep.subr.mxu0 0.0
    %836 = vmatpush1.msra.mxu0 %v723
    %837 = vmatprep.subr.mxu0 0.0
    %838 = vmatpush1.msra.mxu0 %v726
    %839 = vmatprep.subr.mxu0 0.0
    %840 = vmatpush1.msra.mxu0 %v729
    %841 = vmatprep.subr.mxu0 0.0
    %842 = vmatpush1.msra.mxu0 %v732
    %843 = vmatprep.subr.mxu0 0.0
    %844 = vmatpush1.msra.mxu0 %v735
    %845 = vmatprep.subr.mxu0 0.0
    %846 = vmatpush1.msra.mxu0 %v738
    %847 = vmatprep.subr.mxu0 0.0
    %848 = vmatpush1.msra.mxu0 %v741
    %849 = vmatprep.subr.mxu0 0.0
    %850 = vmatpush1.msra.mxu0 %v744
    %851 = vmatprep.subr.mxu0 0.0
    %852 = vmatpush1.msra.mxu0 %v747
    %853 = vmatprep.subr.mxu0 0.0
    %854 = vmatpush1.msra.mxu0 %v750
    %855 = vmatprep.subr.mxu0 0.0
    %856 = vmatpush1.msra.mxu0 %v753
    %857 = vmatprep.subr.mxu0 0.0
    %858 = vmatpush1.msra.mxu0 0.0
    %859 = vmatprep.subr.mxu0 0.0
    %860 = vmatpush1.msra.mxu0 0.0
    %861 = vmatprep.subr.mxu0 0.0
    %862 = vmatpush1.msra.mxu0 0.0
    %863 = vmatprep.subr.mxu0 0.0
    %864 = vmatpush1.msra.mxu0 0.0
    %865 = vmatprep.subr.mxu0 0.0
    %866 = vmatpush1.msra.mxu0 0.0
    %867 = vmatprep.subr.mxu0 0.0
    %868 = vmatpush1.msra.mxu0 0.0
    %869 = vmatprep.subr.mxu0 0.0
    %870 = vmatpush1.msra.mxu0 0.0
    %871 = vmatprep.subr.mxu0 0.0
    %872 = vmatpush1.msra.mxu0 0.0
    %873 = vmatprep.subr.mxu0 0.0
    %874 = vmatpush1.msra.mxu0 0.0
    %875 = vmatprep.subr.mxu0 0.0
    %876 = vmatpush1.msra.mxu0 0.0
    %877 = vmatprep.subr.mxu0 0.0
    %878 = vmatpush1.msra.mxu0 0.0
    %879 = vmatprep.subr.mxu0 0.0
    %880 = vmatpush1.msra.mxu0 0.0
    %881 = vmatprep.subr.mxu0 0.0
    %882 = vmatpush1.msra.mxu0 0.0
    %883 = vmatprep.subr.mxu0 0.0
    %884 = vmatpush1.msra.mxu0 0.0
    %885 = vmatprep.subr.mxu0 0.0
    %886 = vmatpush1.msra.mxu0 0.0
    %887 = vmatprep.subr.mxu0 0.0
    %888 = vmatpush1.msra.mxu0 0.0
    %889 = vmatprep.mubr.f32.mxu0 0.0
    %890 = vmatmul.mubr.f32.gmra.mrb[0].mxu0 %v697
    %v891 = vpop.f32.mrb[0].mxu0
    %v892 = vadd.f32 0.0, %v891
    %v893 = vpop.f32.mrb[0].mxu0
    %894 = vdwg.mxu0
    %v895 = vadd.f32 %v700, %v821
    %v896 = vxor.u32 %v895, 2147483648
    %v897 = vmul.f32 %v896, 1.442695
    %v898 = vpow.pop %v897
    %v899 = vadd.f32 %v898, 1.0
    %v900 = vrcp.pop %v899
    %v901 = vmul.f32 1.0, %v900
    %v902 = vadd.f32 %v701, %v823
    %v903 = vxor.u32 %v902, 2147483648
    %v904 = vmul.f32 %v903, 1.442695
    %v905 = vpow.pop %v904
    %v906 = vadd.f32 %v905, 1.0
    %v907 = vrcp.pop %v906
    %v908 = vmul.f32 1.0, %v907
    %v909 = vadd.f32 %v892, %v688
    %v910 = vmul.f32 %v901, %v909
    %v911 = vadd.f32 %v702, %v910
    %v912 = vtanh.pop %v911
    %v913 = vsub.f32 1.0, %v908
    %v914 = vmul.f32 %v913, %v912
    %v915 = vmul.f32 %v908, %v697
    %v916 = vadd.f32 %v914, %v915
    %v917 = vld [vmem:[#allocation5] sm:$0xff]
    %v918 = vld [vmem:[#allocation5 + $0x8] sm:$0xff]
    %v919 = vld [vmem:[#allocation5 + $0x10] sm:$0xff]
    %v920 = vld [vmem:[#allocation5 + $0x18] sm:$0xff]
    %v921 = vld [vmem:[#allocation5 + $0x20] sm:$0xff]
    %v922 = vld [vmem:[#allocation5 + $0x28] sm:$0xff]
    %v923 = vld [vmem:[#allocation5 + $0x30] sm:$0xff]
    %v924 = vld [vmem:[#allocation5 + $0x38] sm:$0xff]
    %v925 = vld [vmem:[#allocation5 + $0x40] sm:$0xff]
    %v926 = vld [vmem:[#allocation5 + $0x48] sm:$0xff]
    %v927 = vld [vmem:[#allocation5 + $0x50] sm:$0xff]
    %v928 = vld [vmem:[#allocation5 + $0x58] sm:$0xff]
    %v929 = vld [vmem:[#allocation5 + $0x60] sm:$0xff]
    %v930 = vld [vmem:[#allocation5 + $0x68] sm:$0xff]
    %v931 = vld [vmem:[#allocation5 + $0x70] sm:$0xff]
    %v932 = vld [vmem:[#allocation5 + $0x78] sm:$0xff]
    %v933 = vld [vmem:[#allocation5 + $0x80] sm:$0xff]
    %v934 = vld [vmem:[#allocation5 + $0x88] sm:$0xff]
    %v935 = vld [vmem:[#allocation5 + $0x90] sm:$0xff]
    %v936 = vld [vmem:[#allocation5 + $0x98] sm:$0xff]
    %v937 = vld [vmem:[#allocation5 + $0xa0] sm:$0xff]
    %v938 = vld [vmem:[#allocation5 + $0xa8] sm:$0xff]
    %v939 = vld [vmem:[#allocation5 + $0xb0] sm:$0xff]
    %v940 = vld [vmem:[#allocation5 + $0xb8] sm:$0xff]
    %v941 = vld [vmem:[#allocation5 + $0xc0] sm:$0xff]
    %v942 = vld [vmem:[#allocation5 + $0xc8] sm:$0xff]
    %v943 = vld [vmem:[#allocation5 + $0xd0] sm:$0xff]
    %v944 = vld [vmem:[#allocation5 + $0xd8] sm:$0xff]
    %v945 = vld [vmem:[#allocation5 + $0xe0] sm:$0xff]
    %v946 = vld [vmem:[#allocation5 + $0xe8] sm:$0xff]
    %v947 = vld [vmem:[#allocation5 + $0xf0] sm:$0xff]
    %v948 = vld [vmem:[#allocation5 + $0xf8] sm:$0xff]
    %v949 = vld [vmem:[#allocation5 + $0x100] sm:$0xff]
    %v950 = vld [vmem:[#allocation5 + $0x108] sm:$0xff]
    %v951 = vld [vmem:[#allocation5 + $0x110] sm:$0xff]
    %v952 = vld [vmem:[#allocation5 + $0x118] sm:$0xff]
    %v953 = vld [vmem:[#allocation5 + $0x120] sm:$0xff]
    %v954 = vld [vmem:[#allocation5 + $0x128] sm:$0xff]
    %v955 = vld [vmem:[#allocation5 + $0x130] sm:$0xff]
    %v956 = vld [vmem:[#allocation5 + $0x138] sm:$0xff]
    %v957 = vld [vmem:[#allocation5 + $0x140] sm:$0xff]
    %v958 = vld [vmem:[#allocation5 + $0x148] sm:$0xff]
    %v959 = vld [vmem:[#allocation5 + $0x150] sm:$0xff]
    %v960 = vld [vmem:[#allocation5 + $0x158] sm:$0xff]
    %v961 = vld [vmem:[#allocation5 + $0x160] sm:$0xff]
    %v962 = vld [vmem:[#allocation5 + $0x168] sm:$0xff]
    %v963 = vld [vmem:[#allocation5 + $0x170] sm:$0xff]
    %v964 = vld [vmem:[#allocation5 + $0x178] sm:$0xff]
    %965 = vmatprep.subr.mxu0 %v918
    %966 = vmatpush1.msra.mxu0 %v917
    %967 = vmatprep.subr.mxu0 %v921
    %968 = vmatpush1.msra.mxu0 %v920
    %969 = vmatprep.subr.mxu0 %v924
    %970 = vmatpush1.msra.mxu0 %v923
    %971 = vmatprep.subr.mxu0 %v927
    %972 = vmatpush1.msra.mxu0 %v926
    %973 = vmatprep.subr.mxu0 %v930
    %974 = vmatpush1.msra.mxu0 %v929
    %975 = vmatprep.subr.mxu0 %v933
    %976 = vmatpush1.msra.mxu0 %v932
    %977 = vmatprep.subr.mxu0 %v936
    %978 = vmatpush1.msra.mxu0 %v935
    %979 = vmatprep.subr.mxu0 %v939
    %980 = vmatpush1.msra.mxu0 %v938
    %981 = vmatprep.subr.mxu0 %v942
    %982 = vmatpush1.msra.mxu0 %v941
    %983 = vmatprep.subr.mxu0 %v945
    %984 = vmatpush1.msra.mxu0 %v944
    %985 = vmatprep.subr.mxu0 %v948
    %986 = vmatpush1.msra.mxu0 %v947
    %987 = vmatprep.subr.mxu0 %v951
    %988 = vmatpush1.msra.mxu0 %v950
    %989 = vmatprep.subr.mxu0 %v954
    %990 = vmatpush1.msra.mxu0 %v953
    %991 = vmatprep.subr.mxu0 %v957
    %992 = vmatpush1.msra.mxu0 %v956
    %993 = vmatprep.subr.mxu0 %v960
    %994 = vmatpush1.msra.mxu0 %v959
    %995 = vmatprep.subr.mxu0 %v963
    %996 = vmatpush1.msra.mxu0 %v962
    %997 = vmatprep.subr.mxu0 0.0
    %998 = vmatpush1.msra.mxu0 0.0
    %999 = vmatprep.subr.mxu0 0.0
    %1000 = vmatpush1.msra.mxu0 0.0
    %1001 = vmatprep.subr.mxu0 0.0
    %1002 = vmatpush1.msra.mxu0 0.0
    %1003 = vmatprep.subr.mxu0 0.0
    %1004 = vmatpush1.msra.mxu0 0.0
    %1005 = vmatprep.subr.mxu0 0.0
    %1006 = vmatpush1.msra.mxu0 0.0
    %1007 = vmatprep.subr.mxu0 0.0
    %1008 = vmatpush1.msra.mxu0 0.0
    %1009 = vmatprep.subr.mxu0 0.0
    %1010 = vmatpush1.msra.mxu0 0.0
    %1011 = vmatprep.subr.mxu0 0.0
    %1012 = vmatpush1.msra.mxu0 0.0
    %1013 = vmatprep.subr.mxu0 0.0
    %1014 = vmatpush1.msra.mxu0 0.0
    %1015 = vmatprep.subr.mxu0 0.0
    %1016 = vmatpush1.msra.mxu0 0.0
    %1017 = vmatprep.subr.mxu0 0.0
    %1018 = vmatpush1.msra.mxu0 0.0
    %1019 = vmatprep.subr.mxu0 0.0
    %1020 = vmatpush1.msra.mxu0 0.0
    %1021 = vmatprep.subr.mxu0 0.0
    %1022 = vmatpush1.msra.mxu0 0.0
    %1023 = vmatprep.subr.mxu0 0.0
    %1024 = vmatpush1.msra.mxu0 0.0
    %1025 = vmatprep.subr.mxu0 0.0
    %1026 = vmatpush1.msra.mxu0 0.0
    %1027 = vmatprep.subr.mxu0 0.0
    %1028 = vmatpush1.msra.mxu0 0.0
    %1029 = vmatprep.mubr.f32.mxu0 0.0
    %1030 = vmatmul.mubr.f32.gmra.mrb[0].mxu0 %v699
    %v1031 = vpop.f32.mrb[0].mxu0
    %v1032 = vadd.f32 0.0, %v1031
    %v1033 = vpop.f32.mrb[0].mxu0
    %v1034 = vadd.f32 0.0, %v1033
    %1035 = vdwg.mxu0
    %1036 = vmatprep.subr.mxu0 0.0
    %1037 = vmatpush1.msra.mxu0 %v919
    %1038 = vmatprep.subr.mxu0 0.0
    %1039 = vmatpush1.msra.mxu0 %v922
    %1040 = vmatprep.subr.mxu0 0.0
    %1041 = vmatpush1.msra.mxu0 %v925
    %1042 = vmatprep.subr.mxu0 0.0
    %1043 = vmatpush1.msra.mxu0 %v928
    %1044 = vmatprep.subr.mxu0 0.0
    %1045 = vmatpush1.msra.mxu0 %v931
    %1046 = vmatprep.subr.mxu0 0.0
    %1047 = vmatpush1.msra.mxu0 %v934
    %1048 = vmatprep.subr.mxu0 0.0
    %1049 = vmatpush1.msra.mxu0 %v937
    %1050 = vmatprep.subr.mxu0 0.0
    %1051 = vmatpush1.msra.mxu0 %v940
    %1052 = vmatprep.subr.mxu0 0.0
    %1053 = vmatpush1.msra.mxu0 %v943
    %1054 = vmatprep.subr.mxu0 0.0
    %1055 = vmatpush1.msra.mxu0 %v946
    %1056 = vmatprep.subr.mxu0 0.0
    %1057 = vmatpush1.msra.mxu0 %v949
    %1058 = vmatprep.subr.mxu0 0.0
    %1059 = vmatpush1.msra.mxu0 %v952
    %1060 = vmatprep.subr.mxu0 0.0
    %1061 = vmatpush1.msra.mxu0 %v955
    %1062 = vmatprep.subr.mxu0 0.0
    %1063 = vmatpush1.msra.mxu0 %v958
    %1064 = vmatprep.subr.mxu0 0.0
    %1065 = vmatpush1.msra.mxu0 %v961
    %1066 = vmatprep.subr.mxu0 0.0
    %1067 = vmatpush1.msra.mxu0 %v964
    %1068 = vmatprep.subr.mxu0 0.0
    %1069 = vmatpush1.msra.mxu0 0.0
    %1070 = vmatprep.subr.mxu0 0.0
    %1071 = vmatpush1.msra.mxu0 0.0
    %1072 = vmatprep.subr.mxu0 0.0
    %1073 = vmatpush1.msra.mxu0 0.0
    %1074 = vmatprep.subr.mxu0 0.0
    %1075 = vmatpush1.msra.mxu0 0.0
    %1076 = vmatprep.subr.mxu0 0.0
    %1077 = vmatpush1.msra.mxu0 0.0
    %1078 = vmatprep.subr.mxu0 0.0
    %1079 = vmatpush1.msra.mxu0 0.0
    %1080 = vmatprep.subr.mxu0 0.0
    %1081 = vmatpush1.msra.mxu0 0.0
    %1082 = vmatprep.subr.mxu0 0.0
    %1083 = vmatpush1.msra.mxu0 0.0
    %1084 = vmatprep.subr.mxu0 0.0
    %1085 = vmatpush1.msra.mxu0 0.0
    %1086 = vmatprep.subr.mxu0 0.0
    %1087 = vmatpush1.msra.mxu0 0.0
    %1088 = vmatprep.subr.mxu0 0.0
    %1089 = vmatpush1.msra.mxu0 0.0
    %1090 = vmatprep.subr.mxu0 0.0
    %1091 = vmatpush1.msra.mxu0 0.0
    %1092 = vmatprep.subr.mxu0 0.0
    %1093 = vmatpush1.msra.mxu0 0.0
    %1094 = vmatprep.subr.mxu0 0.0
    %1095 = vmatpush1.msra.mxu0 0.0
    %1096 = vmatprep.subr.mxu0 0.0
    %1097 = vmatpush1.msra.mxu0 0.0
    %1098 = vmatprep.subr.mxu0 0.0
    %1099 = vmatpush1.msra.mxu0 0.0
    %1100 = vmatprep.mubr.f32.mxu0 0.0
    %1101 = vmatmul.mubr.f32.gmra.mrb[0].mxu0 %v699
    %v1102 = vpop.f32.mrb[0].mxu0
    %v1103 = vadd.f32 0.0, %v1102
    %v1104 = vpop.f32.mrb[0].mxu0
    %1105 = vdwg.mxu0
    %v1107 = vrot.slane %v1032, 2
    %v1109 = vadd.f32 %v703, %v1107
    %v1110 = vxor.u32 %v1109, 2147483648
    %v1111 = vmul.f32 %v1110, 1.442695
    %v1112 = vpow.pop %v1111
    %v1113 = vadd.f32 %v1112, 1.0
    %v1114 = vrcp.pop %v1113
    %v1115 = vmul.f32 1.0, %v1114
    %v1117 = vrot.slane %v1034, 2
    %v1119 = vadd.f32 %v704, %v1117
    %v1120 = vxor.u32 %v1119, 2147483648
    %v1121 = vmul.f32 %v1120, 1.442695
    %v1122 = vpow.pop %v1121
    %v1123 = vadd.f32 %v1122, 1.0
    %v1124 = vrcp.pop %v1123
    %v1125 = vmul.f32 1.0, %v1124
    %v1126 = vadd.f32 %v1103, %v695
    %v1128 = vrot.slane %v1126, 2
    %v1130 = vmul.f32 %v1115, %v1128
    %v1131 = vadd.f32 %v705, %v1130
    %v1132 = vtanh.pop %v1131
    %v1133 = vsub.f32 1.0, %v1125
    %v1134 = vmul.f32 %v1133, %v1132
    %v1136 = vrot.slane %v699, 2
    %v1138 = vmul.f32 %v1125, %v1136
    %v1139 = vadd.f32 %v1134, %v1138
    %v1140 = vmax.f32 %v916, -5.0
    %v1141 = vmin.f32 %v1140, 5.0
    %1142 = vst [vmem:[%s15] sm:$0x3] %v1141
    %v1143 = vmax.f32 %v1139, -5.0
    %v1144 = vmin.f32 %v1143, 5.0
    %1145 = vst [vmem:[%s15 + $0x18] sm:$0xc0] %v1144
    %v1146 = vld [vmem:[#allocation2] sm:$0xc]
    %v1147 = vld [vmem:[#allocation2 + $0x8] sm:$0xc]
    %v1148 = vld [vmem:[#allocation2 + $0x10] sm:$0xc]
    %v1149 = vld [vmem:[#allocation2 + $0x48] sm:$0x30]
    %v1150 = vld [vmem:[#allocation2 + $0x50] sm:$0x30]
    %v1151 = vld [vmem:[#allocation2 + $0x58] sm:$0x30]
    %v1152 = vld [vmem:[#allocation3] sm:$0xff]
    %v1153 = vld [vmem:[#allocation3 + $0x8] sm:$0xff]
    %v1154 = vld [vmem:[#allocation3 + $0x10] sm:$0xff]
    %v1155 = vld [vmem:[#allocation3 + $0x18] sm:$0xff]
    %v1156 = vld [vmem:[#allocation3 + $0x20] sm:$0xff]
    %v1157 = vld [vmem:[#allocation3 + $0x28] sm:$0xff]
    %v1158 = vld [vmem:[#allocation3 + $0x30] sm:$0xff]
    %v1159 = vld [vmem:[#allocation3 + $0x38] sm:$0xff]
    %v1160 = vld [vmem:[#allocation3 + $0x40] sm:$0xff]
    %v1161 = vld [vmem:[#allocation3 + $0x48] sm:$0xff]
    %v1162 = vld [vmem:[#allocation3 + $0x50] sm:$0xff]
    %v1163 = vld [vmem:[#allocation3 + $0x58] sm:$0xff]
    %v1164 = vld [vmem:[#allocation3 + $0x60] sm:$0xff]
    %v1165 = vld [vmem:[#allocation3 + $0x68] sm:$0xff]
    %v1166 = vld [vmem:[#allocation3 + $0x70] sm:$0xff]
    %v1167 = vld [vmem:[#allocation3 + $0x78] sm:$0xff]
    %v1168 = vld [vmem:[#allocation3 + $0x80] sm:$0xff]
    %v1169 = vld [vmem:[#allocation3 + $0x88] sm:$0xff]
    %v1170 = vld [vmem:[#allocation3 + $0x90] sm:$0xff]
    %v1171 = vld [vmem:[#allocation3 + $0x98] sm:$0xff]
    %v1172 = vld [vmem:[#allocation3 + $0xa0] sm:$0xff]
    %v1173 = vld [vmem:[#allocation3 + $0xa8] sm:$0xff]
    %v1174 = vld [vmem:[#allocation3 + $0xb0] sm:$0xff]
    %v1175 = vld [vmem:[#allocation3 + $0xb8] sm:$0xff]
    %v1176 = vld [vmem:[#allocation3 + $0xc0] sm:$0xff]
    %v1177 = vld [vmem:[#allocation3 + $0xc8] sm:$0xff]
    %v1178 = vld [vmem:[#allocation3 + $0xd0] sm:$0xff]
    %v1179 = vld [vmem:[#allocation3 + $0xd8] sm:$0xff]
    %v1180 = vld [vmem:[#allocation3 + $0xe0] sm:$0xff]
    %v1181 = vld [vmem:[#allocation3 + $0xe8] sm:$0xff]
    %v1182 = vld [vmem:[#allocation3 + $0xf0] sm:$0xff]
    %v1183 = vld [vmem:[#allocation3 + $0xf8] sm:$0xff]
    %v1184 = vld [vmem:[#allocation3 + $0x100] sm:$0xff]
    %v1185 = vld [vmem:[#allocation3 + $0x108] sm:$0xff]
    %v1186 = vld [vmem:[#allocation3 + $0x110] sm:$0xff]
    %v1187 = vld [vmem:[#allocation3 + $0x118] sm:$0xff]
    %v1188 = vld [vmem:[#allocation3 + $0x120] sm:$0xff]
    %v1189 = vld [vmem:[#allocation3 + $0x128] sm:$0xff]
    %v1190 = vld [vmem:[#allocation3 + $0x130] sm:$0xff]
    %v1191 = vld [vmem:[#allocation3 + $0x138] sm:$0xff]
    %v1192 = vld [vmem:[#allocation3 + $0x140] sm:$0xff]
    %v1193 = vld [vmem:[#allocation3 + $0x148] sm:$0xff]
    %v1194 = vld [vmem:[#allocation3 + $0x150] sm:$0xff]
    %v1195 = vld [vmem:[#allocation3 + $0x158] sm:$0xff]
    %v1196 = vld [vmem:[#allocation3 + $0x160] sm:$0xff]
    %v1197 = vld [vmem:[#allocation3 + $0x168] sm:$0xff]
    %v1198 = vld [vmem:[#allocation3 + $0x170] sm:$0xff]
    %v1199 = vld [vmem:[#allocation3 + $0x178] sm:$0xff]
    %1200 = vmatprep.subr.mxu0 %v1153
    %1201 = vmatpush1.msra.mxu0 %v1152
    %1202 = vmatprep.subr.mxu0 %v1156
    %1203 = vmatpush1.msra.mxu0 %v1155
    %1204 = vmatprep.subr.mxu0 %v1159
    %1205 = vmatpush1.msra.mxu0 %v1158
    %1206 = vmatprep.subr.mxu0 %v1162
    %1207 = vmatpush1.msra.mxu0 %v1161
    %1208 = vmatprep.subr.mxu0 %v1165
    %1209 = vmatpush1.msra.mxu0 %v1164
    %1210 = vmatprep.subr.mxu0 %v1168
    %1211 = vmatpush1.msra.mxu0 %v1167
    %1212 = vmatprep.subr.mxu0 %v1171
    %1213 = vmatpush1.msra.mxu0 %v1170
    %1214 = vmatprep.subr.mxu0 %v1174
    %1215 = vmatpush1.msra.mxu0 %v1173
    %1216 = vmatprep.subr.mxu0 %v1177
    %1217 = vmatpush1.msra.mxu0 %v1176
    %1218 = vmatprep.subr.mxu0 %v1180
    %1219 = vmatpush1.msra.mxu0 %v1179
    %1220 = vmatprep.subr.mxu0 %v1183
    %1221 = vmatpush1.msra.mxu0 %v1182
    %1222 = vmatprep.subr.mxu0 %v1186
    %1223 = vmatpush1.msra.mxu0 %v1185
    %1224 = vmatprep.subr.mxu0 %v1189
    %1225 = vmatpush1.msra.mxu0 %v1188
    %1226 = vmatprep.subr.mxu0 %v1192
    %1227 = vmatpush1.msra.mxu0 %v1191
    %1228 = vmatprep.subr.mxu0 %v1195
    %1229 = vmatpush1.msra.mxu0 %v1194
    %1230 = vmatprep.subr.mxu0 %v1198
    %1231 = vmatpush1.msra.mxu0 %v1197
    %1232 = vmatprep.subr.mxu0 0.0
    %1233 = vmatpush1.msra.mxu0 0.0
    %1234 = vmatprep.subr.mxu0 0.0
    %1235 = vmatpush1.msra.mxu0 0.0
    %1236 = vmatprep.subr.mxu0 0.0
    %1237 = vmatpush1.msra.mxu0 0.0
    %1238 = vmatprep.subr.mxu0 0.0
    %1239 = vmatpush1.msra.mxu0 0.0
    %1240 = vmatprep.subr.mxu0 0.0
    %1241 = vmatpush1.msra.mxu0 0.0
    %1242 = vmatprep.subr.mxu0 0.0
    %1243 = vmatpush1.msra.mxu0 0.0
    %1244 = vmatprep.subr.mxu0 0.0
    %1245 = vmatpush1.msra.mxu0 0.0
    %1246 = vmatprep.subr.mxu0 0.0
    %1247 = vmatpush1.msra.mxu0 0.0
    %1248 = vmatprep.subr.mxu0 0.0
    %1249 = vmatpush1.msra.mxu0 0.0
    %1250 = vmatprep.subr.mxu0 0.0
    %1251 = vmatpush1.msra.mxu0 0.0
    %1252 = vmatprep.subr.mxu0 0.0
    %1253 = vmatpush1.msra.mxu0 0.0
    %1254 = vmatprep.subr.mxu0 0.0
    %1255 = vmatpush1.msra.mxu0 0.0
    %1256 = vmatprep.subr.mxu0 0.0
    %1257 = vmatpush1.msra.mxu0 0.0
    %1258 = vmatprep.subr.mxu0 0.0
    %1259 = vmatpush1.msra.mxu0 0.0
    %1260 = vmatprep.subr.mxu0 0.0
    %1261 = vmatpush1.msra.mxu0 0.0
    %1262 = vmatprep.subr.mxu0 0.0
    %1263 = vmatpush1.msra.mxu0 0.0
    %1264 = vmatprep.mubr.f32.mxu0 0.0
    %1265 = vmatmul.mubr.f32.gmra.mrb[0].mxu0 %v916
    %v1266 = vpop.f32.mrb[0].mxu0
    %v1267 = vadd.f32 0.0, %v1266
    %v1268 = vpop.f32.mrb[0].mxu0
    %v1269 = vadd.f32 0.0, %v1268
    %1270 = vdwg.mxu0
    %1271 = vmatprep.subr.mxu0 0.0
    %1272 = vmatpush1.msra.mxu0 %v1154
    %1273 = vmatprep.subr.mxu0 0.0
    %1274 = vmatpush1.msra.mxu0 %v1157
    %1275 = vmatprep.subr.mxu0 0.0
    %1276 = vmatpush1.msra.mxu0 %v1160
    %1277 = vmatprep.subr.mxu0 0.0
    %1278 = vmatpush1.msra.mxu0 %v1163
    %1279 = vmatprep.subr.mxu0 0.0
    %1280 = vmatpush1.msra.mxu0 %v1166
    %1281 = vmatprep.subr.mxu0 0.0
    %1282 = vmatpush1.msra.mxu0 %v1169
    %1283 = vmatprep.subr.mxu0 0.0
    %1284 = vmatpush1.msra.mxu0 %v1172
    %1285 = vmatprep.subr.mxu0 0.0
    %1286 = vmatpush1.msra.mxu0 %v1175
    %1287 = vmatprep.subr.mxu0 0.0
    %1288 = vmatpush1.msra.mxu0 %v1178
    %1289 = vmatprep.subr.mxu0 0.0
    %1290 = vmatpush1.msra.mxu0 %v1181
    %1291 = vmatprep.subr.mxu0 0.0
    %1292 = vmatpush1.msra.mxu0 %v1184
    %1293 = vmatprep.subr.mxu0 0.0
    %1294 = vmatpush1.msra.mxu0 %v1187
    %1295 = vmatprep.subr.mxu0 0.0
    %1296 = vmatpush1.msra.mxu0 %v1190
    %1297 = vmatprep.subr.mxu0 0.0
    %1298 = vmatpush1.msra.mxu0 %v1193
    %1299 = vmatprep.subr.mxu0 0.0
    %1300 = vmatpush1.msra.mxu0 %v1196
    %1301 = vmatprep.subr.mxu0 0.0
    %1302 = vmatpush1.msra.mxu0 %v1199
    %1303 = vmatprep.subr.mxu0 0.0
    %1304 = vmatpush1.msra.mxu0 0.0
    %1305 = vmatprep.subr.mxu0 0.0
    %1306 = vmatpush1.msra.mxu0 0.0
    %1307 = vmatprep.subr.mxu0 0.0
    %1308 = vmatpush1.msra.mxu0 0.0
    %1309 = vmatprep.subr.mxu0 0.0
    %1310 = vmatpush1.msra.mxu0 0.0
    %1311 = vmatprep.subr.mxu0 0.0
    %1312 = vmatpush1.msra.mxu0 0.0
    %1313 = vmatprep.subr.mxu0 0.0
    %1314 = vmatpush1.msra.mxu0 0.0
    %1315 = vmatprep.subr.mxu0 0.0
    %1316 = vmatpush1.msra.mxu0 0.0
    %1317 = vmatprep.subr.mxu0 0.0
    %1318 = vmatpush1.msra.mxu0 0.0
    %1319 = vmatprep.subr.mxu0 0.0
    %1320 = vmatpush1.msra.mxu0 0.0
    %1321 = vmatprep.subr.mxu0 0.0
    %1322 = vmatpush1.msra.mxu0 0.0
    %1323 = vmatprep.subr.mxu0 0.0
    %1324 = vmatpush1.msra.mxu0 0.0
    %1325 = vmatprep.subr.mxu0 0.0
    %1326 = vmatpush1.msra.mxu0 0.0
    %1327 = vmatprep.subr.mxu0 0.0
    %1328 = vmatpush1.msra.mxu0 0.0
    %1329 = vmatprep.subr.mxu0 0.0
    %1330 = vmatpush1.msra.mxu0 0.0
    %1331 = vmatprep.subr.mxu0 0.0
    %1332 = vmatpush1.msra.mxu0 0.0
    %1333 = vmatprep.subr.mxu0 0.0
    %1334 = vmatpush1.msra.mxu0 0.0
    %1335 = vmatprep.mubr.f32.mxu0 0.0
    %1336 = vmatmul.mubr.f32.gmra.mrb[0].mxu0 %v916
    %v1337 = vpop.f32.mrb[0].mxu0
    %v1338 = vadd.f32 0.0, %v1337
    %v1339 = vpop.f32.mrb[0].mxu0
    %1340 = vdwg.mxu0
    %v1342 = vrot.slane %v1267, 6
    %v1344 = vadd.f32 %v1146, %v1342
    %v1345 = vxor.u32 %v1344, 2147483648
    %v1346 = vmul.f32 %v1345, 1.442695
    %v1347 = vpow.pop %v1346
    %v1348 = vadd.f32 %v1347, 1.0
    %v1349 = vrcp.pop %v1348
    %v1350 = vmul.f32 1.0, %v1349
    %v1352 = vrot.slane %v1269, 6
    %v1354 = vadd.f32 %v1147, %v1352
    %v1355 = vxor.u32 %v1354, 2147483648
    %v1356 = vmul.f32 %v1355, 1.442695
    %v1357 = vpow.pop %v1356
    %v1358 = vadd.f32 %v1357, 1.0
    %v1359 = vrcp.pop %v1358
    %v1360 = vmul.f32 1.0, %v1359
    %v1361 = vadd.f32 %v1338, %v688
    %v1363 = vrot.slane %v1361, 6
    %v1365 = vmul.f32 %v1350, %v1363
    %v1366 = vadd.f32 %v1148, %v1365
    %v1367 = vtanh.pop %v1366
    %v1368 = vsub.f32 1.0, %v1360
    %v1369 = vmul.f32 %v1368, %v1367
    %v1371 = vrot.slane %v916, 6
    %v1373 = vmul.f32 %v1360, %v1371
    %v1374 = vadd.f32 %v1369, %v1373
    %v1375 = vld [vmem:[#allocation5] sm:$0xff]
    %v1376 = vld [vmem:[#allocation5 + $0x8] sm:$0xff]
    %v1377 = vld [vmem:[#allocation5 + $0x10] sm:$0xff]
    %v1378 = vld [vmem:[#allocation5 + $0x18] sm:$0xff]
    %v1379 = vld [vmem:[#allocation5 + $0x20] sm:$0xff]
    %v1380 = vld [vmem:[#allocation5 + $0x28] sm:$0xff]
    %v1381 = vld [vmem:[#allocation5 + $0x30] sm:$0xff]
    %v1382 = vld [vmem:[#allocation5 + $0x38] sm:$0xff]
    %v1383 = vld [vmem:[#allocation5 + $0x40] sm:$0xff]
    %v1384 = vld [vmem:[#allocation5 + $0x48] sm:$0xff]
    %v1385 = vld [vmem:[#allocation5 + $0x50] sm:$0xff]
    %v1386 = vld [vmem:[#allocation5 + $0x58] sm:$0xff]
    %v1387 = vld [vmem:[#allocation5 + $0x60] sm:$0xff]
    %v1388 = vld [vmem:[#allocation5 + $0x68] sm:$0xff]
    %v1389 = vld [vmem:[#allocation5 + $0x70] sm:$0xff]
    %v1390 = vld [vmem:[#allocation5 + $0x78] sm:$0xff]
    %v1391 = vld [vmem:[#allocation5 + $0x80] sm:$0xff]
    %v1392 = vld [vmem:[#allocation5 + $0x88] sm:$0xff]
    %v1393 = vld [vmem:[#allocation5 + $0x90] sm:$0xff]
    %v1394 = vld [vmem:[#allocation5 + $0x98] sm:$0xff]
    %v1395 = vld [vmem:[#allocation5 + $0xa0] sm:$0xff]
    %v1396 = vld [vmem:[#allocation5 + $0xa8] sm:$0xff]
    %v1397 = vld [vmem:[#allocation5 + $0xb0] sm:$0xff]
    %v1398 = vld [vmem:[#allocation5 + $0xb8] sm:$0xff]
    %v1399 = vld [vmem:[#allocation5 + $0xc0] sm:$0xff]
    %v1400 = vld [vmem:[#allocation5 + $0xc8] sm:$0xff]
    %v1401 = vld [vmem:[#allocation5 + $0xd0] sm:$0xff]
    %v1402 = vld [vmem:[#allocation5 + $0xd8] sm:$0xff]
    %v1403 = vld [vmem:[#allocation5 + $0xe0] sm:$0xff]
    %v1404 = vld [vmem:[#allocation5 + $0xe8] sm:$0xff]
    %v1405 = vld [vmem:[#allocation5 + $0xf0] sm:$0xff]
    %v1406 = vld [vmem:[#allocation5 + $0xf8] sm:$0xff]
    %v1407 = vld [vmem:[#allocation5 + $0x100] sm:$0xff]
    %v1408 = vld [vmem:[#allocation5 + $0x108] sm:$0xff]
    %v1409 = vld [vmem:[#allocation5 + $0x110] sm:$0xff]
    %v1410 = vld [vmem:[#allocation5 + $0x118] sm:$0xff]
    %v1411 = vld [vmem:[#allocation5 + $0x120] sm:$0xff]
    %v1412 = vld [vmem:[#allocation5 + $0x128] sm:$0xff]
    %v1413 = vld [vmem:[#allocation5 + $0x130] sm:$0xff]
    %v1414 = vld [vmem:[#allocation5 + $0x138] sm:$0xff]
    %v1415 = vld [vmem:[#allocation5 + $0x140] sm:$0xff]
    %v1416 = vld [vmem:[#allocation5 + $0x148] sm:$0xff]
    %v1417 = vld [vmem:[#allocation5 + $0x150] sm:$0xff]
    %v1418 = vld [vmem:[#allocation5 + $0x158] sm:$0xff]
    %v1419 = vld [vmem:[#allocation5 + $0x160] sm:$0xff]
    %v1420 = vld [vmem:[#allocation5 + $0x168] sm:$0xff]
    %v1421 = vld [vmem:[#allocation5 + $0x170] sm:$0xff]
    %v1422 = vld [vmem:[#allocation5 + $0x178] sm:$0xff]
    %v1424 = vrot.slane %v1139, 6
    %1426 = vmatprep.subr.mxu0 %v1376
    %1427 = vmatpush1.msra.mxu0 %v1375
    %1428 = vmatprep.subr.mxu0 %v1379
    %1429 = vmatpush1.msra.mxu0 %v1378
    %1430 = vmatprep.subr.mxu0 %v1382
    %1431 = vmatpush1.msra.mxu0 %v1381
    %1432 = vmatprep.subr.mxu0 %v1385
    %1433 = vmatpush1.msra.mxu0 %v1384
    %1434 = vmatprep.subr.mxu0 %v1388
    %1435 = vmatpush1.msra.mxu0 %v1387
    %1436 = vmatprep.subr.mxu0 %v1391
    %1437 = vmatpush1.msra.mxu0 %v1390
    %1438 = vmatprep.subr.mxu0 %v1394
    %1439 = vmatpush1.msra.mxu0 %v1393
    %1440 = vmatprep.subr.mxu0 %v1397
    %1441 = vmatpush1.msra.mxu0 %v1396
    %1442 = vmatprep.subr.mxu0 %v1400
    %1443 = vmatpush1.msra.mxu0 %v1399
    %1444 = vmatprep.subr.mxu0 %v1403
    %1445 = vmatpush1.msra.mxu0 %v1402
    %1446 = vmatprep.subr.mxu0 %v1406
    %1447 = vmatpush1.msra.mxu0 %v1405
    %1448 = vmatprep.subr.mxu0 %v1409
    %1449 = vmatpush1.msra.mxu0 %v1408
    %1450 = vmatprep.subr.mxu0 %v1412
    %1451 = vmatpush1.msra.mxu0 %v1411
    %1452 = vmatprep.subr.mxu0 %v1415
    %1453 = vmatpush1.msra.mxu0 %v1414
    %1454 = vmatprep.subr.mxu0 %v1418
    %1455 = vmatpush1.msra.mxu0 %v1417
    %1456 = vmatprep.subr.mxu0 %v1421
    %1457 = vmatpush1.msra.mxu0 %v1420
    %1458 = vmatprep.subr.mxu0 0.0
    %1459 = vmatpush1.msra.mxu0 0.0
    %1460 = vmatprep.subr.mxu0 0.0
    %1461 = vmatpush1.msra.mxu0 0.0
    %1462 = vmatprep.subr.mxu0 0.0
    %1463 = vmatpush1.msra.mxu0 0.0
    %1464 = vmatprep.subr.mxu0 0.0
    %1465 = vmatpush1.msra.mxu0 0.0
    %1466 = vmatprep.subr.mxu0 0.0
    %1467 = vmatpush1.msra.mxu0 0.0
    %1468 = vmatprep.subr.mxu0 0.0
    %1469 = vmatpush1.msra.mxu0 0.0
    %1470 = vmatprep.subr.mxu0 0.0
    %1471 = vmatpush1.msra.mxu0 0.0
    %1472 = vmatprep.subr.mxu0 0.0
    %1473 = vmatpush1.msra.mxu0 0.0
    %1474 = vmatprep.subr.mxu0 0.0
    %1475 = vmatpush1.msra.mxu0 0.0
    %1476 = vmatprep.subr.mxu0 0.0
    %1477 = vmatpush1.msra.mxu0 0.0
    %1478 = vmatprep.subr.mxu0 0.0
    %1479 = vmatpush1.msra.mxu0 0.0
    %1480 = vmatprep.subr.mxu0 0.0
    %1481 = vmatpush1.msra.mxu0 0.0
    %1482 = vmatprep.subr.mxu0 0.0
    %1483 = vmatpush1.msra.mxu0 0.0
    %1484 = vmatprep.subr.mxu0 0.0
    %1485 = vmatpush1.msra.mxu0 0.0
    %1486 = vmatprep.subr.mxu0 0.0
    %1487 = vmatpush1.msra.mxu0 0.0
    %1488 = vmatprep.subr.mxu0 0.0
    %1489 = vmatpush1.msra.mxu0 0.0
    %1490 = vmatprep.mubr.f32.mxu0 0.0
    %1491 = vmatmul.mubr.f32.gmra.mrb[0].mxu0 %v1424
    %v1492 = vpop.f32.mrb[0].mxu0
    %v1493 = vadd.f32 0.0, %v1492
    %v1494 = vpop.f32.mrb[0].mxu0
    %v1495 = vadd.f32 0.0, %v1494
    %1496 = vdwg.mxu0
    %1497 = vmatprep.subr.mxu0 0.0
    %1498 = vmatpush1.msra.mxu0 %v1377
    %1499 = vmatprep.subr.mxu0 0.0
    %1500 = vmatpush1.msra.mxu0 %v1380
    %1501 = vmatprep.subr.mxu0 0.0
    %1502 = vmatpush1.msra.mxu0 %v1383
    %1503 = vmatprep.subr.mxu0 0.0
    %1504 = vmatpush1.msra.mxu0 %v1386
    %1505 = vmatprep.subr.mxu0 0.0
    %1506 = vmatpush1.msra.mxu0 %v1389
    %1507 = vmatprep.subr.mxu0 0.0
    %1508 = vmatpush1.msra.mxu0 %v1392
    %1509 = vmatprep.subr.mxu0 0.0
    %1510 = vmatpush1.msra.mxu0 %v1395
    %1511 = vmatprep.subr.mxu0 0.0
    %1512 = vmatpush1.msra.mxu0 %v1398
    %1513 = vmatprep.subr.mxu0 0.0
    %1514 = vmatpush1.msra.mxu0 %v1401
    %1515 = vmatprep.subr.mxu0 0.0
    %1516 = vmatpush1.msra.mxu0 %v1404
    %1517 = vmatprep.subr.mxu0 0.0
    %1518 = vmatpush1.msra.mxu0 %v1407
    %1519 = vmatprep.subr.mxu0 0.0
    %1520 = vmatpush1.msra.mxu0 %v1410
    %1521 = vmatprep.subr.mxu0 0.0
    %1522 = vmatpush1.msra.mxu0 %v1413
    %1523 = vmatprep.subr.mxu0 0.0
    %1524 = vmatpush1.msra.mxu0 %v1416
    %1525 = vmatprep.subr.mxu0 0.0
    %1526 = vmatpush1.msra.mxu0 %v1419
    %1527 = vmatprep.subr.mxu0 0.0
    %1528 = vmatpush1.msra.mxu0 %v1422
    %1529 = vmatprep.subr.mxu0 0.0
    %1530 = vmatpush1.msra.mxu0 0.0
    %1531 = vmatprep.subr.mxu0 0.0
    %1532 = vmatpush1.msra.mxu0 0.0
    %1533 = vmatprep.subr.mxu0 0.0
    %1534 = vmatpush1.msra.mxu0 0.0
    %1535 = vmatprep.subr.mxu0 0.0
    %1536 = vmatpush1.msra.mxu0 0.0
    %1537 = vmatprep.subr.mxu0 0.0
    %1538 = vmatpush1.msra.mxu0 0.0
    %1539 = vmatprep.subr.mxu0 0.0
    %1540 = vmatpush1.msra.mxu0 0.0
    %1541 = vmatprep.subr.mxu0 0.0
    %1542 = vmatpush1.msra.mxu0 0.0
    %1543 = vmatprep.subr.mxu0 0.0
    %1544 = vmatpush1.msra.mxu0 0.0
    %1545 = vmatprep.subr.mxu0 0.0
    %1546 = vmatpush1.msra.mxu0 0.0
    %1547 = vmatprep.subr.mxu0 0.0
    %1548 = vmatpush1.msra.mxu0 0.0
    %1549 = vmatprep.subr.mxu0 0.0
    %1550 = vmatpush1.msra.mxu0 0.0
    %1551 = vmatprep.subr.mxu0 0.0
    %1552 = vmatpush1.msra.mxu0 0.0
    %1553 = vmatprep.subr.mxu0 0.0
    %1554 = vmatpush1.msra.mxu0 0.0
    %1555 = vmatprep.subr.mxu0 0.0
    %1556 = vmatpush1.msra.mxu0 0.0
    %1557 = vmatprep.subr.mxu0 0.0
    %1558 = vmatpush1.msra.mxu0 0.0
    %1559 = vmatprep.subr.mxu0 0.0
    %1560 = vmatpush1.msra.mxu0 0.0
    %1561 = vmatprep.mubr.f32.mxu0 0.0
    %1562 = vmatmul.mubr.f32.gmra.mrb[0].mxu0 %v1424
    %v1563 = vpop.f32.mrb[0].mxu0
    %v1564 = vadd.f32 0.0, %v1563
    %v1565 = vpop.f32.mrb[0].mxu0
    %1566 = vdwg.mxu0
    %v1568 = vrot.slane %v1493, 4
    %v1570 = vadd.f32 %v1149, %v1568
    %v1571 = vxor.u32 %v1570, 2147483648
    %v1572 = vmul.f32 %v1571, 1.442695
    %v1573 = vpow.pop %v1572
    %v1574 = vadd.f32 %v1573, 1.0
    %v1575 = vrcp.pop %v1574
    %v1576 = vmul.f32 1.0, %v1575
    %v1578 = vrot.slane %v1495, 4
    %v1580 = vadd.f32 %v1150, %v1578
    %v1581 = vxor.u32 %v1580, 2147483648
    %v1582 = vmul.f32 %v1581, 1.442695
    %v1583 = vpow.pop %v1582
    %v1584 = vadd.f32 %v1583, 1.0
    %v1585 = vrcp.pop %v1584
    %v1586 = vmul.f32 1.0, %v1585
    %v1587 = vadd.f32 %v1564, %v695
    %v1589 = vrot.slane %v1587, 4
    %v1591 = vmul.f32 %v1576, %v1589
    %v1592 = vadd.f32 %v1151, %v1591
    %v1593 = vtanh.pop %v1592
    %v1594 = vsub.f32 1.0, %v1586
    %v1595 = vmul.f32 %v1594, %v1593
    %v1596 = vrot.slane %v1139, 2
    %v1598 = vmul.f32 %v1586, %v1596
    %v1599 = vadd.f32 %v1595, %v1598
    %v1600 = vmax.f32 %v1374, -5.0
    %v1601 = vmin.f32 %v1600, 5.0
    %1602 = vst [vmem:[%s15] sm:$0xc] %v1601
    %v1603 = vmax.f32 %v1599, -5.0
    %v1604 = vmin.f32 %v1603, 5.0
    %1605 = vst [vmem:[%s15 + $0x18] sm:$0x30] %v1604
    %v1606 = vld [vmem:[#allocation2] sm:$0x30]
    %v1607 = vld [vmem:[#allocation2 + $0x8] sm:$0x30]
    %v1608 = vld [vmem:[#allocation2 + $0x10] sm:$0x30]
    %v1609 = vld [vmem:[#allocation2 + $0x48] sm:$0xc]
    %v1610 = vld [vmem:[#allocation2 + $0x50] sm:$0xc]
    %v1611 = vld [vmem:[#allocation2 + $0x58] sm:$0xc]
    %v1612 = vld [vmem:[#allocation3] sm:$0xff]
    %v1613 = vld [vmem:[#allocation3 + $0x8] sm:$0xff]
    %v1614 = vld [vmem:[#allocation3 + $0x10] sm:$0xff]
    %v1615 = vld [vmem:[#allocation3 + $0x18] sm:$0xff]
    %v1616 = vld [vmem:[#allocation3 + $0x20] sm:$0xff]
    %v1617 = vld [vmem:[#allocation3 + $0x28] sm:$0xff]
    %v1618 = vld [vmem:[#allocation3 + $0x30] sm:$0xff]
    %v1619 = vld [vmem:[#allocation3 + $0x38] sm:$0xff]
    %v1620 = vld [vmem:[#allocation3 + $0x40] sm:$0xff]
    %v1621 = vld [vmem:[#allocation3 + $0x48] sm:$0xff]
    %v1622 = vld [vmem:[#allocation3 + $0x50] sm:$0xff]
    %v1623 = vld [vmem:[#allocation3 + $0x58] sm:$0xff]
    %v1624 = vld [vmem:[#allocation3 + $0x60] sm:$0xff]
    %v1625 = vld [vmem:[#allocation3 + $0x68] sm:$0xff]
    %v1626 = vld [vmem:[#allocation3 + $0x70] sm:$0xff]
    %v1627 = vld [vmem:[#allocation3 + $0x78] sm:$0xff]
    %v1628 = vld [vmem:[#allocation3 + $0x80] sm:$0xff]
    %v1629 = vld [vmem:[#allocation3 + $0x88] sm:$0xff]
    %v1630 = vld [vmem:[#allocation3 + $0x90] sm:$0xff]
    %v1631 = vld [vmem:[#allocation3 + $0x98] sm:$0xff]
    %v1632 = vld [vmem:[#allocation3 + $0xa0] sm:$0xff]
    %v1633 = vld [vmem:[#allocation3 + $0xa8] sm:$0xff]
    %v1634 = vld [vmem:[#allocation3 + $0xb0] sm:$0xff]
    %v1635 = vld [vmem:[#allocation3 + $0xb8] sm:$0xff]
    %v1636 = vld [vmem:[#allocation3 + $0xc0] sm:$0xff]
    %v1637 = vld [vmem:[#allocation3 + $0xc8] sm:$0xff]
    %v1638 = vld [vmem:[#allocation3 + $0xd0] sm:$0xff]
    %v1639 = vld [vmem:[#allocation3 + $0xd8] sm:$0xff]
    %v1640 = vld [vmem:[#allocation3 + $0xe0] sm:$0xff]
    %v1641 = vld [vmem:[#allocation3 + $0xe8] sm:$0xff]
    %v1642 = vld [vmem:[#allocation3 + $0xf0] sm:$0xff]
    %v1643 = vld [vmem:[#allocation3 + $0xf8] sm:$0xff]
    %v1644 = vld [vmem:[#allocation3 + $0x100] sm:$0xff]
    %v1645 = vld [vmem:[#allocation3 + $0x108] sm:$0xff]
    %v1646 = vld [vmem:[#allocation3 + $0x110] sm:$0xff]
    %v1647 = vld [vmem:[#allocation3 + $0x118] sm:$0xff]
    %v1648 = vld [vmem:[#allocation3 + $0x120] sm:$0xff]
    %v1649 = vld [vmem:[#allocation3 + $0x128] sm:$0xff]
    %v1650 = vld [vmem:[#allocation3 + $0x130] sm:$0xff]
    %v1651 = vld [vmem:[#allocation3 + $0x138] sm:$0xff]
    %v1652 = vld [vmem:[#allocation3 + $0x140] sm:$0xff]
    %v1653 = vld [vmem:[#allocation3 + $0x148] sm:$0xff]
    %v1654 = vld [vmem:[#allocation3 + $0x150] sm:$0xff]
    %v1655 = vld [vmem:[#allocation3 + $0x158] sm:$0xff]
    %v1656 = vld [vmem:[#allocation3 + $0x160] sm:$0xff]
    %v1657 = vld [vmem:[#allocation3 + $0x168] sm:$0xff]
    %v1658 = vld [vmem:[#allocation3 + $0x170] sm:$0xff]
    %v1659 = vld [vmem:[#allocation3 + $0x178] sm:$0xff]
    %v1661 = vrot.slane %v1374, 2
    %1663 = vmatprep.subr.mxu0 %v1613
    %1664 = vmatpush1.msra.mxu0 %v1612
    %1665 = vmatprep.subr.mxu0 %v1616
    %1666 = vmatpush1.msra.mxu0 %v1615
    %1667 = vmatprep.subr.mxu0 %v1619
    %1668 = vmatpush1.msra.mxu0 %v1618
    %1669 = vmatprep.subr.mxu0 %v1622
    %1670 = vmatpush1.msra.mxu0 %v1621
    %1671 = vmatprep.subr.mxu0 %v1625
    %1672 = vmatpush1.msra.mxu0 %v1624
    %1673 = vmatprep.subr.mxu0 %v1628
    %1674 = vmatpush1.msra.mxu0 %v1627
    %1675 = vmatprep.subr.mxu0 %v1631
    %1676 = vmatpush1.msra.mxu0 %v1630
    %1677 = vmatprep.subr.mxu0 %v1634
    %1678 = vmatpush1.msra.mxu0 %v1633
    %1679 = vmatprep.subr.mxu0 %v1637
    %1680 = vmatpush1.msra.mxu0 %v1636
    %1681 = vmatprep.subr.mxu0 %v1640
    %1682 = vmatpush1.msra.mxu0 %v1639
    %1683 = vmatprep.subr.mxu0 %v1643
    %1684 = vmatpush1.msra.mxu0 %v1642
    %1685 = vmatprep.subr.mxu0 %v1646
    %1686 = vmatpush1.msra.mxu0 %v1645
    %1687 = vmatprep.subr.mxu0 %v1649
    %1688 = vmatpush1.msra.mxu0 %v1648
    %1689 = vmatprep.subr.mxu0 %v1652
    %1690 = vmatpush1.msra.mxu0 %v1651
    %1691 = vmatprep.subr.mxu0 %v1655
    %1692 = vmatpush1.msra.mxu0 %v1654
    %1693 = vmatprep.subr.mxu0 %v1658
    %1694 = vmatpush1.msra.mxu0 %v1657
    %1695 = vmatprep.subr.mxu0 0.0
    %1696 = vmatpush1.msra.mxu0 0.0
    %1697 = vmatprep.subr.mxu0 0.0
    %1698 = vmatpush1.msra.mxu0 0.0
    %1699 = vmatprep.subr.mxu0 0.0
    %1700 = vmatpush1.msra.mxu0 0.0
    %1701 = vmatprep.subr.mxu0 0.0
    %1702 = vmatpush1.msra.mxu0 0.0
    %1703 = vmatprep.subr.mxu0 0.0
    %1704 = vmatpush1.msra.mxu0 0.0
    %1705 = vmatprep.subr.mxu0 0.0
    %1706 = vmatpush1.msra.mxu0 0.0
    %1707 = vmatprep.subr.mxu0 0.0
    %1708 = vmatpush1.msra.mxu0 0.0
    %1709 = vmatprep.subr.mxu0 0.0
    %1710 = vmatpush1.msra.mxu0 0.0
    %1711 = vmatprep.subr.mxu0 0.0
    %1712 = vmatpush1.msra.mxu0 0.0
    %1713 = vmatprep.subr.mxu0 0.0
    %1714 = vmatpush1.msra.mxu0 0.0
    %1715 = vmatprep.subr.mxu0 0.0
    %1716 = vmatpush1.msra.mxu0 0.0
    %1717 = vmatprep.subr.mxu0 0.0
    %1718 = vmatpush1.msra.mxu0 0.0
    %1719 = vmatprep.subr.mxu0 0.0
    %1720 = vmatpush1.msra.mxu0 0.0
    %1721 = vmatprep.subr.mxu0 0.0
    %1722 = vmatpush1.msra.mxu0 0.0
    %1723 = vmatprep.subr.mxu0 0.0
    %1724 = vmatpush1.msra.mxu0 0.0
    %1725 = vmatprep.subr.mxu0 0.0
    %1726 = vmatpush1.msra.mxu0 0.0
    %1727 = vmatprep.mubr.f32.mxu0 0.0
    %1728 = vmatmul.mubr.f32.gmra.mrb[0].mxu0 %v1661
    %v1729 = vpop.f32.mrb[0].mxu0
    %v1730 = vadd.f32 0.0, %v1729
    %v1731 = vpop.f32.mrb[0].mxu0
    %v1732 = vadd.f32 0.0, %v1731
    %1733 = vdwg.mxu0
    %1734 = vmatprep.subr.mxu0 0.0
    %1735 = vmatpush1.msra.mxu0 %v1614
    %1736 = vmatprep.subr.mxu0 0.0
    %1737 = vmatpush1.msra.mxu0 %v1617
    %1738 = vmatprep.subr.mxu0 0.0
    %1739 = vmatpush1.msra.mxu0 %v1620
    %1740 = vmatprep.subr.mxu0 0.0
    %1741 = vmatpush1.msra.mxu0 %v1623
    %1742 = vmatprep.subr.mxu0 0.0
    %1743 = vmatpush1.msra.mxu0 %v1626
    %1744 = vmatprep.subr.mxu0 0.0
    %1745 = vmatpush1.msra.mxu0 %v1629
    %1746 = vmatprep.subr.mxu0 0.0
    %1747 = vmatpush1.msra.mxu0 %v1632
    %1748 = vmatprep.subr.mxu0 0.0
    %1749 = vmatpush1.msra.mxu0 %v1635
    %1750 = vmatprep.subr.mxu0 0.0
    %1751 = vmatpush1.msra.mxu0 %v1638
    %1752 = vmatprep.subr.mxu0 0.0
    %1753 = vmatpush1.msra.mxu0 %v1641
    %1754 = vmatprep.subr.mxu0 0.0
    %1755 = vmatpush1.msra.mxu0 %v1644
    %1756 = vmatprep.subr.mxu0 0.0
    %1757 = vmatpush1.msra.mxu0 %v1647
    %1758 = vmatprep.subr.mxu0 0.0
    %1759 = vmatpush1.msra.mxu0 %v1650
    %1760 = vmatprep.subr.mxu0 0.0
    %1761 = vmatpush1.msra.mxu0 %v1653
    %1762 = vmatprep.subr.mxu0 0.0
    %1763 = vmatpush1.msra.mxu0 %v1656
    %1764 = vmatprep.subr.mxu0 0.0
    %1765 = vmatpush1.msra.mxu0 %v1659
    %1766 = vmatprep.subr.mxu0 0.0
    %1767 = vmatpush1.msra.mxu0 0.0
    %1768 = vmatprep.subr.mxu0 0.0
    %1769 = vmatpush1.msra.mxu0 0.0
    %1770 = vmatprep.subr.mxu0 0.0
    %1771 = vmatpush1.msra.mxu0 0.0
    %1772 = vmatprep.subr.mxu0 0.0
    %1773 = vmatpush1.msra.mxu0 0.0
    %1774 = vmatprep.subr.mxu0 0.0
    %1775 = vmatpush1.msra.mxu0 0.0
    %1776 = vmatprep.subr.mxu0 0.0
    %1777 = vmatpush1.msra.mxu0 0.0
    %1778 = vmatprep.subr.mxu0 0.0
    %1779 = vmatpush1.msra.mxu0 0.0
    %1780 = vmatprep.subr.mxu0 0.0
    %1781 = vmatpush1.msra.mxu0 0.0
    %1782 = vmatprep.subr.mxu0 0.0
    %1783 = vmatpush1.msra.mxu0 0.0
    %1784 = vmatprep.subr.mxu0 0.0
    %1785 = vmatpush1.msra.mxu0 0.0
    %1786 = vmatprep.subr.mxu0 0.0
    %1787 = vmatpush1.msra.mxu0 0.0
    %1788 = vmatprep.subr.mxu0 0.0
    %1789 = vmatpush1.msra.mxu0 0.0
    %1790 = vmatprep.subr.mxu0 0.0
    %1791 = vmatpush1.msra.mxu0 0.0
    %1792 = vmatprep.subr.mxu0 0.0
    %1793 = vmatpush1.msra.mxu0 0.0
    %1794 = vmatprep.subr.mxu0 0.0
    %1795 = vmatpush1.msra.mxu0 0.0
    %1796 = vmatprep.subr.mxu0 0.0
    %1797 = vmatpush1.msra.mxu0 0.0
    %1798 = vmatprep.mubr.f32.mxu0 0.0
    %1799 = vmatmul.mubr.f32.gmra.mrb[0].mxu0 %v1661
    %v1800 = vpop.f32.mrb[0].mxu0
    %v1801 = vadd.f32 0.0, %v1800
    %v1802 = vpop.f32.mrb[0].mxu0
    %1803 = vdwg.mxu0
    %v1805 = vrot.slane %v1730, 4
    %v1807 = vadd.f32 %v1606, %v1805
    %v1808 = vxor.u32 %v1807, 2147483648
    %v1809 = vmul.f32 %v1808, 1.442695
    %v1810 = vpow.pop %v1809
    %v1811 = vadd.f32 %v1810, 1.0
    %v1812 = vrcp.pop %v1811
    %v1813 = vmul.f32 1.0, %v1812
    %v1815 = vrot.slane %v1732, 4
    %v1817 = vadd.f32 %v1607, %v1815
    %v1818 = vxor.u32 %v1817, 2147483648
    %v1819 = vmul.f32 %v1818, 1.442695
    %v1820 = vpow.pop %v1819
    %v1821 = vadd.f32 %v1820, 1.0
    %v1822 = vrcp.pop %v1821
    %v1823 = vmul.f32 1.0, %v1822
    %v1824 = vadd.f32 %v1801, %v688
    %v1826 = vrot.slane %v1824, 4
    %v1828 = vmul.f32 %v1813, %v1826
    %v1829 = vadd.f32 %v1608, %v1828
    %v1830 = vtanh.pop %v1829
    %v1831 = vsub.f32 1.0, %v1823
    %v1832 = vmul.f32 %v1831, %v1830
    %v1833 = vrot.slane %v1374, 6
    %v1835 = vmul.f32 %v1823, %v1833
    %v1836 = vadd.f32 %v1832, %v1835
    %v1837 = vld [vmem:[#allocation5] sm:$0xff]
    %v1838 = vld [vmem:[#allocation5 + $0x8] sm:$0xff]
    %v1839 = vld [vmem:[#allocation5 + $0x10] sm:$0xff]
    %v1840 = vld [vmem:[#allocation5 + $0x18] sm:$0xff]
    %v1841 = vld [vmem:[#allocation5 + $0x20] sm:$0xff]
    %v1842 = vld [vmem:[#allocation5 + $0x28] sm:$0xff]
    %v1843 = vld [vmem:[#allocation5 + $0x30] sm:$0xff]
    %v1844 = vld [vmem:[#allocation5 + $0x38] sm:$0xff]
    %v1845 = vld [vmem:[#allocation5 + $0x40] sm:$0xff]
    %v1846 = vld [vmem:[#allocation5 + $0x48] sm:$0xff]
    %v1847 = vld [vmem:[#allocation5 + $0x50] sm:$0xff]
    %v1848 = vld [vmem:[#allocation5 + $0x58] sm:$0xff]
    %v1849 = vld [vmem:[#allocation5 + $0x60] sm:$0xff]
    %v1850 = vld [vmem:[#allocation5 + $0x68] sm:$0xff]
    %v1851 = vld [vmem:[#allocation5 + $0x70] sm:$0xff]
    %v1852 = vld [vmem:[#allocation5 + $0x78] sm:$0xff]
    %v1853 = vld [vmem:[#allocation5 + $0x80] sm:$0xff]
    %v1854 = vld [vmem:[#allocation5 + $0x88] sm:$0xff]
    %v1855 = vld [vmem:[#allocation5 + $0x90] sm:$0xff]
    %v1856 = vld [vmem:[#allocation5 + $0x98] sm:$0xff]
    %v1857 = vld [vmem:[#allocation5 + $0xa0] sm:$0xff]
    %v1858 = vld [vmem:[#allocation5 + $0xa8] sm:$0xff]
    %v1859 = vld [vmem:[#allocation5 + $0xb0] sm:$0xff]
    %v1860 = vld [vmem:[#allocation5 + $0xb8] sm:$0xff]
    %v1861 = vld [vmem:[#allocation5 + $0xc0] sm:$0xff]
    %v1862 = vld [vmem:[#allocation5 + $0xc8] sm:$0xff]
    %v1863 = vld [vmem:[#allocation5 + $0xd0] sm:$0xff]
    %v1864 = vld [vmem:[#allocation5 + $0xd8] sm:$0xff]
    %v1865 = vld [vmem:[#allocation5 + $0xe0] sm:$0xff]
    %v1866 = vld [vmem:[#allocation5 + $0xe8] sm:$0xff]
    %v1867 = vld [vmem:[#allocation5 + $0xf0] sm:$0xff]
    %v1868 = vld [vmem:[#allocation5 + $0xf8] sm:$0xff]
    %v1869 = vld [vmem:[#allocation5 + $0x100] sm:$0xff]
    %v1870 = vld [vmem:[#allocation5 + $0x108] sm:$0xff]
    %v1871 = vld [vmem:[#allocation5 + $0x110] sm:$0xff]
    %v1872 = vld [vmem:[#allocation5 + $0x118] sm:$0xff]
    %v1873 = vld [vmem:[#allocation5 + $0x120] sm:$0xff]
    %v1874 = vld [vmem:[#allocation5 + $0x128] sm:$0xff]
    %v1875 = vld [vmem:[#allocation5 + $0x130] sm:$0xff]
    %v1876 = vld [vmem:[#allocation5 + $0x138] sm:$0xff]
    %v1877 = vld [vmem:[#allocation5 + $0x140] sm:$0xff]
    %v1878 = vld [vmem:[#allocation5 + $0x148] sm:$0xff]
    %v1879 = vld [vmem:[#allocation5 + $0x150] sm:$0xff]
    %v1880 = vld [vmem:[#allocation5 + $0x158] sm:$0xff]
    %v1881 = vld [vmem:[#allocation5 + $0x160] sm:$0xff]
    %v1882 = vld [vmem:[#allocation5 + $0x168] sm:$0xff]
    %v1883 = vld [vmem:[#allocation5 + $0x170] sm:$0xff]
    %v1884 = vld [vmem:[#allocation5 + $0x178] sm:$0xff]
    %v1886 = vrot.slane %v1599, 4
    %1888 = vmatprep.subr.mxu0 %v1838
    %1889 = vmatpush1.msra.mxu0 %v1837
    %1890 = vmatprep.subr.mxu0 %v1841
    %1891 = vmatpush1.msra.mxu0 %v1840
    %1892 = vmatprep.subr.mxu0 %v1844
    %1893 = vmatpush1.msra.mxu0 %v1843
    %1894 = vmatprep.subr.mxu0 %v1847
    %1895 = vmatpush1.msra.mxu0 %v1846
    %1896 = vmatprep.subr.mxu0 %v1850
    %1897 = vmatpush1.msra.mxu0 %v1849
    %1898 = vmatprep.subr.mxu0 %v1853
    %1899 = vmatpush1.msra.mxu0 %v1852
    %1900 = vmatprep.subr.mxu0 %v1856
    %1901 = vmatpush1.msra.mxu0 %v1855
    %1902 = vmatprep.subr.mxu0 %v1859
    %1903 = vmatpush1.msra.mxu0 %v1858
    %1904 = vmatprep.subr.mxu0 %v1862
    %1905 = vmatpush1.msra.mxu0 %v1861
    %1906 = vmatprep.subr.mxu0 %v1865
    %1907 = vmatpush1.msra.mxu0 %v1864
    %1908 = vmatprep.subr.mxu0 %v1868
    %1909 = vmatpush1.msra.mxu0 %v1867
    %1910 = vmatprep.subr.mxu0 %v1871
    %1911 = vmatpush1.msra.mxu0 %v1870
    %1912 = vmatprep.subr.mxu0 %v1874
    %1913 = vmatpush1.msra.mxu0 %v1873
    %1914 = vmatprep.subr.mxu0 %v1877
    %1915 = vmatpush1.msra.mxu0 %v1876
    %1916 = vmatprep.subr.mxu0 %v1880
    %1917 = vmatpush1.msra.mxu0 %v1879
    %1918 = vmatprep.subr.mxu0 %v1883
    %1919 = vmatpush1.msra.mxu0 %v1882
    %1920 = vmatprep.subr.mxu0 0.0
    %1921 = vmatpush1.msra.mxu0 0.0
    %1922 = vmatprep.subr.mxu0 0.0
    %1923 = vmatpush1.msra.mxu0 0.0
    %1924 = vmatprep.subr.mxu0 0.0
    %1925 = vmatpush1.msra.mxu0 0.0
    %1926 = vmatprep.subr.mxu0 0.0
    %1927 = vmatpush1.msra.mxu0 0.0
    %1928 = vmatprep.subr.mxu0 0.0
    %1929 = vmatpush1.msra.mxu0 0.0
    %1930 = vmatprep.subr.mxu0 0.0
    %1931 = vmatpush1.msra.mxu0 0.0
    %1932 = vmatprep.subr.mxu0 0.0
    %1933 = vmatpush1.msra.mxu0 0.0
    %1934 = vmatprep.subr.mxu0 0.0
    %1935 = vmatpush1.msra.mxu0 0.0
    %1936 = vmatprep.subr.mxu0 0.0
    %1937 = vmatpush1.msra.mxu0 0.0
    %1938 = vmatprep.subr.mxu0 0.0
    %1939 = vmatpush1.msra.mxu0 0.0
    %1940 = vmatprep.subr.mxu0 0.0
    %1941 = vmatpush1.msra.mxu0 0.0
    %1942 = vmatprep.subr.mxu0 0.0
    %1943 = vmatpush1.msra.mxu0 0.0
    %1944 = vmatprep.subr.mxu0 0.0
    %1945 = vmatpush1.msra.mxu0 0.0
    %1946 = vmatprep.subr.mxu0 0.0
    %1947 = vmatpush1.msra.mxu0 0.0
    %1948 = vmatprep.subr.mxu0 0.0
    %1949 = vmatpush1.msra.mxu0 0.0
    %1950 = vmatprep.subr.mxu0 0.0
    %1951 = vmatpush1.msra.mxu0 0.0
    %1952 = vmatprep.mubr.f32.mxu0 0.0
    %1953 = vmatmul.mubr.f32.gmra.mrb[0].mxu0 %v1886
    %v1954 = vpop.f32.mrb[0].mxu0
    %v1955 = vadd.f32 0.0, %v1954
    %v1956 = vpop.f32.mrb[0].mxu0
    %v1957 = vadd.f32 0.0, %v1956
    %1958 = vdwg.mxu0
    %1959 = vmatprep.subr.mxu0 0.0
    %1960 = vmatpush1.msra.mxu0 %v1839
    %1961 = vmatprep.subr.mxu0 0.0
    %1962 = vmatpush1.msra.mxu0 %v1842
    %1963 = vmatprep.subr.mxu0 0.0
    %1964 = vmatpush1.msra.mxu0 %v1845
    %1965 = vmatprep.subr.mxu0 0.0
    %1966 = vmatpush1.msra.mxu0 %v1848
    %1967 = vmatprep.subr.mxu0 0.0
    %1968 = vmatpush1.msra.mxu0 %v1851
    %1969 = vmatprep.subr.mxu0 0.0
    %1970 = vmatpush1.msra.mxu0 %v1854
    %1971 = vmatprep.subr.mxu0 0.0
    %1972 = vmatpush1.msra.mxu0 %v1857
    %1973 = vmatprep.subr.mxu0 0.0
    %1974 = vmatpush1.msra.mxu0 %v1860
    %1975 = vmatprep.subr.mxu0 0.0
    %1976 = vmatpush1.msra.mxu0 %v1863
    %1977 = vmatprep.subr.mxu0 0.0
    %1978 = vmatpush1.msra.mxu0 %v1866
    %1979 = vmatprep.subr.mxu0 0.0
    %1980 = vmatpush1.msra.mxu0 %v1869
    %1981 = vmatprep.subr.mxu0 0.0
    %1982 = vmatpush1.msra.mxu0 %v1872
    %1983 = vmatprep.subr.mxu0 0.0
    %1984 = vmatpush1.msra.mxu0 %v1875
    %1985 = vmatprep.subr.mxu0 0.0
    %1986 = vmatpush1.msra.mxu0 %v1878
    %1987 = vmatprep.subr.mxu0 0.0
    %1988 = vmatpush1.msra.mxu0 %v1881
    %1989 = vmatprep.subr.mxu0 0.0
    %1990 = vmatpush1.msra.mxu0 %v1884
    %1991 = vmatprep.subr.mxu0 0.0
    %1992 = vmatpush1.msra.mxu0 0.0
    %1993 = vmatprep.subr.mxu0 0.0
    %1994 = vmatpush1.msra.mxu0 0.0
    %1995 = vmatprep.subr.mxu0 0.0
    %1996 = vmatpush1.msra.mxu0 0.0
    %1997 = vmatprep.subr.mxu0 0.0
    %1998 = vmatpush1.msra.mxu0 0.0
    %1999 = vmatprep.subr.mxu0 0.0
    %2000 = vmatpush1.msra.mxu0 0.0
    %2001 = vmatprep.subr.mxu0 0.0
    %2002 = vmatpush1.msra.mxu0 0.0
    %2003 = vmatprep.subr.mxu0 0.0
    %2004 = vmatpush1.msra.mxu0 0.0
    %2005 = vmatprep.subr.mxu0 0.0
    %2006 = vmatpush1.msra.mxu0 0.0
    %2007 = vmatprep.subr.mxu0 0.0
    %2008 = vmatpush1.msra.mxu0 0.0
    %2009 = vmatprep.subr.mxu0 0.0
    %2010 = vmatpush1.msra.mxu0 0.0
    %2011 = vmatprep.subr.mxu0 0.0
    %2012 = vmatpush1.msra.mxu0 0.0
    %2013 = vmatprep.subr.mxu0 0.0
    %2014 = vmatpush1.msra.mxu0 0.0
    %2015 = vmatprep.subr.mxu0 0.0
    %2016 = vmatpush1.msra.mxu0 0.0
    %2017 = vmatprep.subr.mxu0 0.0
    %2018 = vmatpush1.msra.mxu0 0.0
    %2019 = vmatprep.subr.mxu0 0.0
    %2020 = vmatpush1.msra.mxu0 0.0
    %2021 = vmatprep.subr.mxu0 0.0
    %2022 = vmatpush1.msra.mxu0 0.0
    %2023 = vmatprep.mubr.f32.mxu0 0.0
    %2024 = vmatmul.mubr.f32.gmra.mrb[0].mxu0 %v1886
    %v2025 = vpop.f32.mrb[0].mxu0
    %v2026 = vadd.f32 0.0, %v2025
    %v2027 = vpop.f32.mrb[0].mxu0
    %2028 = vdwg.mxu0
    %v2030 = vrot.slane %v1955, 6
    %v2032 = vadd.f32 %v1609, %v2030
    %v2033 = vxor.u32 %v2032, 2147483648
    %v2034 = vmul.f32 %v2033, 1.442695
    %v2035 = vpow.pop %v2034
    %v2036 = vadd.f32 %v2035, 1.0
    %v2037 = vrcp.pop %v2036
    %v2038 = vmul.f32 1.0, %v2037
    %v2040 = vrot.slane %v1957, 6
    %v2042 = vadd.f32 %v1610, %v2040
    %v2043 = vxor.u32 %v2042, 2147483648
    %v2044 = vmul.f32 %v2043, 1.442695
    %v2045 = vpow.pop %v2044
    %v2046 = vadd.f32 %v2045, 1.0
    %v2047 = vrcp.pop %v2046
    %v2048 = vmul.f32 1.0, %v2047
    %v2049 = vadd.f32 %v2026, %v695
    %v2051 = vrot.slane %v2049, 6
    %v2053 = vmul.f32 %v2038, %v2051
    %v2054 = vadd.f32 %v1611, %v2053
    %v2055 = vtanh.pop %v2054
    %v2056 = vsub.f32 1.0, %v2048
    %v2057 = vmul.f32 %v2056, %v2055
    %v2058 = vrot.slane %v1599, 2
    %v2060 = vmul.f32 %v2048, %v2058
    %v2061 = vadd.f32 %v2057, %v2060
    %v2062 = vmax.f32 %v1836, -5.0
    %v2063 = vmin.f32 %v2062, 5.0
    %2064 = vst [vmem:[%s15] sm:$0x30] %v2063
    %v2065 = vmax.f32 %v2061, -5.0
    %v2066 = vmin.f32 %v2065, 5.0
    %2067 = vst [vmem:[%s15 + $0x18] sm:$0xc] %v2066
    %v2068 = vld [vmem:[#allocation2] sm:$0xc0]
    %v2069 = vld [vmem:[#allocation2 + $0x8] sm:$0xc0]
    %v2070 = vld [vmem:[#allocation2 + $0x10] sm:$0xc0]
    %v2071 = vld [vmem:[#allocation2 + $0x48] sm:$0x3]
    %v2072 = vld [vmem:[#allocation2 + $0x50] sm:$0x3]
    %v2073 = vld [vmem:[#allocation2 + $0x58] sm:$0x3]
    %v2074 = vld [vmem:[#allocation3] sm:$0xff]
    %v2075 = vld [vmem:[#allocation3 + $0x8] sm:$0xff]
    %v2076 = vld [vmem:[#allocation3 + $0x10] sm:$0xff]
    %v2077 = vld [vmem:[#allocation3 + $0x18] sm:$0xff]
    %v2078 = vld [vmem:[#allocation3 + $0x20] sm:$0xff]
    %v2079 = vld [vmem:[#allocation3 + $0x28] sm:$0xff]
    %v2080 = vld [vmem:[#allocation3 + $0x30] sm:$0xff]
    %v2081 = vld [vmem:[#allocation3 + $0x38] sm:$0xff]
    %v2082 = vld [vmem:[#allocation3 + $0x40] sm:$0xff]
    %v2083 = vld [vmem:[#allocation3 + $0x48] sm:$0xff]
    %v2084 = vld [vmem:[#allocation3 + $0x50] sm:$0xff]
    %v2085 = vld [vmem:[#allocation3 + $0x58] sm:$0xff]
    %v2086 = vld [vmem:[#allocation3 + $0x60] sm:$0xff]
    %v2087 = vld [vmem:[#allocation3 + $0x68] sm:$0xff]
    %v2088 = vld [vmem:[#allocation3 + $0x70] sm:$0xff]
    %v2089 = vld [vmem:[#allocation3 + $0x78] sm:$0xff]
    %v2090 = vld [vmem:[#allocation3 + $0x80] sm:$0xff]
    %v2091 = vld [vmem:[#allocation3 + $0x88] sm:$0xff]
    %v2092 = vld [vmem:[#allocation3 + $0x90] sm:$0xff]
    %v2093 = vld [vmem:[#allocation3 + $0x98] sm:$0xff]
    %v2094 = vld [vmem:[#allocation3 + $0xa0] sm:$0xff]
    %v2095 = vld [vmem:[#allocation3 + $0xa8] sm:$0xff]
    %v2096 = vld [vmem:[#allocation3 + $0xb0] sm:$0xff]
    %v2097 = vld [vmem:[#allocation3 + $0xb8] sm:$0xff]
    %v2098 = vld [vmem:[#allocation3 + $0xc0] sm:$0xff]
    %v2099 = vld [vmem:[#allocation3 + $0xc8] sm:$0xff]
    %v2100 = vld [vmem:[#allocation3 + $0xd0] sm:$0xff]
    %v2101 = vld [vmem:[#allocation3 + $0xd8] sm:$0xff]
    %v2102 = vld [vmem:[#allocation3 + $0xe0] sm:$0xff]
    %v2103 = vld [vmem:[#allocation3 + $0xe8] sm:$0xff]
    %v2104 = vld [vmem:[#allocation3 + $0xf0] sm:$0xff]
    %v2105 = vld [vmem:[#allocation3 + $0xf8] sm:$0xff]
    %v2106 = vld [vmem:[#allocation3 + $0x100] sm:$0xff]
    %v2107 = vld [vmem:[#allocation3 + $0x108] sm:$0xff]
    %v2108 = vld [vmem:[#allocation3 + $0x110] sm:$0xff]
    %v2109 = vld [vmem:[#allocation3 + $0x118] sm:$0xff]
    %v2110 = vld [vmem:[#allocation3 + $0x120] sm:$0xff]
    %v2111 = vld [vmem:[#allocation3 + $0x128] sm:$0xff]
    %v2112 = vld [vmem:[#allocation3 + $0x130] sm:$0xff]
    %v2113 = vld [vmem:[#allocation3 + $0x138] sm:$0xff]
    %v2114 = vld [vmem:[#allocation3 + $0x140] sm:$0xff]
    %v2115 = vld [vmem:[#allocation3 + $0x148] sm:$0xff]
    %v2116 = vld [vmem:[#allocation3 + $0x150] sm:$0xff]
    %v2117 = vld [vmem:[#allocation3 + $0x158] sm:$0xff]
    %v2118 = vld [vmem:[#allocation3 + $0x160] sm:$0xff]
    %v2119 = vld [vmem:[#allocation3 + $0x168] sm:$0xff]
    %v2120 = vld [vmem:[#allocation3 + $0x170] sm:$0xff]
    %v2121 = vld [vmem:[#allocation3 + $0x178] sm:$0xff]
    %v2123 = vrot.slane %v1836, 4
    %2125 = vmatprep.subr.mxu0 %v2075
    %2126 = vmatpush1.msra.mxu0 %v2074
    %2127 = vmatprep.subr.mxu0 %v2078
    %2128 = vmatpush1.msra.mxu0 %v2077
    %2129 = vmatprep.subr.mxu0 %v2081
    %2130 = vmatpush1.msra.mxu0 %v2080
    %2131 = vmatprep.subr.mxu0 %v2084
    %2132 = vmatpush1.msra.mxu0 %v2083
    %2133 = vmatprep.subr.mxu0 %v2087
    %2134 = vmatpush1.msra.mxu0 %v2086
    %2135 = vmatprep.subr.mxu0 %v2090
    %2136 = vmatpush1.msra.mxu0 %v2089
    %2137 = vmatprep.subr.mxu0 %v2093
    %2138 = vmatpush1.msra.mxu0 %v2092
    %2139 = vmatprep.subr.mxu0 %v2096
    %2140 = vmatpush1.msra.mxu0 %v2095
    %2141 = vmatprep.subr.mxu0 %v2099
    %2142 = vmatpush1.msra.mxu0 %v2098
    %2143 = vmatprep.subr.mxu0 %v2102
    %2144 = vmatpush1.msra.mxu0 %v2101
    %2145 = vmatprep.subr.mxu0 %v2105
    %2146 = vmatpush1.msra.mxu0 %v2104
    %2147 = vmatprep.subr.mxu0 %v2108
    %2148 = vmatpush1.msra.mxu0 %v2107
    %2149 = vmatprep.subr.mxu0 %v2111
    %2150 = vmatpush1.msra.mxu0 %v2110
    %2151 = vmatprep.subr.mxu0 %v2114
    %2152 = vmatpush1.msra.mxu0 %v2113
    %2153 = vmatprep.subr.mxu0 %v2117
    %2154 = vmatpush1.msra.mxu0 %v2116
    %2155 = vmatprep.subr.mxu0 %v2120
    %2156 = vmatpush1.msra.mxu0 %v2119
    %2157 = vmatprep.subr.mxu0 0.0
    %2158 = vmatpush1.msra.mxu0 0.0
    %2159 = vmatprep.subr.mxu0 0.0
    %2160 = vmatpush1.msra.mxu0 0.0
    %2161 = vmatprep.subr.mxu0 0.0
    %2162 = vmatpush1.msra.mxu0 0.0
    %2163 = vmatprep.subr.mxu0 0.0
    %2164 = vmatpush1.msra.mxu0 0.0
    %2165 = vmatprep.subr.mxu0 0.0
    %2166 = vmatpush1.msra.mxu0 0.0
    %2167 = vmatprep.subr.mxu0 0.0
    %2168 = vmatpush1.msra.mxu0 0.0
    %2169 = vmatprep.subr.mxu0 0.0
    %2170 = vmatpush1.msra.mxu0 0.0
    %2171 = vmatprep.subr.mxu0 0.0
    %2172 = vmatpush1.msra.mxu0 0.0
    %2173 = vmatprep.subr.mxu0 0.0
    %2174 = vmatpush1.msra.mxu0 0.0
    %2175 = vmatprep.subr.mxu0 0.0
    %2176 = vmatpush1.msra.mxu0 0.0
    %2177 = vmatprep.subr.mxu0 0.0
    %2178 = vmatpush1.msra.mxu0 0.0
    %2179 = vmatprep.subr.mxu0 0.0
    %2180 = vmatpush1.msra.mxu0 0.0
    %2181 = vmatprep.subr.mxu0 0.0
    %2182 = vmatpush1.msra.mxu0 0.0
    %2183 = vmatprep.subr.mxu0 0.0
    %2184 = vmatpush1.msra.mxu0 0.0
    %2185 = vmatprep.subr.mxu0 0.0
    %2186 = vmatpush1.msra.mxu0 0.0
    %2187 = vmatprep.subr.mxu0 0.0
    %2188 = vmatpush1.msra.mxu0 0.0
    %2189 = vmatprep.mubr.f32.mxu0 0.0
    %2190 = vmatmul.mubr.f32.gmra.mrb[0].mxu0 %v2123
    %v2191 = vpop.f32.mrb[0].mxu0
    %v2192 = vadd.f32 0.0, %v2191
    %v2193 = vpop.f32.mrb[0].mxu0
    %v2194 = vadd.f32 0.0, %v2193
    %2195 = vdwg.mxu0
    %2196 = vmatprep.subr.mxu0 0.0
    %2197 = vmatpush1.msra.mxu0 %v2076
    %2198 = vmatprep.subr.mxu0 0.0
    %2199 = vmatpush1.msra.mxu0 %v2079
    %2200 = vmatprep.subr.mxu0 0.0
    %2201 = vmatpush1.msra.mxu0 %v2082
    %2202 = vmatprep.subr.mxu0 0.0
    %2203 = vmatpush1.msra.mxu0 %v2085
    %2204 = vmatprep.subr.mxu0 0.0
    %2205 = vmatpush1.msra.mxu0 %v2088
    %2206 = vmatprep.subr.mxu0 0.0
    %2207 = vmatpush1.msra.mxu0 %v2091
    %2208 = vmatprep.subr.mxu0 0.0
    %2209 = vmatpush1.msra.mxu0 %v2094
    %2210 = vmatprep.subr.mxu0 0.0
    %2211 = vmatpush1.msra.mxu0 %v2097
    %2212 = vmatprep.subr.mxu0 0.0
    %2213 = vmatpush1.msra.mxu0 %v2100
    %2214 = vmatprep.subr.mxu0 0.0
    %2215 = vmatpush1.msra.mxu0 %v2103
    %2216 = vmatprep.subr.mxu0 0.0
    %2217 = vmatpush1.msra.mxu0 %v2106
    %2218 = vmatprep.subr.mxu0 0.0
    %2219 = vmatpush1.msra.mxu0 %v2109
    %2220 = vmatprep.subr.mxu0 0.0
    %2221 = vmatpush1.msra.mxu0 %v2112
    %2222 = vmatprep.subr.mxu0 0.0
    %2223 = vmatpush1.msra.mxu0 %v2115
    %2224 = vmatprep.subr.mxu0 0.0
    %2225 = vmatpush1.msra.mxu0 %v2118
    %2226 = vmatprep.subr.mxu0 0.0
    %2227 = vmatpush1.msra.mxu0 %v2121
    %2228 = vmatprep.subr.mxu0 0.0
    %2229 = vmatpush1.msra.mxu0 0.0
    %2230 = vmatprep.subr.mxu0 0.0
    %2231 = vmatpush1.msra.mxu0 0.0
    %2232 = vmatprep.subr.mxu0 0.0
    %2233 = vmatpush1.msra.mxu0 0.0
    %2234 = vmatprep.subr.mxu0 0.0
    %2235 = vmatpush1.msra.mxu0 0.0
    %2236 = vmatprep.subr.mxu0 0.0
    %2237 = vmatpush1.msra.mxu0 0.0
    %2238 = vmatprep.subr.mxu0 0.0
    %2239 = vmatpush1.msra.mxu0 0.0
    %2240 = vmatprep.subr.mxu0 0.0
    %2241 = vmatpush1.msra.mxu0 0.0
    %2242 = vmatprep.subr.mxu0 0.0
    %2243 = vmatpush1.msra.mxu0 0.0
    %2244 = vmatprep.subr.mxu0 0.0
    %2245 = vmatpush1.msra.mxu0 0.0
    %2246 = vmatprep.subr.mxu0 0.0
    %2247 = vmatpush1.msra.mxu0 0.0
    %2248 = vmatprep.subr.mxu0 0.0
    %2249 = vmatpush1.msra.mxu0 0.0
    %2250 = vmatprep.subr.mxu0 0.0
    %2251 = vmatpush1.msra.mxu0 0.0
    %2252 = vmatprep.subr.mxu0 0.0
    %2253 = vmatpush1.msra.mxu0 0.0
    %2254 = vmatprep.subr.mxu0 0.0
    %2255 = vmatpush1.msra.mxu0 0.0
    %2256 = vmatprep.subr.mxu0 0.0
    %2257 = vmatpush1.msra.mxu0 0.0
    %2258 = vmatprep.subr.mxu0 0.0
    %2259 = vmatpush1.msra.mxu0 0.0
    %2260 = vmatprep.mubr.f32.mxu0 0.0
    %2261 = vmatmul.mubr.f32.gmra.mrb[0].mxu0 %v2123
    %v2262 = vpop.f32.mrb[0].mxu0
    %v2263 = vadd.f32 0.0, %v2262
    %v2264 = vpop.f32.mrb[0].mxu0
    %2265 = vdwg.mxu0
    %v2267 = vrot.slane %v2192, 2
    %v2269 = vadd.f32 %v2068, %v2267
    %v2270 = vxor.u32 %v2269, 2147483648
    %v2271 = vmul.f32 %v2270, 1.442695
    %v2272 = vpow.pop %v2271
    %v2273 = vadd.f32 %v2272, 1.0
    %v2274 = vrcp.pop %v2273
    %v2275 = vmul.f32 1.0, %v2274
    %v2277 = vrot.slane %v2194, 2
    %v2279 = vadd.f32 %v2069, %v2277
    %v2280 = vxor.u32 %v2279, 2147483648
    %v2281 = vmul.f32 %v2280, 1.442695
    %v2282 = vpow.pop %v2281
    %v2283 = vadd.f32 %v2282, 1.0
    %v2284 = vrcp.pop %v2283
    %v2285 = vmul.f32 1.0, %v2284
    %v2286 = vadd.f32 %v2263, %v688
    %v2288 = vrot.slane %v2286, 2
    %v2290 = vmul.f32 %v2275, %v2288
    %v2291 = vadd.f32 %v2070, %v2290
    %v2292 = vtanh.pop %v2291
    %v2293 = vsub.f32 1.0, %v2285
    %v2294 = vmul.f32 %v2293, %v2292
    %v2295 = vrot.slane %v1836, 6
    %v2297 = vmul.f32 %v2285, %v2295
    %v2298 = vadd.f32 %v2294, %v2297
    %v2299 = vld [vmem:[#allocation5] sm:$0xff]
    %v2300 = vld [vmem:[#allocation5 + $0x8] sm:$0xff]
    %v2301 = vld [vmem:[#allocation5 + $0x10] sm:$0xff]
    %v2302 = vld [vmem:[#allocation5 + $0x18] sm:$0xff]
    %v2303 = vld [vmem:[#allocation5 + $0x20] sm:$0xff]
    %v2304 = vld [vmem:[#allocation5 + $0x28] sm:$0xff]
    %v2305 = vld [vmem:[#allocation5 + $0x30] sm:$0xff]
    %v2306 = vld [vmem:[#allocation5 + $0x38] sm:$0xff]
    %v2307 = vld [vmem:[#allocation5 + $0x40] sm:$0xff]
    %v2308 = vld [vmem:[#allocation5 + $0x48] sm:$0xff]
    %v2309 = vld [vmem:[#allocation5 + $0x50] sm:$0xff]
    %v2310 = vld [vmem:[#allocation5 + $0x58] sm:$0xff]
    %v2311 = vld [vmem:[#allocation5 + $0x60] sm:$0xff]
    %v2312 = vld [vmem:[#allocation5 + $0x68] sm:$0xff]
    %v2313 = vld [vmem:[#allocation5 + $0x70] sm:$0xff]
    %v2314 = vld [vmem:[#allocation5 + $0x78] sm:$0xff]
    %v2315 = vld [vmem:[#allocation5 + $0x80] sm:$0xff]
    %v2316 = vld [vmem:[#allocation5 + $0x88] sm:$0xff]
    %v2317 = vld [vmem:[#allocation5 + $0x90] sm:$0xff]
    %v2318 = vld [vmem:[#allocation5 + $0x98] sm:$0xff]
    %v2319 = vld [vmem:[#allocation5 + $0xa0] sm:$0xff]
    %v2320 = vld [vmem:[#allocation5 + $0xa8] sm:$0xff]
    %v2321 = vld [vmem:[#allocation5 + $0xb0] sm:$0xff]
    %v2322 = vld [vmem:[#allocation5 + $0xb8] sm:$0xff]
    %v2323 = vld [vmem:[#allocation5 + $0xc0] sm:$0xff]
    %v2324 = vld [vmem:[#allocation5 + $0xc8] sm:$0xff]
    %v2325 = vld [vmem:[#allocation5 + $0xd0] sm:$0xff]
    %v2326 = vld [vmem:[#allocation5 + $0xd8] sm:$0xff]
    %v2327 = vld [vmem:[#allocation5 + $0xe0] sm:$0xff]
    %v2328 = vld [vmem:[#allocation5 + $0xe8] sm:$0xff]
    %v2329 = vld [vmem:[#allocation5 + $0xf0] sm:$0xff]
    %v2330 = vld [vmem:[#allocation5 + $0xf8] sm:$0xff]
    %v2331 = vld [vmem:[#allocation5 + $0x100] sm:$0xff]
    %v2332 = vld [vmem:[#allocation5 + $0x108] sm:$0xff]
    %v2333 = vld [vmem:[#allocation5 + $0x110] sm:$0xff]
    %v2334 = vld [vmem:[#allocation5 + $0x118] sm:$0xff]
    %v2335 = vld [vmem:[#allocation5 + $0x120] sm:$0xff]
    %v2336 = vld [vmem:[#allocation5 + $0x128] sm:$0xff]
    %v2337 = vld [vmem:[#allocation5 + $0x130] sm:$0xff]
    %v2338 = vld [vmem:[#allocation5 + $0x138] sm:$0xff]
    %v2339 = vld [vmem:[#allocation5 + $0x140] sm:$0xff]
    %v2340 = vld [vmem:[#allocation5 + $0x148] sm:$0xff]
    %v2341 = vld [vmem:[#allocation5 + $0x150] sm:$0xff]
    %v2342 = vld [vmem:[#allocation5 + $0x158] sm:$0xff]
    %v2343 = vld [vmem:[#allocation5 + $0x160] sm:$0xff]
    %v2344 = vld [vmem:[#allocation5 + $0x168] sm:$0xff]
    %v2345 = vld [vmem:[#allocation5 + $0x170] sm:$0xff]
    %v2346 = vld [vmem:[#allocation5 + $0x178] sm:$0xff]
    %v2348 = vrot.slane %v2061, 2
    %2350 = vmatprep.subr.mxu0 %v2300
    %2351 = vmatpush1.msra.mxu0 %v2299
    %2352 = vmatprep.subr.mxu0 %v2303
    %2353 = vmatpush1.msra.mxu0 %v2302
    %2354 = vmatprep.subr.mxu0 %v2306
    %2355 = vmatpush1.msra.mxu0 %v2305
    %2356 = vmatprep.subr.mxu0 %v2309
    %2357 = vmatpush1.msra.mxu0 %v2308
    %2358 = vmatprep.subr.mxu0 %v2312
    %2359 = vmatpush1.msra.mxu0 %v2311
    %2360 = vmatprep.subr.mxu0 %v2315
    %2361 = vmatpush1.msra.mxu0 %v2314
    %2362 = vmatprep.subr.mxu0 %v2318
    %2363 = vmatpush1.msra.mxu0 %v2317
    %2364 = vmatprep.subr.mxu0 %v2321
    %2365 = vmatpush1.msra.mxu0 %v2320
    %2366 = vmatprep.subr.mxu0 %v2324
    %2367 = vmatpush1.msra.mxu0 %v2323
    %2368 = vmatprep.subr.mxu0 %v2327
    %2369 = vmatpush1.msra.mxu0 %v2326
    %2370 = vmatprep.subr.mxu0 %v2330
    %2371 = vmatpush1.msra.mxu0 %v2329
    %2372 = vmatprep.subr.mxu0 %v2333
    %2373 = vmatpush1.msra.mxu0 %v2332
    %2374 = vmatprep.subr.mxu0 %v2336
    %2375 = vmatpush1.msra.mxu0 %v2335
    %2376 = vmatprep.subr.mxu0 %v2339
    %2377 = vmatpush1.msra.mxu0 %v2338
    %2378 = vmatprep.subr.mxu0 %v2342
    %2379 = vmatpush1.msra.mxu0 %v2341
    %2380 = vmatprep.subr.mxu0 %v2345
    %2381 = vmatpush1.msra.mxu0 %v2344
    %2382 = vmatprep.subr.mxu0 0.0
    %2383 = vmatpush1.msra.mxu0 0.0
    %2384 = vmatprep.subr.mxu0 0.0
    %2385 = vmatpush1.msra.mxu0 0.0
    %2386 = vmatprep.subr.mxu0 0.0
    %2387 = vmatpush1.msra.mxu0 0.0
    %2388 = vmatprep.subr.mxu0 0.0
    %2389 = vmatpush1.msra.mxu0 0.0
    %2390 = vmatprep.subr.mxu0 0.0
    %2391 = vmatpush1.msra.mxu0 0.0
    %2392 = vmatprep.subr.mxu0 0.0
    %2393 = vmatpush1.msra.mxu0 0.0
    %2394 = vmatprep.subr.mxu0 0.0
    %2395 = vmatpush1.msra.mxu0 0.0
    %2396 = vmatprep.subr.mxu0 0.0
    %2397 = vmatpush1.msra.mxu0 0.0
    %2398 = vmatprep.subr.mxu0 0.0
    %2399 = vmatpush1.msra.mxu0 0.0
    %2400 = vmatprep.subr.mxu0 0.0
    %2401 = vmatpush1.msra.mxu0 0.0
    %2402 = vmatprep.subr.mxu0 0.0
    %2403 = vmatpush1.msra.mxu0 0.0
    %2404 = vmatprep.subr.mxu0 0.0
    %2405 = vmatpush1.msra.mxu0 0.0
    %2406 = vmatprep.subr.mxu0 0.0
    %2407 = vmatpush1.msra.mxu0 0.0
    %2408 = vmatprep.subr.mxu0 0.0
    %2409 = vmatpush1.msra.mxu0 0.0
    %2410 = vmatprep.subr.mxu0 0.0
    %2411 = vmatpush1.msra.mxu0 0.0
    %2412 = vmatprep.subr.mxu0 0.0
    %2413 = vmatpush1.msra.mxu0 0.0
    %2414 = vmatprep.mubr.f32.mxu0 0.0
    %2415 = vmatmul.mubr.f32.gmra.mrb[0].mxu0 %v2348
    %v2416 = vpop.f32.mrb[0].mxu0
    %v2417 = vadd.f32 0.0, %v2416
    %v2418 = vpop.f32.mrb[0].mxu0
    %v2419 = vadd.f32 0.0, %v2418
    %2420 = vdwg.mxu0
    %2421 = vmatprep.subr.mxu0 0.0
    %2422 = vmatpush1.msra.mxu0 %v2301
    %2423 = vmatprep.subr.mxu0 0.0
    %2424 = vmatpush1.msra.mxu0 %v2304
    %2425 = vmatprep.subr.mxu0 0.0
    %2426 = vmatpush1.msra.mxu0 %v2307
    %2427 = vmatprep.subr.mxu0 0.0
    %2428 = vmatpush1.msra.mxu0 %v2310
    %2429 = vmatprep.subr.mxu0 0.0
    %2430 = vmatpush1.msra.mxu0 %v2313
    %2431 = vmatprep.subr.mxu0 0.0
    %2432 = vmatpush1.msra.mxu0 %v2316
    %2433 = vmatprep.subr.mxu0 0.0
    %2434 = vmatpush1.msra.mxu0 %v2319
    %2435 = vmatprep.subr.mxu0 0.0
    %2436 = vmatpush1.msra.mxu0 %v2322
    %2437 = vmatprep.subr.mxu0 0.0
    %2438 = vmatpush1.msra.mxu0 %v2325
    %2439 = vmatprep.subr.mxu0 0.0
    %2440 = vmatpush1.msra.mxu0 %v2328
    %2441 = vmatprep.subr.mxu0 0.0
    %2442 = vmatpush1.msra.mxu0 %v2331
    %2443 = vmatprep.subr.mxu0 0.0
    %2444 = vmatpush1.msra.mxu0 %v2334
    %2445 = vmatprep.subr.mxu0 0.0
    %2446 = vmatpush1.msra.mxu0 %v2337
    %2447 = vmatprep.subr.mxu0 0.0
    %2448 = vmatpush1.msra.mxu0 %v2340
    %2449 = vmatprep.subr.mxu0 0.0
    %2450 = vmatpush1.msra.mxu0 %v2343
    %2451 = vmatprep.subr.mxu0 0.0
    %2452 = vmatpush1.msra.mxu0 %v2346
    %2453 = vmatprep.subr.mxu0 0.0
    %2454 = vmatpush1.msra.mxu0 0.0
    %2455 = vmatprep.subr.mxu0 0.0
    %2456 = vmatpush1.msra.mxu0 0.0
    %2457 = vmatprep.subr.mxu0 0.0
    %2458 = vmatpush1.msra.mxu0 0.0
    %2459 = vmatprep.subr.mxu0 0.0
    %2460 = vmatpush1.msra.mxu0 0.0
    %2461 = vmatprep.subr.mxu0 0.0
    %2462 = vmatpush1.msra.mxu0 0.0
    %2463 = vmatprep.subr.mxu0 0.0
    %2464 = vmatpush1.msra.mxu0 0.0
    %2465 = vmatprep.subr.mxu0 0.0
    %2466 = vmatpush1.msra.mxu0 0.0
    %2467 = vmatprep.subr.mxu0 0.0
    %2468 = vmatpush1.msra.mxu0 0.0
    %2469 = vmatprep.subr.mxu0 0.0
    %2470 = vmatpush1.msra.mxu0 0.0
    %2471 = vmatprep.subr.mxu0 0.0
    %2472 = vmatpush1.msra.mxu0 0.0
    %2473 = vmatprep.subr.mxu0 0.0
    %2474 = vmatpush1.msra.mxu0 0.0
    %2475 = vmatprep.subr.mxu0 0.0
    %2476 = vmatpush1.msra.mxu0 0.0
    %2477 = vmatprep.subr.mxu0 0.0
    %2478 = vmatpush1.msra.mxu0 0.0
    %2479 = vmatprep.subr.mxu0 0.0
    %2480 = vmatpush1.msra.mxu0 0.0
    %2481 = vmatprep.subr.mxu0 0.0
    %2482 = vmatpush1.msra.mxu0 0.0
    %2483 = vmatprep.subr.mxu0 0.0
    %2484 = vmatpush1.msra.mxu0 0.0
    %2485 = vmatprep.mubr.f32.mxu0 0.0
    %2486 = vmatmul.mubr.f32.gmra.mrb[0].mxu0 %v2348
    %v2487 = vpop.f32.mrb[0].mxu0
    %v2488 = vadd.f32 0.0, %v2487
    %v2489 = vpop.f32.mrb[0].mxu0
    %2490 = vdwg.mxu0
    %v2491 = vadd.f32 %v2071, %v2417
    %v2492 = vxor.u32 %v2491, 2147483648
    %v2493 = vmul.f32 %v2492, 1.442695
    %v2494 = vpow.pop %v2493
    %v2495 = vadd.f32 %v2494, 1.0
    %v2496 = vrcp.pop %v2495
    %v2497 = vmul.f32 1.0, %v2496
    %v2498 = vadd.f32 %v2072, %v2419
    %v2499 = vxor.u32 %v2498, 2147483648
    %v2500 = vmul.f32 %v2499, 1.442695
    %v2501 = vpow.pop %v2500
    %v2502 = vadd.f32 %v2501, 1.0
    %v2503 = vrcp.pop %v2502
    %v2504 = vmul.f32 1.0, %v2503
    %v2505 = vadd.f32 %v2488, %v695
    %v2506 = vmul.f32 %v2497, %v2505
    %v2507 = vadd.f32 %v2073, %v2506
    %v2508 = vtanh.pop %v2507
    %v2509 = vsub.f32 1.0, %v2504
    %v2510 = vmul.f32 %v2509, %v2508
    %v2511 = vmul.f32 %v2504, %v2348
    %v2512 = vadd.f32 %v2510, %v2511
    %v2513 = vmax.f32 %v2298, -5.0
    %v2514 = vmin.f32 %v2513, 5.0
    %2515 = vst [vmem:[%s15] sm:$0xc0] %v2514
    %v2516 = vmax.f32 %v2512, -5.0
    %v2517 = vmin.f32 %v2516, 5.0
    %2518 = vst [vmem:[%s15 + $0x18] sm:$0x3] %v2517
    %v2519 = vld [vmem:[#allocation2 + $0x30] sm:$0x3]
    %v2520 = vld [vmem:[#allocation2 + $0x38] sm:$0x3]
    %v2521 = vld [vmem:[#allocation2 + $0x40] sm:$0x3]
    %v2522 = vld [vmem:[#allocation2 + $0x18] sm:$0xc0]
    %v2523 = vld [vmem:[#allocation2 + $0x20] sm:$0xc0]
    %v2524 = vld [vmem:[#allocation2 + $0x28] sm:$0xc0]
    %v2525 = vld [vmem:[#allocation3] sm:$0xff]
    %v2526 = vld [vmem:[#allocation3 + $0x8] sm:$0xff]
    %v2527 = vld [vmem:[#allocation3 + $0x10] sm:$0xff]
    %v2528 = vld [vmem:[#allocation3 + $0x18] sm:$0xff]
    %v2529 = vld [vmem:[#allocation3 + $0x20] sm:$0xff]
    %v2530 = vld [vmem:[#allocation3 + $0x28] sm:$0xff]
    %v2531 = vld [vmem:[#allocation3 + $0x30] sm:$0xff]
    %v2532 = vld [vmem:[#allocation3 + $0x38] sm:$0xff]
    %v2533 = vld [vmem:[#allocation3 + $0x40] sm:$0xff]
    %v2534 = vld [vmem:[#allocation3 + $0x48] sm:$0xff]
    %v2535 = vld [vmem:[#allocation3 + $0x50] sm:$0xff]
    %v2536 = vld [vmem:[#allocation3 + $0x58] sm:$0xff]
    %v2537 = vld [vmem:[#allocation3 + $0x60] sm:$0xff]
    %v2538 = vld [vmem:[#allocation3 + $0x68] sm:$0xff]
    %v2539 = vld [vmem:[#allocation3 + $0x70] sm:$0xff]
    %v2540 = vld [vmem:[#allocation3 + $0x78] sm:$0xff]
    %v2541 = vld [vmem:[#allocation3 + $0x80] sm:$0xff]
    %v2542 = vld [vmem:[#allocation3 + $0x88] sm:$0xff]
    %v2543 = vld [vmem:[#allocation3 + $0x90] sm:$0xff]
    %v2544 = vld [vmem:[#allocation3 + $0x98] sm:$0xff]
    %v2545 = vld [vmem:[#allocation3 + $0xa0] sm:$0xff]
    %v2546 = vld [vmem:[#allocation3 + $0xa8] sm:$0xff]
    %v2547 = vld [vmem:[#allocation3 + $0xb0] sm:$0xff]
    %v2548 = vld [vmem:[#allocation3 + $0xb8] sm:$0xff]
    %v2549 = vld [vmem:[#allocation3 + $0xc0] sm:$0xff]
    %v2550 = vld [vmem:[#allocation3 + $0xc8] sm:$0xff]
    %v2551 = vld [vmem:[#allocation3 + $0xd0] sm:$0xff]
    %v2552 = vld [vmem:[#allocation3 + $0xd8] sm:$0xff]
    %v2553 = vld [vmem:[#allocation3 + $0xe0] sm:$0xff]
    %v2554 = vld [vmem:[#allocation3 + $0xe8] sm:$0xff]
    %v2555 = vld [vmem:[#allocation3 + $0xf0] sm:$0xff]
    %v2556 = vld [vmem:[#allocation3 + $0xf8] sm:$0xff]
    %v2557 = vld [vmem:[#allocation3 + $0x100] sm:$0xff]
    %v2558 = vld [vmem:[#allocation3 + $0x108] sm:$0xff]
    %v2559 = vld [vmem:[#allocation3 + $0x110] sm:$0xff]
    %v2560 = vld [vmem:[#allocation3 + $0x118] sm:$0xff]
    %v2561 = vld [vmem:[#allocation3 + $0x120] sm:$0xff]
    %v2562 = vld [vmem:[#allocation3 + $0x128] sm:$0xff]
    %v2563 = vld [vmem:[#allocation3 + $0x130] sm:$0xff]
    %v2564 = vld [vmem:[#allocation3 + $0x138] sm:$0xff]
    %v2565 = vld [vmem:[#allocation3 + $0x140] sm:$0xff]
    %v2566 = vld [vmem:[#allocation3 + $0x148] sm:$0xff]
    %v2567 = vld [vmem:[#allocation3 + $0x150] sm:$0xff]
    %v2568 = vld [vmem:[#allocation3 + $0x158] sm:$0xff]
    %v2569 = vld [vmem:[#allocation3 + $0x160] sm:$0xff]
    %v2570 = vld [vmem:[#allocation3 + $0x168] sm:$0xff]
    %v2571 = vld [vmem:[#allocation3 + $0x170] sm:$0xff]
    %v2572 = vld [vmem:[#allocation3 + $0x178] sm:$0xff]
    %v2574 = vrot.slane %v2298, 6
    %2576 = vmatprep.subr.mxu0 %v2526
    %2577 = vmatpush1.msra.mxu0 %v2525
    %2578 = vmatprep.subr.mxu0 %v2529
    %2579 = vmatpush1.msra.mxu0 %v2528
    %2580 = vmatprep.subr.mxu0 %v2532
    %2581 = vmatpush1.msra.mxu0 %v2531
    %2582 = vmatprep.subr.mxu0 %v2535
    %2583 = vmatpush1.msra.mxu0 %v2534
    %2584 = vmatprep.subr.mxu0 %v2538
    %2585 = vmatpush1.msra.mxu0 %v2537
    %2586 = vmatprep.subr.mxu0 %v2541
    %2587 = vmatpush1.msra.mxu0 %v2540
    %2588 = vmatprep.subr.mxu0 %v2544
    %2589 = vmatpush1.msra.mxu0 %v2543
    %2590 = vmatprep.subr.mxu0 %v2547
    %2591 = vmatpush1.msra.mxu0 %v2546
    %2592 = vmatprep.subr.mxu0 %v2550
    %2593 = vmatpush1.msra.mxu0 %v2549
    %2594 = vmatprep.subr.mxu0 %v2553
    %2595 = vmatpush1.msra.mxu0 %v2552
    %2596 = vmatprep.subr.mxu0 %v2556
    %2597 = vmatpush1.msra.mxu0 %v2555
    %2598 = vmatprep.subr.mxu0 %v2559
    %2599 = vmatpush1.msra.mxu0 %v2558
    %2600 = vmatprep.subr.mxu0 %v2562
    %2601 = vmatpush1.msra.mxu0 %v2561
    %2602 = vmatprep.subr.mxu0 %v2565
    %2603 = vmatpush1.msra.mxu0 %v2564
    %2604 = vmatprep.subr.mxu0 %v2568
    %2605 = vmatpush1.msra.mxu0 %v2567
    %2606 = vmatprep.subr.mxu0 %v2571
    %2607 = vmatpush1.msra.mxu0 %v2570
    %2608 = vmatprep.subr.mxu0 0.0
    %2609 = vmatpush1.msra.mxu0 0.0
    %2610 = vmatprep.subr.mxu0 0.0
    %2611 = vmatpush1.msra.mxu0 0.0
    %2612 = vmatprep.subr.mxu0 0.0
    %2613 = vmatpush1.msra.mxu0 0.0
    %2614 = vmatprep.subr.mxu0 0.0
    %2615 = vmatpush1.msra.mxu0 0.0
    %2616 = vmatprep.subr.mxu0 0.0
    %2617 = vmatpush1.msra.mxu0 0.0
    %2618 = vmatprep.subr.mxu0 0.0
    %2619 = vmatpush1.msra.mxu0 0.0
    %2620 = vmatprep.subr.mxu0 0.0
    %2621 = vmatpush1.msra.mxu0 0.0
    %2622 = vmatprep.subr.mxu0 0.0
    %2623 = vmatpush1.msra.mxu0 0.0
    %2624 = vmatprep.subr.mxu0 0.0
    %2625 = vmatpush1.msra.mxu0 0.0
    %2626 = vmatprep.subr.mxu0 0.0
    %2627 = vmatpush1.msra.mxu0 0.0
    %2628 = vmatprep.subr.mxu0 0.0
    %2629 = vmatpush1.msra.mxu0 0.0
    %2630 = vmatprep.subr.mxu0 0.0
    %2631 = vmatpush1.msra.mxu0 0.0
    %2632 = vmatprep.subr.mxu0 0.0
    %2633 = vmatpush1.msra.mxu0 0.0
    %2634 = vmatprep.subr.mxu0 0.0
    %2635 = vmatpush1.msra.mxu0 0.0
    %2636 = vmatprep.subr.mxu0 0.0
    %2637 = vmatpush1.msra.mxu0 0.0
    %2638 = vmatprep.subr.mxu0 0.0
    %2639 = vmatpush1.msra.mxu0 0.0
    %2640 = vmatprep.mubr.f32.mxu0 0.0
    %2641 = vmatmul.mubr.f32.gmra.mrb[0].mxu0 %v2574
    %v2642 = vpop.f32.mrb[0].mxu0
    %v2643 = vadd.f32 0.0, %v2642
    %v2644 = vpop.f32.mrb[0].mxu0
    %v2645 = vadd.f32 0.0, %v2644
    %2646 = vdwg.mxu0
    %2647 = vmatprep.subr.mxu0 0.0
    %2648 = vmatpush1.msra.mxu0 %v2527
    %2649 = vmatprep.subr.mxu0 0.0
    %2650 = vmatpush1.msra.mxu0 %v2530
    %2651 = vmatprep.subr.mxu0 0.0
    %2652 = vmatpush1.msra.mxu0 %v2533
    %2653 = vmatprep.subr.mxu0 0.0
    %2654 = vmatpush1.msra.mxu0 %v2536
    %2655 = vmatprep.subr.mxu0 0.0
    %2656 = vmatpush1.msra.mxu0 %v2539
    %2657 = vmatprep.subr.mxu0 0.0
    %2658 = vmatpush1.msra.mxu0 %v2542
    %2659 = vmatprep.subr.mxu0 0.0
    %2660 = vmatpush1.msra.mxu0 %v2545
    %2661 = vmatprep.subr.mxu0 0.0
    %2662 = vmatpush1.msra.mxu0 %v2548
    %2663 = vmatprep.subr.mxu0 0.0
    %2664 = vmatpush1.msra.mxu0 %v2551
    %2665 = vmatprep.subr.mxu0 0.0
    %2666 = vmatpush1.msra.mxu0 %v2554
    %2667 = vmatprep.subr.mxu0 0.0
    %2668 = vmatpush1.msra.mxu0 %v2557
    %2669 = vmatprep.subr.mxu0 0.0
    %2670 = vmatpush1.msra.mxu0 %v2560
    %2671 = vmatprep.subr.mxu0 0.0
    %2672 = vmatpush1.msra.mxu0 %v2563
    %2673 = vmatprep.subr.mxu0 0.0
    %2674 = vmatpush1.msra.mxu0 %v2566
    %2675 = vmatprep.subr.mxu0 0.0
    %2676 = vmatpush1.msra.mxu0 %v2569
    %2677 = vmatprep.subr.mxu0 0.0
    %2678 = vmatpush1.msra.mxu0 %v2572
    %2679 = vmatprep.subr.mxu0 0.0
    %2680 = vmatpush1.msra.mxu0 0.0
    %2681 = vmatprep.subr.mxu0 0.0
    %2682 = vmatpush1.msra.mxu0 0.0
    %2683 = vmatprep.subr.mxu0 0.0
    %2684 = vmatpush1.msra.mxu0 0.0
    %2685 = vmatprep.subr.mxu0 0.0
    %2686 = vmatpush1.msra.mxu0 0.0
    %2687 = vmatprep.subr.mxu0 0.0
    %2688 = vmatpush1.msra.mxu0 0.0
    %2689 = vmatprep.subr.mxu0 0.0
    %2690 = vmatpush1.msra.mxu0 0.0
    %2691 = vmatprep.subr.mxu0 0.0
    %2692 = vmatpush1.msra.mxu0 0.0
    %2693 = vmatprep.subr.mxu0 0.0
    %2694 = vmatpush1.msra.mxu0 0.0
    %2695 = vmatprep.subr.mxu0 0.0
    %2696 = vmatpush1.msra.mxu0 0.0
    %2697 = vmatprep.subr.mxu0 0.0
    %2698 = vmatpush1.msra.mxu0 0.0
    %2699 = vmatprep.subr.mxu0 0.0
    %2700 = vmatpush1.msra.mxu0 0.0
    %2701 = vmatprep.subr.mxu0 0.0
    %2702 = vmatpush1.msra.mxu0 0.0
    %2703 = vmatprep.subr.mxu0 0.0
    %2704 = vmatpush1.msra.mxu0 0.0
    %2705 = vmatprep.subr.mxu0 0.0
    %2706 = vmatpush1.msra.mxu0 0.0
    %2707 = vmatprep.subr.mxu0 0.0
    %2708 = vmatpush1.msra.mxu0 0.0
    %2709 = vmatprep.subr.mxu0 0.0
    %2710 = vmatpush1.msra.mxu0 0.0
    %2711 = vmatprep.mubr.f32.mxu0 0.0
    %2712 = vmatmul.mubr.f32.gmra.mrb[0].mxu0 %v2574
    %v2713 = vpop.f32.mrb[0].mxu0
    %v2714 = vadd.f32 0.0, %v2713
    %v2715 = vpop.f32.mrb[0].mxu0
    %2716 = vdwg.mxu0
    %v2717 = vadd.f32 %v2519, %v2643
    %v2718 = vxor.u32 %v2717, 2147483648
    %v2719 = vmul.f32 %v2718, 1.442695
    %v2720 = vpow.pop %v2719
    %v2721 = vadd.f32 %v2720, 1.0
    %v2722 = vrcp.pop %v2721
    %v2723 = vmul.f32 1.0, %v2722
    %v2724 = vadd.f32 %v2520, %v2645
    %v2725 = vxor.u32 %v2724, 2147483648
    %v2726 = vmul.f32 %v2725, 1.442695
    %v2727 = vpow.pop %v2726
    %v2728 = vadd.f32 %v2727, 1.0
    %v2729 = vrcp.pop %v2728
    %v2730 = vmul.f32 1.0, %v2729
    %v2731 = vadd.f32 %v2714, %v688
    %v2732 = vmul.f32 %v2723, %v2731
    %v2733 = vadd.f32 %v2521, %v2732
    %v2734 = vtanh.pop %v2733
    %v2735 = vsub.f32 1.0, %v2730
    %v2736 = vmul.f32 %v2735, %v2734
    %v2737 = vmul.f32 %v2730, %v2574
    %v2738 = vadd.f32 %v2736, %v2737
    %v2739 = vld [vmem:[#allocation5] sm:$0xff]
    %v2740 = vld [vmem:[#allocation5 + $0x8] sm:$0xff]
    %v2741 = vld [vmem:[#allocation5 + $0x10] sm:$0xff]
    %v2742 = vld [vmem:[#allocation5 + $0x18] sm:$0xff]
    %v2743 = vld [vmem:[#allocation5 + $0x20] sm:$0xff]
    %v2744 = vld [vmem:[#allocation5 + $0x28] sm:$0xff]
    %v2745 = vld [vmem:[#allocation5 + $0x30] sm:$0xff]
    %v2746 = vld [vmem:[#allocation5 + $0x38] sm:$0xff]
    %v2747 = vld [vmem:[#allocation5 + $0x40] sm:$0xff]
    %v2748 = vld [vmem:[#allocation5 + $0x48] sm:$0xff]
    %v2749 = vld [vmem:[#allocation5 + $0x50] sm:$0xff]
    %v2750 = vld [vmem:[#allocation5 + $0x58] sm:$0xff]
    %v2751 = vld [vmem:[#allocation5 + $0x60] sm:$0xff]
    %v2752 = vld [vmem:[#allocation5 + $0x68] sm:$0xff]
    %v2753 = vld [vmem:[#allocation5 + $0x70] sm:$0xff]
    %v2754 = vld [vmem:[#allocation5 + $0x78] sm:$0xff]
    %v2755 = vld [vmem:[#allocation5 + $0x80] sm:$0xff]
    %v2756 = vld [vmem:[#allocation5 + $0x88] sm:$0xff]
    %v2757 = vld [vmem:[#allocation5 + $0x90] sm:$0xff]
    %v2758 = vld [vmem:[#allocation5 + $0x98] sm:$0xff]
    %v2759 = vld [vmem:[#allocation5 + $0xa0] sm:$0xff]
    %v2760 = vld [vmem:[#allocation5 + $0xa8] sm:$0xff]
    %v2761 = vld [vmem:[#allocation5 + $0xb0] sm:$0xff]
    %v2762 = vld [vmem:[#allocation5 + $0xb8] sm:$0xff]
    %v2763 = vld [vmem:[#allocation5 + $0xc0] sm:$0xff]
    %v2764 = vld [vmem:[#allocation5 + $0xc8] sm:$0xff]
    %v2765 = vld [vmem:[#allocation5 + $0xd0] sm:$0xff]
    %v2766 = vld [vmem:[#allocation5 + $0xd8] sm:$0xff]
    %v2767 = vld [vmem:[#allocation5 + $0xe0] sm:$0xff]
    %v2768 = vld [vmem:[#allocation5 + $0xe8] sm:$0xff]
    %v2769 = vld [vmem:[#allocation5 + $0xf0] sm:$0xff]
    %v2770 = vld [vmem:[#allocation5 + $0xf8] sm:$0xff]
    %v2771 = vld [vmem:[#allocation5 + $0x100] sm:$0xff]
    %v2772 = vld [vmem:[#allocation5 + $0x108] sm:$0xff]
    %v2773 = vld [vmem:[#allocation5 + $0x110] sm:$0xff]
    %v2774 = vld [vmem:[#allocation5 + $0x118] sm:$0xff]
    %v2775 = vld [vmem:[#allocation5 + $0x120] sm:$0xff]
    %v2776 = vld [vmem:[#allocation5 + $0x128] sm:$0xff]
    %v2777 = vld [vmem:[#allocation5 + $0x130] sm:$0xff]
    %v2778 = vld [vmem:[#allocation5 + $0x138] sm:$0xff]
    %v2779 = vld [vmem:[#allocation5 + $0x140] sm:$0xff]
    %v2780 = vld [vmem:[#allocation5 + $0x148] sm:$0xff]
    %v2781 = vld [vmem:[#allocation5 + $0x150] sm:$0xff]
    %v2782 = vld [vmem:[#allocation5 + $0x158] sm:$0xff]
    %v2783 = vld [vmem:[#allocation5 + $0x160] sm:$0xff]
    %v2784 = vld [vmem:[#allocation5 + $0x168] sm:$0xff]
    %v2785 = vld [vmem:[#allocation5 + $0x170] sm:$0xff]
    %v2786 = vld [vmem:[#allocation5 + $0x178] sm:$0xff]
    %2787 = vmatprep.subr.mxu0 %v2740
    %2788 = vmatpush1.msra.mxu0 %v2739
    %2789 = vmatprep.subr.mxu0 %v2743
    %2790 = vmatpush1.msra.mxu0 %v2742
    %2791 = vmatprep.subr.mxu0 %v2746
    %2792 = vmatpush1.msra.mxu0 %v2745
    %2793 = vmatprep.subr.mxu0 %v2749
    %2794 = vmatpush1.msra.mxu0 %v2748
    %2795 = vmatprep.subr.mxu0 %v2752
    %2796 = vmatpush1.msra.mxu0 %v2751
    %2797 = vmatprep.subr.mxu0 %v2755
    %2798 = vmatpush1.msra.mxu0 %v2754
    %2799 = vmatprep.subr.mxu0 %v2758
    %2800 = vmatpush1.msra.mxu0 %v2757
    %2801 = vmatprep.subr.mxu0 %v2761
    %2802 = vmatpush1.msra.mxu0 %v2760
    %2803 = vmatprep.subr.mxu0 %v2764
    %2804 = vmatpush1.msra.mxu0 %v2763
    %2805 = vmatprep.subr.mxu0 %v2767
    %2806 = vmatpush1.msra.mxu0 %v2766
    %2807 = vmatprep.subr.mxu0 %v2770
    %2808 = vmatpush1.msra.mxu0 %v2769
    %2809 = vmatprep.subr.mxu0 %v2773
    %2810 = vmatpush1.msra.mxu0 %v2772
    %2811 = vmatprep.subr.mxu0 %v2776
    %2812 = vmatpush1.msra.mxu0 %v2775
    %2813 = vmatprep.subr.mxu0 %v2779
    %2814 = vmatpush1.msra.mxu0 %v2778
    %2815 = vmatprep.subr.mxu0 %v2782
    %2816 = vmatpush1.msra.mxu0 %v2781
    %2817 = vmatprep.subr.mxu0 %v2785
    %2818 = vmatpush1.msra.mxu0 %v2784
    %2819 = vmatprep.subr.mxu0 0.0
    %2820 = vmatpush1.msra.mxu0 0.0
    %2821 = vmatprep.subr.mxu0 0.0
    %2822 = vmatpush1.msra.mxu0 0.0
    %2823 = vmatprep.subr.mxu0 0.0
    %2824 = vmatpush1.msra.mxu0 0.0
    %2825 = vmatprep.subr.mxu0 0.0
    %2826 = vmatpush1.msra.mxu0 0.0
    %2827 = vmatprep.subr.mxu0 0.0
    %2828 = vmatpush1.msra.mxu0 0.0
    %2829 = vmatprep.subr.mxu0 0.0
    %2830 = vmatpush1.msra.mxu0 0.0
    %2831 = vmatprep.subr.mxu0 0.0
    %2832 = vmatpush1.msra.mxu0 0.0
    %2833 = vmatprep.subr.mxu0 0.0
    %2834 = vmatpush1.msra.mxu0 0.0
    %2835 = vmatprep.subr.mxu0 0.0
    %2836 = vmatpush1.msra.mxu0 0.0
    %2837 = vmatprep.subr.mxu0 0.0
    %2838 = vmatpush1.msra.mxu0 0.0
    %2839 = vmatprep.subr.mxu0 0.0
    %2840 = vmatpush1.msra.mxu0 0.0
    %2841 = vmatprep.subr.mxu0 0.0
    %2842 = vmatpush1.msra.mxu0 0.0
    %2843 = vmatprep.subr.mxu0 0.0
    %2844 = vmatpush1.msra.mxu0 0.0
    %2845 = vmatprep.subr.mxu0 0.0
    %2846 = vmatpush1.msra.mxu0 0.0
    %2847 = vmatprep.subr.mxu0 0.0
    %2848 = vmatpush1.msra.mxu0 0.0
    %2849 = vmatprep.subr.mxu0 0.0
    %2850 = vmatpush1.msra.mxu0 0.0
    %2851 = vmatprep.mubr.f32.mxu0 0.0
    %2852 = vmatmul.mubr.f32.gmra.mrb[0].mxu0 %v2512
    %v2853 = vpop.f32.mrb[0].mxu0
    %v2854 = vadd.f32 0.0, %v2853
    %v2855 = vpop.f32.mrb[0].mxu0
    %v2856 = vadd.f32 0.0, %v2855
    %2857 = vdwg.mxu0
    %2858 = vmatprep.subr.mxu0 0.0
    %2859 = vmatpush1.msra.mxu0 %v2741
    %2860 = vmatprep.subr.mxu0 0.0
    %2861 = vmatpush1.msra.mxu0 %v2744
    %2862 = vmatprep.subr.mxu0 0.0
    %2863 = vmatpush1.msra.mxu0 %v2747
    %2864 = vmatprep.subr.mxu0 0.0
    %2865 = vmatpush1.msra.mxu0 %v2750
    %2866 = vmatprep.subr.mxu0 0.0
    %2867 = vmatpush1.msra.mxu0 %v2753
    %2868 = vmatprep.subr.mxu0 0.0
    %2869 = vmatpush1.msra.mxu0 %v2756
    %2870 = vmatprep.subr.mxu0 0.0
    %2871 = vmatpush1.msra.mxu0 %v2759
    %2872 = vmatprep.subr.mxu0 0.0
    %2873 = vmatpush1.msra.mxu0 %v2762
    %2874 = vmatprep.subr.mxu0 0.0
    %2875 = vmatpush1.msra.mxu0 %v2765
    %2876 = vmatprep.subr.mxu0 0.0
    %2877 = vmatpush1.msra.mxu0 %v2768
    %2878 = vmatprep.subr.mxu0 0.0
    %2879 = vmatpush1.msra.mxu0 %v2771
    %2880 = vmatprep.subr.mxu0 0.0
    %2881 = vmatpush1.msra.mxu0 %v2774
    %2882 = vmatprep.subr.mxu0 0.0
    %2883 = vmatpush1.msra.mxu0 %v2777
    %2884 = vmatprep.subr.mxu0 0.0
    %2885 = vmatpush1.msra.mxu0 %v2780
    %2886 = vmatprep.subr.mxu0 0.0
    %2887 = vmatpush1.msra.mxu0 %v2783
    %2888 = vmatprep.subr.mxu0 0.0
    %2889 = vmatpush1.msra.mxu0 %v2786
    %2890 = vmatprep.subr.mxu0 0.0
    %2891 = vmatpush1.msra.mxu0 0.0
    %2892 = vmatprep.subr.mxu0 0.0
    %2893 = vmatpush1.msra.mxu0 0.0
    %2894 = vmatprep.subr.mxu0 0.0
    %2895 = vmatpush1.msra.mxu0 0.0
    %2896 = vmatprep.subr.mxu0 0.0
    %2897 = vmatpush1.msra.mxu0 0.0
    %2898 = vmatprep.subr.mxu0 0.0
    %2899 = vmatpush1.msra.mxu0 0.0
    %2900 = vmatprep.subr.mxu0 0.0
    %2901 = vmatpush1.msra.mxu0 0.0
    %2902 = vmatprep.subr.mxu0 0.0
    %2903 = vmatpush1.msra.mxu0 0.0
    %2904 = vmatprep.subr.mxu0 0.0
    %2905 = vmatpush1.msra.mxu0 0.0
    %2906 = vmatprep.subr.mxu0 0.0
    %2907 = vmatpush1.msra.mxu0 0.0
    %2908 = vmatprep.subr.mxu0 0.0
    %2909 = vmatpush1.msra.mxu0 0.0
    %2910 = vmatprep.subr.mxu0 0.0
    %2911 = vmatpush1.msra.mxu0 0.0
    %2912 = vmatprep.subr.mxu0 0.0
    %2913 = vmatpush1.msra.mxu0 0.0
    %2914 = vmatprep.subr.mxu0 0.0
    %2915 = vmatpush1.msra.mxu0 0.0
    %2916 = vmatprep.subr.mxu0 0.0
    %2917 = vmatpush1.msra.mxu0 0.0
    %2918 = vmatprep.subr.mxu0 0.0
    %2919 = vmatpush1.msra.mxu0 0.0
    %2920 = vmatprep.subr.mxu0 0.0
    %2921 = vmatpush1.msra.mxu0 0.0
    %2922 = vmatprep.mubr.f32.mxu0 0.0
    %2923 = vmatmul.mubr.f32.gmra.mrb[0].mxu0 %v2512
    %v2924 = vpop.f32.mrb[0].mxu0
    %v2925 = vadd.f32 0.0, %v2924
    %v2926 = vpop.f32.mrb[0].mxu0
    %2927 = vdwg.mxu0
    %v2929 = vrot.slane %v2854, 2
    %v2931 = vadd.f32 %v2522, %v2929
    %v2932 = vxor.u32 %v2931, 2147483648
    %v2933 = vmul.f32 %v2932, 1.442695
    %v2934 = vpow.pop %v2933
    %v2935 = vadd.f32 %v2934, 1.0
    %v2936 = vrcp.pop %v2935
    %v2937 = vmul.f32 1.0, %v2936
    %v2939 = vrot.slane %v2856, 2
    %v2941 = vadd.f32 %v2523, %v2939
    %v2942 = vxor.u32 %v2941, 2147483648
    %v2943 = vmul.f32 %v2942, 1.442695
    %v2944 = vpow.pop %v2943
    %v2945 = vadd.f32 %v2944, 1.0
    %v2946 = vrcp.pop %v2945
    %v2947 = vmul.f32 1.0, %v2946
    %v2948 = vadd.f32 %v2925, %v695
    %v2950 = vrot.slane %v2948, 2
    %v2952 = vmul.f32 %v2937, %v2950
    %v2953 = vadd.f32 %v2524, %v2952
    %v2954 = vtanh.pop %v2953
    %v2955 = vsub.f32 1.0, %v2947
    %v2956 = vmul.f32 %v2955, %v2954
    %v2958 = vrot.slane %v2512, 2
    %v2960 = vmul.f32 %v2947, %v2958
    %v2961 = vadd.f32 %v2956, %v2960
    %v2962 = vmax.f32 %v2738, -5.0
    %v2963 = vmin.f32 %v2962, 5.0
    %2964 = vst [vmem:[%s15 + $0x10] sm:$0x3] %v2963
    %v2965 = vmax.f32 %v2961, -5.0
    %v2966 = vmin.f32 %v2965, 5.0
    %2967 = vst [vmem:[%s15 + $0x8] sm:$0xc0] %v2966
    %v2968 = vld [vmem:[#allocation2 + $0x30] sm:$0xc]
    %v2969 = vld [vmem:[#allocation2 + $0x38] sm:$0xc]
    %v2970 = vld [vmem:[#allocation2 + $0x40] sm:$0xc]
    %v2971 = vld [vmem:[#allocation2 + $0x18] sm:$0x30]
    %v2972 = vld [vmem:[#allocation2 + $0x20] sm:$0x30]
    %v2973 = vld [vmem:[#allocation2 + $0x28] sm:$0x30]
    %v2974 = vld [vmem:[#allocation3] sm:$0xff]
    %v2975 = vld [vmem:[#allocation3 + $0x8] sm:$0xff]
    %v2976 = vld [vmem:[#allocation3 + $0x10] sm:$0xff]
    %v2977 = vld [vmem:[#allocation3 + $0x18] sm:$0xff]
    %v2978 = vld [vmem:[#allocation3 + $0x20] sm:$0xff]
    %v2979 = vld [vmem:[#allocation3 + $0x28] sm:$0xff]
    %v2980 = vld [vmem:[#allocation3 + $0x30] sm:$0xff]
    %v2981 = vld [vmem:[#allocation3 + $0x38] sm:$0xff]
    %v2982 = vld [vmem:[#allocation3 + $0x40] sm:$0xff]
    %v2983 = vld [vmem:[#allocation3 + $0x48] sm:$0xff]
    %v2984 = vld [vmem:[#allocation3 + $0x50] sm:$0xff]
    %v2985 = vld [vmem:[#allocation3 + $0x58] sm:$0xff]
    %v2986 = vld [vmem:[#allocation3 + $0x60] sm:$0xff]
    %v2987 = vld [vmem:[#allocation3 + $0x68] sm:$0xff]
    %v2988 = vld [vmem:[#allocation3 + $0x70] sm:$0xff]
    %v2989 = vld [vmem:[#allocation3 + $0x78] sm:$0xff]
    %v2990 = vld [vmem:[#allocation3 + $0x80] sm:$0xff]
    %v2991 = vld [vmem:[#allocation3 + $0x88] sm:$0xff]
    %v2992 = vld [vmem:[#allocation3 + $0x90] sm:$0xff]
    %v2993 = vld [vmem:[#allocation3 + $0x98] sm:$0xff]
    %v2994 = vld [vmem:[#allocation3 + $0xa0] sm:$0xff]
    %v2995 = vld [vmem:[#allocation3 + $0xa8] sm:$0xff]
    %v2996 = vld [vmem:[#allocation3 + $0xb0] sm:$0xff]
    %v2997 = vld [vmem:[#allocation3 + $0xb8] sm:$0xff]
    %v2998 = vld [vmem:[#allocation3 + $0xc0] sm:$0xff]
    %v2999 = vld [vmem:[#allocation3 + $0xc8] sm:$0xff]
    %v3000 = vld [vmem:[#allocation3 + $0xd0] sm:$0xff]
    %v3001 = vld [vmem:[#allocation3 + $0xd8] sm:$0xff]
    %v3002 = vld [vmem:[#allocation3 + $0xe0] sm:$0xff]
    %v3003 = vld [vmem:[#allocation3 + $0xe8] sm:$0xff]
    %v3004 = vld [vmem:[#allocation3 + $0xf0] sm:$0xff]
    %v3005 = vld [vmem:[#allocation3 + $0xf8] sm:$0xff]
    %v3006 = vld [vmem:[#allocation3 + $0x100] sm:$0xff]
    %v3007 = vld [vmem:[#allocation3 + $0x108] sm:$0xff]
    %v3008 = vld [vmem:[#allocation3 + $0x110] sm:$0xff]
    %v3009 = vld [vmem:[#allocation3 + $0x118] sm:$0xff]
    %v3010 = vld [vmem:[#allocation3 + $0x120] sm:$0xff]
    %v3011 = vld [vmem:[#allocation3 + $0x128] sm:$0xff]
    %v3012 = vld [vmem:[#allocation3 + $0x130] sm:$0xff]
    %v3013 = vld [vmem:[#allocation3 + $0x138] sm:$0xff]
    %v3014 = vld [vmem:[#allocation3 + $0x140] sm:$0xff]
    %v3015 = vld [vmem:[#allocation3 + $0x148] sm:$0xff]
    %v3016 = vld [vmem:[#allocation3 + $0x150] sm:$0xff]
    %v3017 = vld [vmem:[#allocation3 + $0x158] sm:$0xff]
    %v3018 = vld [vmem:[#allocation3 + $0x160] sm:$0xff]
    %v3019 = vld [vmem:[#allocation3 + $0x168] sm:$0xff]
    %v3020 = vld [vmem:[#allocation3 + $0x170] sm:$0xff]
    %v3021 = vld [vmem:[#allocation3 + $0x178] sm:$0xff]
    %3022 = vmatprep.subr.mxu0 %v2975
    %3023 = vmatpush1.msra.mxu0 %v2974
    %3024 = vmatprep.subr.mxu0 %v2978
    %3025 = vmatpush1.msra.mxu0 %v2977
    %3026 = vmatprep.subr.mxu0 %v2981
    %3027 = vmatpush1.msra.mxu0 %v2980
    %3028 = vmatprep.subr.mxu0 %v2984
    %3029 = vmatpush1.msra.mxu0 %v2983
    %3030 = vmatprep.subr.mxu0 %v2987
    %3031 = vmatpush1.msra.mxu0 %v2986
    %3032 = vmatprep.subr.mxu0 %v2990
    %3033 = vmatpush1.msra.mxu0 %v2989
    %3034 = vmatprep.subr.mxu0 %v2993
    %3035 = vmatpush1.msra.mxu0 %v2992
    %3036 = vmatprep.subr.mxu0 %v2996
    %3037 = vmatpush1.msra.mxu0 %v2995
    %3038 = vmatprep.subr.mxu0 %v2999
    %3039 = vmatpush1.msra.mxu0 %v2998
    %3040 = vmatprep.subr.mxu0 %v3002
    %3041 = vmatpush1.msra.mxu0 %v3001
    %3042 = vmatprep.subr.mxu0 %v3005
    %3043 = vmatpush1.msra.mxu0 %v3004
    %3044 = vmatprep.subr.mxu0 %v3008
    %3045 = vmatpush1.msra.mxu0 %v3007
    %3046 = vmatprep.subr.mxu0 %v3011
    %3047 = vmatpush1.msra.mxu0 %v3010
    %3048 = vmatprep.subr.mxu0 %v3014
    %3049 = vmatpush1.msra.mxu0 %v3013
    %3050 = vmatprep.subr.mxu0 %v3017
    %3051 = vmatpush1.msra.mxu0 %v3016
    %3052 = vmatprep.subr.mxu0 %v3020
    %3053 = vmatpush1.msra.mxu0 %v3019
    %3054 = vmatprep.subr.mxu0 0.0
    %3055 = vmatpush1.msra.mxu0 0.0
    %3056 = vmatprep.subr.mxu0 0.0
    %3057 = vmatpush1.msra.mxu0 0.0
    %3058 = vmatprep.subr.mxu0 0.0
    %3059 = vmatpush1.msra.mxu0 0.0
    %3060 = vmatprep.subr.mxu0 0.0
    %3061 = vmatpush1.msra.mxu0 0.0
    %3062 = vmatprep.subr.mxu0 0.0
    %3063 = vmatpush1.msra.mxu0 0.0
    %3064 = vmatprep.subr.mxu0 0.0
    %3065 = vmatpush1.msra.mxu0 0.0
    %3066 = vmatprep.subr.mxu0 0.0
    %3067 = vmatpush1.msra.mxu0 0.0
    %3068 = vmatprep.subr.mxu0 0.0
    %3069 = vmatpush1.msra.mxu0 0.0
    %3070 = vmatprep.subr.mxu0 0.0
    %3071 = vmatpush1.msra.mxu0 0.0
    %3072 = vmatprep.subr.mxu0 0.0
    %3073 = vmatpush1.msra.mxu0 0.0
    %3074 = vmatprep.subr.mxu0 0.0
    %3075 = vmatpush1.msra.mxu0 0.0
    %3076 = vmatprep.subr.mxu0 0.0
    %3077 = vmatpush1.msra.mxu0 0.0
    %3078 = vmatprep.subr.mxu0 0.0
    %3079 = vmatpush1.msra.mxu0 0.0
    %3080 = vmatprep.subr.mxu0 0.0
    %3081 = vmatpush1.msra.mxu0 0.0
    %3082 = vmatprep.subr.mxu0 0.0
    %3083 = vmatpush1.msra.mxu0 0.0
    %3084 = vmatprep.subr.mxu0 0.0
    %3085 = vmatpush1.msra.mxu0 0.0
    %3086 = vmatprep.mubr.f32.mxu0 0.0
    %3087 = vmatmul.mubr.f32.gmra.mrb[0].mxu0 %v2738
    %v3088 = vpop.f32.mrb[0].mxu0
    %v3089 = vadd.f32 0.0, %v3088
    %v3090 = vpop.f32.mrb[0].mxu0
    %v3091 = vadd.f32 0.0, %v3090
    %3092 = vdwg.mxu0
    %3093 = vmatprep.subr.mxu0 0.0
    %3094 = vmatpush1.msra.mxu0 %v2976
    %3095 = vmatprep.subr.mxu0 0.0
    %3096 = vmatpush1.msra.mxu0 %v2979
    %3097 = vmatprep.subr.mxu0 0.0
    %3098 = vmatpush1.msra.mxu0 %v2982
    %3099 = vmatprep.subr.mxu0 0.0
    %3100 = vmatpush1.msra.mxu0 %v2985
    %3101 = vmatprep.subr.mxu0 0.0
    %3102 = vmatpush1.msra.mxu0 %v2988
    %3103 = vmatprep.subr.mxu0 0.0
    %3104 = vmatpush1.msra.mxu0 %v2991
    %3105 = vmatprep.subr.mxu0 0.0
    %3106 = vmatpush1.msra.mxu0 %v2994
    %3107 = vmatprep.subr.mxu0 0.0
    %3108 = vmatpush1.msra.mxu0 %v2997
    %3109 = vmatprep.subr.mxu0 0.0
    %3110 = vmatpush1.msra.mxu0 %v3000
    %3111 = vmatprep.subr.mxu0 0.0
    %3112 = vmatpush1.msra.mxu0 %v3003
    %3113 = vmatprep.subr.mxu0 0.0
    %3114 = vmatpush1.msra.mxu0 %v3006
    %3115 = vmatprep.subr.mxu0 0.0
    %3116 = vmatpush1.msra.mxu0 %v3009
    %3117 = vmatprep.subr.mxu0 0.0
    %3118 = vmatpush1.msra.mxu0 %v3012
    %3119 = vmatprep.subr.mxu0 0.0
    %3120 = vmatpush1.msra.mxu0 %v3015
    %3121 = vmatprep.subr.mxu0 0.0
    %3122 = vmatpush1.msra.mxu0 %v3018
    %3123 = vmatprep.subr.mxu0 0.0
    %3124 = vmatpush1.msra.mxu0 %v3021
    %3125 = vmatprep.subr.mxu0 0.0
    %3126 = vmatpush1.msra.mxu0 0.0
    %3127 = vmatprep.subr.mxu0 0.0
    %3128 = vmatpush1.msra.mxu0 0.0
    %3129 = vmatprep.subr.mxu0 0.0
    %3130 = vmatpush1.msra.mxu0 0.0
    %3131 = vmatprep.subr.mxu0 0.0
    %3132 = vmatpush1.msra.mxu0 0.0
    %3133 = vmatprep.subr.mxu0 0.0
    %3134 = vmatpush1.msra.mxu0 0.0
    %3135 = vmatprep.subr.mxu0 0.0
    %3136 = vmatpush1.msra.mxu0 0.0
    %3137 = vmatprep.subr.mxu0 0.0
    %3138 = vmatpush1.msra.mxu0 0.0
    %3139 = vmatprep.subr.mxu0 0.0
    %3140 = vmatpush1.msra.mxu0 0.0
    %3141 = vmatprep.subr.mxu0 0.0
    %3142 = vmatpush1.msra.mxu0 0.0
    %3143 = vmatprep.subr.mxu0 0.0
    %3144 = vmatpush1.msra.mxu0 0.0
    %3145 = vmatprep.subr.mxu0 0.0
    %3146 = vmatpush1.msra.mxu0 0.0
    %3147 = vmatprep.subr.mxu0 0.0
    %3148 = vmatpush1.msra.mxu0 0.0
    %3149 = vmatprep.subr.mxu0 0.0
    %3150 = vmatpush1.msra.mxu0 0.0
    %3151 = vmatprep.subr.mxu0 0.0
    %3152 = vmatpush1.msra.mxu0 0.0
    %3153 = vmatprep.subr.mxu0 0.0
    %3154 = vmatpush1.msra.mxu0 0.0
    %3155 = vmatprep.subr.mxu0 0.0
    %3156 = vmatpush1.msra.mxu0 0.0
    %3157 = vmatprep.mubr.f32.mxu0 0.0
    %3158 = vmatmul.mubr.f32.gmra.mrb[0].mxu0 %v2738
    %v3159 = vpop.f32.mrb[0].mxu0
    %v3160 = vadd.f32 0.0, %v3159
    %v3161 = vpop.f32.mrb[0].mxu0
    %3162 = vdwg.mxu0
    %v3164 = vrot.slane %v3089, 6
    %v3166 = vadd.f32 %v2968, %v3164
    %v3167 = vxor.u32 %v3166, 2147483648
    %v3168 = vmul.f32 %v3167, 1.442695
    %v3169 = vpow.pop %v3168
    %v3170 = vadd.f32 %v3169, 1.0
    %v3171 = vrcp.pop %v3170
    %v3172 = vmul.f32 1.0, %v3171
    %v3174 = vrot.slane %v3091, 6
    %v3176 = vadd.f32 %v2969, %v3174
    %v3177 = vxor.u32 %v3176, 2147483648
    %v3178 = vmul.f32 %v3177, 1.442695
    %v3179 = vpow.pop %v3178
    %v3180 = vadd.f32 %v3179, 1.0
    %v3181 = vrcp.pop %v3180
    %v3182 = vmul.f32 1.0, %v3181
    %v3183 = vadd.f32 %v3160, %v688
    %v3185 = vrot.slane %v3183, 6
    %v3187 = vmul.f32 %v3172, %v3185
    %v3188 = vadd.f32 %v2970, %v3187
    %v3189 = vtanh.pop %v3188
    %v3190 = vsub.f32 1.0, %v3182
    %v3191 = vmul.f32 %v3190, %v3189
    %v3193 = vrot.slane %v2738, 6
    %v3195 = vmul.f32 %v3182, %v3193
    %v3196 = vadd.f32 %v3191, %v3195
    %v3197 = vld [vmem:[#allocation5] sm:$0xff]
    %v3198 = vld [vmem:[#allocation5 + $0x8] sm:$0xff]
    %v3199 = vld [vmem:[#allocation5 + $0x10] sm:$0xff]
    %v3200 = vld [vmem:[#allocation5 + $0x18] sm:$0xff]
    %v3201 = vld [vmem:[#allocation5 + $0x20] sm:$0xff]
    %v3202 = vld [vmem:[#allocation5 + $0x28] sm:$0xff]
    %v3203 = vld [vmem:[#allocation5 + $0x30] sm:$0xff]
    %v3204 = vld [vmem:[#allocation5 + $0x38] sm:$0xff]
    %v3205 = vld [vmem:[#allocation5 + $0x40] sm:$0xff]
    %v3206 = vld [vmem:[#allocation5 + $0x48] sm:$0xff]
    %v3207 = vld [vmem:[#allocation5 + $0x50] sm:$0xff]
    %v3208 = vld [vmem:[#allocation5 + $0x58] sm:$0xff]
    %v3209 = vld [vmem:[#allocation5 + $0x60] sm:$0xff]
    %v3210 = vld [vmem:[#allocation5 + $0x68] sm:$0xff]
    %v3211 = vld [vmem:[#allocation5 + $0x70] sm:$0xff]
    %v3212 = vld [vmem:[#allocation5 + $0x78] sm:$0xff]
    %v3213 = vld [vmem:[#allocation5 + $0x80] sm:$0xff]
    %v3214 = vld [vmem:[#allocation5 + $0x88] sm:$0xff]
    %v3215 = vld [vmem:[#allocation5 + $0x90] sm:$0xff]
    %v3216 = vld [vmem:[#allocation5 + $0x98] sm:$0xff]
    %v3217 = vld [vmem:[#allocation5 + $0xa0] sm:$0xff]
    %v3218 = vld [vmem:[#allocation5 + $0xa8] sm:$0xff]
    %v3219 = vld [vmem:[#allocation5 + $0xb0] sm:$0xff]
    %v3220 = vld [vmem:[#allocation5 + $0xb8] sm:$0xff]
    %v3221 = vld [vmem:[#allocation5 + $0xc0] sm:$0xff]
    %v3222 = vld [vmem:[#allocation5 + $0xc8] sm:$0xff]
    %v3223 = vld [vmem:[#allocation5 + $0xd0] sm:$0xff]
    %v3224 = vld [vmem:[#allocation5 + $0xd8] sm:$0xff]
    %v3225 = vld [vmem:[#allocation5 + $0xe0] sm:$0xff]
    %v3226 = vld [vmem:[#allocation5 + $0xe8] sm:$0xff]
    %v3227 = vld [vmem:[#allocation5 + $0xf0] sm:$0xff]
    %v3228 = vld [vmem:[#allocation5 + $0xf8] sm:$0xff]
    %v3229 = vld [vmem:[#allocation5 + $0x100] sm:$0xff]
    %v3230 = vld [vmem:[#allocation5 + $0x108] sm:$0xff]
    %v3231 = vld [vmem:[#allocation5 + $0x110] sm:$0xff]
    %v3232 = vld [vmem:[#allocation5 + $0x118] sm:$0xff]
    %v3233 = vld [vmem:[#allocation5 + $0x120] sm:$0xff]
    %v3234 = vld [vmem:[#allocation5 + $0x128] sm:$0xff]
    %v3235 = vld [vmem:[#allocation5 + $0x130] sm:$0xff]
    %v3236 = vld [vmem:[#allocation5 + $0x138] sm:$0xff]
    %v3237 = vld [vmem:[#allocation5 + $0x140] sm:$0xff]
    %v3238 = vld [vmem:[#allocation5 + $0x148] sm:$0xff]
    %v3239 = vld [vmem:[#allocation5 + $0x150] sm:$0xff]
    %v3240 = vld [vmem:[#allocation5 + $0x158] sm:$0xff]
    %v3241 = vld [vmem:[#allocation5 + $0x160] sm:$0xff]
    %v3242 = vld [vmem:[#allocation5 + $0x168] sm:$0xff]
    %v3243 = vld [vmem:[#allocation5 + $0x170] sm:$0xff]
    %v3244 = vld [vmem:[#allocation5 + $0x178] sm:$0xff]
    %v3246 = vrot.slane %v2961, 6
    %3248 = vmatprep.subr.mxu0 %v3198
    %3249 = vmatpush1.msra.mxu0 %v3197
    %3250 = vmatprep.subr.mxu0 %v3201
    %3251 = vmatpush1.msra.mxu0 %v3200
    %3252 = vmatprep.subr.mxu0 %v3204
    %3253 = vmatpush1.msra.mxu0 %v3203
    %3254 = vmatprep.subr.mxu0 %v3207
    %3255 = vmatpush1.msra.mxu0 %v3206
    %3256 = vmatprep.subr.mxu0 %v3210
    %3257 = vmatpush1.msra.mxu0 %v3209
    %3258 = vmatprep.subr.mxu0 %v3213
    %3259 = vmatpush1.msra.mxu0 %v3212
    %3260 = vmatprep.subr.mxu0 %v3216
    %3261 = vmatpush1.msra.mxu0 %v3215
    %3262 = vmatprep.subr.mxu0 %v3219
    %3263 = vmatpush1.msra.mxu0 %v3218
    %3264 = vmatprep.subr.mxu0 %v3222
    %3265 = vmatpush1.msra.mxu0 %v3221
    %3266 = vmatprep.subr.mxu0 %v3225
    %3267 = vmatpush1.msra.mxu0 %v3224
    %3268 = vmatprep.subr.mxu0 %v3228
    %3269 = vmatpush1.msra.mxu0 %v3227
    %3270 = vmatprep.subr.mxu0 %v3231
    %3271 = vmatpush1.msra.mxu0 %v3230
    %3272 = vmatprep.subr.mxu0 %v3234
    %3273 = vmatpush1.msra.mxu0 %v3233
    %3274 = vmatprep.subr.mxu0 %v3237
    %3275 = vmatpush1.msra.mxu0 %v3236
    %3276 = vmatprep.subr.mxu0 %v3240
    %3277 = vmatpush1.msra.mxu0 %v3239
    %3278 = vmatprep.subr.mxu0 %v3243
    %3279 = vmatpush1.msra.mxu0 %v3242
    %3280 = vmatprep.subr.mxu0 0.0
    %3281 = vmatpush1.msra.mxu0 0.0
    %3282 = vmatprep.subr.mxu0 0.0
    %3283 = vmatpush1.msra.mxu0 0.0
    %3284 = vmatprep.subr.mxu0 0.0
    %3285 = vmatpush1.msra.mxu0 0.0
    %3286 = vmatprep.subr.mxu0 0.0
    %3287 = vmatpush1.msra.mxu0 0.0
    %3288 = vmatprep.subr.mxu0 0.0
    %3289 = vmatpush1.msra.mxu0 0.0
    %3290 = vmatprep.subr.mxu0 0.0
    %3291 = vmatpush1.msra.mxu0 0.0
    %3292 = vmatprep.subr.mxu0 0.0
    %3293 = vmatpush1.msra.mxu0 0.0
    %3294 = vmatprep.subr.mxu0 0.0
    %3295 = vmatpush1.msra.mxu0 0.0
    %3296 = vmatprep.subr.mxu0 0.0
    %3297 = vmatpush1.msra.mxu0 0.0
    %3298 = vmatprep.subr.mxu0 0.0
    %3299 = vmatpush1.msra.mxu0 0.0
    %3300 = vmatprep.subr.mxu0 0.0
    %3301 = vmatpush1.msra.mxu0 0.0
    %3302 = vmatprep.subr.mxu0 0.0
    %3303 = vmatpush1.msra.mxu0 0.0
    %3304 = vmatprep.subr.mxu0 0.0
    %3305 = vmatpush1.msra.mxu0 0.0
    %3306 = vmatprep.subr.mxu0 0.0
    %3307 = vmatpush1.msra.mxu0 0.0
    %3308 = vmatprep.subr.mxu0 0.0
    %3309 = vmatpush1.msra.mxu0 0.0
    %3310 = vmatprep.subr.mxu0 0.0
    %3311 = vmatpush1.msra.mxu0 0.0
    %3312 = vmatprep.mubr.f32.mxu0 0.0
    %3313 = vmatmul.mubr.f32.gmra.mrb[0].mxu0 %v3246
    %v3314 = vpop.f32.mrb[0].mxu0
    %v3315 = vadd.f32 0.0, %v3314
    %v3316 = vpop.f32.mrb[0].mxu0
    %v3317 = vadd.f32 0.0, %v3316
    %3318 = vdwg.mxu0
    %3319 = vmatprep.subr.mxu0 0.0
    %3320 = vmatpush1.msra.mxu0 %v3199
    %3321 = vmatprep.subr.mxu0 0.0
    %3322 = vmatpush1.msra.mxu0 %v3202
    %3323 = vmatprep.subr.mxu0 0.0
    %3324 = vmatpush1.msra.mxu0 %v3205
    %3325 = vmatprep.subr.mxu0 0.0
    %3326 = vmatpush1.msra.mxu0 %v3208
    %3327 = vmatprep.subr.mxu0 0.0
    %3328 = vmatpush1.msra.mxu0 %v3211
    %3329 = vmatprep.subr.mxu0 0.0
    %3330 = vmatpush1.msra.mxu0 %v3214
    %3331 = vmatprep.subr.mxu0 0.0
    %3332 = vmatpush1.msra.mxu0 %v3217
    %3333 = vmatprep.subr.mxu0 0.0
    %3334 = vmatpush1.msra.mxu0 %v3220
    %3335 = vmatprep.subr.mxu0 0.0
    %3336 = vmatpush1.msra.mxu0 %v3223
    %3337 = vmatprep.subr.mxu0 0.0
    %3338 = vmatpush1.msra.mxu0 %v3226
    %3339 = vmatprep.subr.mxu0 0.0
    %3340 = vmatpush1.msra.mxu0 %v3229
    %3341 = vmatprep.subr.mxu0 0.0
    %3342 = vmatpush1.msra.mxu0 %v3232
    %3343 = vmatprep.subr.mxu0 0.0
    %3344 = vmatpush1.msra.mxu0 %v3235
    %3345 = vmatprep.subr.mxu0 0.0
    %3346 = vmatpush1.msra.mxu0 %v3238
    %3347 = vmatprep.subr.mxu0 0.0
    %3348 = vmatpush1.msra.mxu0 %v3241
    %3349 = vmatprep.subr.mxu0 0.0
    %3350 = vmatpush1.msra.mxu0 %v3244
    %3351 = vmatprep.subr.mxu0 0.0
    %3352 = vmatpush1.msra.mxu0 0.0
    %3353 = vmatprep.subr.mxu0 0.0
    %3354 = vmatpush1.msra.mxu0 0.0
    %3355 = vmatprep.subr.mxu0 0.0
    %3356 = vmatpush1.msra.mxu0 0.0
    %3357 = vmatprep.subr.mxu0 0.0
    %3358 = vmatpush1.msra.mxu0 0.0
    %3359 = vmatprep.subr.mxu0 0.0
    %3360 = vmatpush1.msra.mxu0 0.0
    %3361 = vmatprep.subr.mxu0 0.0
    %3362 = vmatpush1.msra.mxu0 0.0
    %3363 = vmatprep.subr.mxu0 0.0
    %3364 = vmatpush1.msra.mxu0 0.0
    %3365 = vmatprep.subr.mxu0 0.0
    %3366 = vmatpush1.msra.mxu0 0.0
    %3367 = vmatprep.subr.mxu0 0.0
    %3368 = vmatpush1.msra.mxu0 0.0
    %3369 = vmatprep.subr.mxu0 0.0
    %3370 = vmatpush1.msra.mxu0 0.0
    %3371 = vmatprep.subr.mxu0 0.0
    %3372 = vmatpush1.msra.mxu0 0.0
    %3373 = vmatprep.subr.mxu0 0.0
    %3374 = vmatpush1.msra.mxu0 0.0
    %3375 = vmatprep.subr.mxu0 0.0
    %3376 = vmatpush1.msra.mxu0 0.0
    %3377 = vmatprep.subr.mxu0 0.0
    %3378 = vmatpush1.msra.mxu0 0.0
    %3379 = vmatprep.subr.mxu0 0.0
    %3380 = vmatpush1.msra.mxu0 0.0
    %3381 = vmatprep.subr.mxu0 0.0
    %3382 = vmatpush1.msra.mxu0 0.0
    %3383 = vmatprep.mubr.f32.mxu0 0.0
    %3384 = vmatmul.mubr.f32.gmra.mrb[0].mxu0 %v3246
    %v3385 = vpop.f32.mrb[0].mxu0
    %v3386 = vadd.f32 0.0, %v3385
    %v3387 = vpop.f32.mrb[0].mxu0
    %3388 = vdwg.mxu0
    %v3390 = vrot.slane %v3315, 4
    %v3392 = vadd.f32 %v2971, %v3390
    %v3393 = vxor.u32 %v3392, 2147483648
    %v3394 = vmul.f32 %v3393, 1.442695
    %v3395 = vpow.pop %v3394
    %v3396 = vadd.f32 %v3395, 1.0
    %v3397 = vrcp.pop %v3396
    %v3398 = vmul.f32 1.0, %v3397
    %v3400 = vrot.slane %v3317, 4
    %v3402 = vadd.f32 %v2972, %v3400
    %v3403 = vxor.u32 %v3402, 2147483648
    %v3404 = vmul.f32 %v3403, 1.442695
    %v3405 = vpow.pop %v3404
    %v3406 = vadd.f32 %v3405, 1.0
    %v3407 = vrcp.pop %v3406
    %v3408 = vmul.f32 1.0, %v3407
    %v3409 = vadd.f32 %v3386, %v695
    %v3411 = vrot.slane %v3409, 4
    %v3413 = vmul.f32 %v3398, %v3411
    %v3414 = vadd.f32 %v2973, %v3413
    %v3415 = vtanh.pop %v3414
    %v3416 = vsub.f32 1.0, %v3408
    %v3417 = vmul.f32 %v3416, %v3415
    %v3418 = vrot.slane %v2961, 2
    %v3420 = vmul.f32 %v3408, %v3418
    %v3421 = vadd.f32 %v3417, %v3420
    %v3422 = vmax.f32 %v3196, -5.0
    %v3423 = vmin.f32 %v3422, 5.0
    %3424 = vst [vmem:[%s15 + $0x10] sm:$0xc] %v3423
    %v3425 = vmax.f32 %v3421, -5.0
    %v3426 = vmin.f32 %v3425, 5.0
    %3427 = vst [vmem:[%s15 + $0x8] sm:$0x30] %v3426
    %v3428 = vld [vmem:[#allocation2 + $0x30] sm:$0x30]
    %v3429 = vld [vmem:[#allocation2 + $0x38] sm:$0x30]
    %v3430 = vld [vmem:[#allocation2 + $0x40] sm:$0x30]
    %v3431 = vld [vmem:[#allocation2 + $0x18] sm:$0xc]
    %v3432 = vld [vmem:[#allocation2 + $0x20] sm:$0xc]
    %v3433 = vld [vmem:[#allocation2 + $0x28] sm:$0xc]
    %v3434 = vld [vmem:[#allocation3] sm:$0xff]
    %v3435 = vld [vmem:[#allocation3 + $0x8] sm:$0xff]
    %v3436 = vld [vmem:[#allocation3 + $0x10] sm:$0xff]
    %v3437 = vld [vmem:[#allocation3 + $0x18] sm:$0xff]
    %v3438 = vld [vmem:[#allocation3 + $0x20] sm:$0xff]
    %v3439 = vld [vmem:[#allocation3 + $0x28] sm:$0xff]
    %v3440 = vld [vmem:[#allocation3 + $0x30] sm:$0xff]
    %v3441 = vld [vmem:[#allocation3 + $0x38] sm:$0xff]
    %v3442 = vld [vmem:[#allocation3 + $0x40] sm:$0xff]
    %v3443 = vld [vmem:[#allocation3 + $0x48] sm:$0xff]
    %v3444 = vld [vmem:[#allocation3 + $0x50] sm:$0xff]
    %v3445 = vld [vmem:[#allocation3 + $0x58] sm:$0xff]
    %v3446 = vld [vmem:[#allocation3 + $0x60] sm:$0xff]
    %v3447 = vld [vmem:[#allocation3 + $0x68] sm:$0xff]
    %v3448 = vld [vmem:[#allocation3 + $0x70] sm:$0xff]
    %v3449 = vld [vmem:[#allocation3 + $0x78] sm:$0xff]
    %v3450 = vld [vmem:[#allocation3 + $0x80] sm:$0xff]
    %v3451 = vld [vmem:[#allocation3 + $0x88] sm:$0xff]
    %v3452 = vld [vmem:[#allocation3 + $0x90] sm:$0xff]
    %v3453 = vld [vmem:[#allocation3 + $0x98] sm:$0xff]
    %v3454 = vld [vmem:[#allocation3 + $0xa0] sm:$0xff]
    %v3455 = vld [vmem:[#allocation3 + $0xa8] sm:$0xff]
    %v3456 = vld [vmem:[#allocation3 + $0xb0] sm:$0xff]
    %v3457 = vld [vmem:[#allocation3 + $0xb8] sm:$0xff]
    %v3458 = vld [vmem:[#allocation3 + $0xc0] sm:$0xff]
    %v3459 = vld [vmem:[#allocation3 + $0xc8] sm:$0xff]
    %v3460 = vld [vmem:[#allocation3 + $0xd0] sm:$0xff]
    %v3461 = vld [vmem:[#allocation3 + $0xd8] sm:$0xff]
    %v3462 = vld [vmem:[#allocation3 + $0xe0] sm:$0xff]
    %v3463 = vld [vmem:[#allocation3 + $0xe8] sm:$0xff]
    %v3464 = vld [vmem:[#allocation3 + $0xf0] sm:$0xff]
    %v3465 = vld [vmem:[#allocation3 + $0xf8] sm:$0xff]
    %v3466 = vld [vmem:[#allocation3 + $0x100] sm:$0xff]
    %v3467 = vld [vmem:[#allocation3 + $0x108] sm:$0xff]
    %v3468 = vld [vmem:[#allocation3 + $0x110] sm:$0xff]
    %v3469 = vld [vmem:[#allocation3 + $0x118] sm:$0xff]
    %v3470 = vld [vmem:[#allocation3 + $0x120] sm:$0xff]
    %v3471 = vld [vmem:[#allocation3 + $0x128] sm:$0xff]
    %v3472 = vld [vmem:[#allocation3 + $0x130] sm:$0xff]
    %v3473 = vld [vmem:[#allocation3 + $0x138] sm:$0xff]
    %v3474 = vld [vmem:[#allocation3 + $0x140] sm:$0xff]
    %v3475 = vld [vmem:[#allocation3 + $0x148] sm:$0xff]
    %v3476 = vld [vmem:[#allocation3 + $0x150] sm:$0xff]
    %v3477 = vld [vmem:[#allocation3 + $0x158] sm:$0xff]
    %v3478 = vld [vmem:[#allocation3 + $0x160] sm:$0xff]
    %v3479 = vld [vmem:[#allocation3 + $0x168] sm:$0xff]
    %v3480 = vld [vmem:[#allocation3 + $0x170] sm:$0xff]
    %v3481 = vld [vmem:[#allocation3 + $0x178] sm:$0xff]
    %v3483 = vrot.slane %v3196, 2
    %3485 = vmatprep.subr.mxu0 %v3435
    %3486 = vmatpush1.msra.mxu0 %v3434
    %3487 = vmatprep.subr.mxu0 %v3438
    %3488 = vmatpush1.msra.mxu0 %v3437
    %3489 = vmatprep.subr.mxu0 %v3441
    %3490 = vmatpush1.msra.mxu0 %v3440
    %3491 = vmatprep.subr.mxu0 %v3444
    %3492 = vmatpush1.msra.mxu0 %v3443
    %3493 = vmatprep.subr.mxu0 %v3447
    %3494 = vmatpush1.msra.mxu0 %v3446
    %3495 = vmatprep.subr.mxu0 %v3450
    %3496 = vmatpush1.msra.mxu0 %v3449
    %3497 = vmatprep.subr.mxu0 %v3453
    %3498 = vmatpush1.msra.mxu0 %v3452
    %3499 = vmatprep.subr.mxu0 %v3456
    %3500 = vmatpush1.msra.mxu0 %v3455
    %3501 = vmatprep.subr.mxu0 %v3459
    %3502 = vmatpush1.msra.mxu0 %v3458
    %3503 = vmatprep.subr.mxu0 %v3462
    %3504 = vmatpush1.msra.mxu0 %v3461
    %3505 = vmatprep.subr.mxu0 %v3465
    %3506 = vmatpush1.msra.mxu0 %v3464
    %3507 = vmatprep.subr.mxu0 %v3468
    %3508 = vmatpush1.msra.mxu0 %v3467
    %3509 = vmatprep.subr.mxu0 %v3471
    %3510 = vmatpush1.msra.mxu0 %v3470
    %3511 = vmatprep.subr.mxu0 %v3474
    %3512 = vmatpush1.msra.mxu0 %v3473
    %3513 = vmatprep.subr.mxu0 %v3477
    %3514 = vmatpush1.msra.mxu0 %v3476
    %3515 = vmatprep.subr.mxu0 %v3480
    %3516 = vmatpush1.msra.mxu0 %v3479
    %3517 = vmatprep.subr.mxu0 0.0
    %3518 = vmatpush1.msra.mxu0 0.0
    %3519 = vmatprep.subr.mxu0 0.0
    %3520 = vmatpush1.msra.mxu0 0.0
    %3521 = vmatprep.subr.mxu0 0.0
    %3522 = vmatpush1.msra.mxu0 0.0
    %3523 = vmatprep.subr.mxu0 0.0
    %3524 = vmatpush1.msra.mxu0 0.0
    %3525 = vmatprep.subr.mxu0 0.0
    %3526 = vmatpush1.msra.mxu0 0.0
    %3527 = vmatprep.subr.mxu0 0.0
    %3528 = vmatpush1.msra.mxu0 0.0
    %3529 = vmatprep.subr.mxu0 0.0
    %3530 = vmatpush1.msra.mxu0 0.0
    %3531 = vmatprep.subr.mxu0 0.0
    %3532 = vmatpush1.msra.mxu0 0.0
    %3533 = vmatprep.subr.mxu0 0.0
    %3534 = vmatpush1.msra.mxu0 0.0
    %3535 = vmatprep.subr.mxu0 0.0
    %3536 = vmatpush1.msra.mxu0 0.0
    %3537 = vmatprep.subr.mxu0 0.0
    %3538 = vmatpush1.msra.mxu0 0.0
    %3539 = vmatprep.subr.mxu0 0.0
    %3540 = vmatpush1.msra.mxu0 0.0
    %3541 = vmatprep.subr.mxu0 0.0
    %3542 = vmatpush1.msra.mxu0 0.0
    %3543 = vmatprep.subr.mxu0 0.0
    %3544 = vmatpush1.msra.mxu0 0.0
    %3545 = vmatprep.subr.mxu0 0.0
    %3546 = vmatpush1.msra.mxu0 0.0
    %3547 = vmatprep.subr.mxu0 0.0
    %3548 = vmatpush1.msra.mxu0 0.0
    %3549 = vmatprep.mubr.f32.mxu0 0.0
    %3550 = vmatmul.mubr.f32.gmra.mrb[0].mxu0 %v3483
    %v3551 = vpop.f32.mrb[0].mxu0
    %v3552 = vadd.f32 0.0, %v3551
    %v3553 = vpop.f32.mrb[0].mxu0
    %v3554 = vadd.f32 0.0, %v3553
    %3555 = vdwg.mxu0
    %3556 = vmatprep.subr.mxu0 0.0
    %3557 = vmatpush1.msra.mxu0 %v3436
    %3558 = vmatprep.subr.mxu0 0.0
    %3559 = vmatpush1.msra.mxu0 %v3439
    %3560 = vmatprep.subr.mxu0 0.0
    %3561 = vmatpush1.msra.mxu0 %v3442
    %3562 = vmatprep.subr.mxu0 0.0
    %3563 = vmatpush1.msra.mxu0 %v3445
    %3564 = vmatprep.subr.mxu0 0.0
    %3565 = vmatpush1.msra.mxu0 %v3448
    %3566 = vmatprep.subr.mxu0 0.0
    %3567 = vmatpush1.msra.mxu0 %v3451
    %3568 = vmatprep.subr.mxu0 0.0
    %3569 = vmatpush1.msra.mxu0 %v3454
    %3570 = vmatprep.subr.mxu0 0.0
    %3571 = vmatpush1.msra.mxu0 %v3457
    %3572 = vmatprep.subr.mxu0 0.0
    %3573 = vmatpush1.msra.mxu0 %v3460
    %3574 = vmatprep.subr.mxu0 0.0
    %3575 = vmatpush1.msra.mxu0 %v3463
    %3576 = vmatprep.subr.mxu0 0.0
    %3577 = vmatpush1.msra.mxu0 %v3466
    %3578 = vmatprep.subr.mxu0 0.0
    %3579 = vmatpush1.msra.mxu0 %v3469
    %3580 = vmatprep.subr.mxu0 0.0
    %3581 = vmatpush1.msra.mxu0 %v3472
    %3582 = vmatprep.subr.mxu0 0.0
    %3583 = vmatpush1.msra.mxu0 %v3475
    %3584 = vmatprep.subr.mxu0 0.0
    %3585 = vmatpush1.msra.mxu0 %v3478
    %3586 = vmatprep.subr.mxu0 0.0
    %3587 = vmatpush1.msra.mxu0 %v3481
    %3588 = vmatprep.subr.mxu0 0.0
    %3589 = vmatpush1.msra.mxu0 0.0
    %3590 = vmatprep.subr.mxu0 0.0
    %3591 = vmatpush1.msra.mxu0 0.0
    %3592 = vmatprep.subr.mxu0 0.0
    %3593 = vmatpush1.msra.mxu0 0.0
    %3594 = vmatprep.subr.mxu0 0.0
    %3595 = vmatpush1.msra.mxu0 0.0
    %3596 = vmatprep.subr.mxu0 0.0
    %3597 = vmatpush1.msra.mxu0 0.0
    %3598 = vmatprep.subr.mxu0 0.0
    %3599 = vmatpush1.msra.mxu0 0.0
    %3600 = vmatprep.subr.mxu0 0.0
    %3601 = vmatpush1.msra.mxu0 0.0
    %3602 = vmatprep.subr.mxu0 0.0
    %3603 = vmatpush1.msra.mxu0 0.0
    %3604 = vmatprep.subr.mxu0 0.0
    %3605 = vmatpush1.msra.mxu0 0.0
    %3606 = vmatprep.subr.mxu0 0.0
    %3607 = vmatpush1.msra.mxu0 0.0
    %3608 = vmatprep.subr.mxu0 0.0
    %3609 = vmatpush1.msra.mxu0 0.0
    %3610 = vmatprep.subr.mxu0 0.0
    %3611 = vmatpush1.msra.mxu0 0.0
    %3612 = vmatprep.subr.mxu0 0.0
    %3613 = vmatpush1.msra.mxu0 0.0
    %3614 = vmatprep.subr.mxu0 0.0
    %3615 = vmatpush1.msra.mxu0 0.0
    %3616 = vmatprep.subr.mxu0 0.0
    %3617 = vmatpush1.msra.mxu0 0.0
    %3618 = vmatprep.subr.mxu0 0.0
    %3619 = vmatpush1.msra.mxu0 0.0
    %3620 = vmatprep.mubr.f32.mxu0 0.0
    %3621 = vmatmul.mubr.f32.gmra.mrb[0].mxu0 %v3483
    %v3622 = vpop.f32.mrb[0].mxu0
    %v3623 = vadd.f32 0.0, %v3622
    %v3624 = vpop.f32.mrb[0].mxu0
    %3625 = vdwg.mxu0
    %v3627 = vrot.slane %v3552, 4
    %v3629 = vadd.f32 %v3428, %v3627
    %v3630 = vxor.u32 %v3629, 2147483648
    %v3631 = vmul.f32 %v3630, 1.442695
    %v3632 = vpow.pop %v3631
    %v3633 = vadd.f32 %v3632, 1.0
    %v3634 = vrcp.pop %v3633
    %v3635 = vmul.f32 1.0, %v3634
    %v3637 = vrot.slane %v3554, 4
    %v3639 = vadd.f32 %v3429, %v3637
    %v3640 = vxor.u32 %v3639, 2147483648
    %v3641 = vmul.f32 %v3640, 1.442695
    %v3642 = vpow.pop %v3641
    %v3643 = vadd.f32 %v3642, 1.0
    %v3644 = vrcp.pop %v3643
    %v3645 = vmul.f32 1.0, %v3644
    %v3646 = vadd.f32 %v3623, %v688
    %v3648 = vrot.slane %v3646, 4
    %v3650 = vmul.f32 %v3635, %v3648
    %v3651 = vadd.f32 %v3430, %v3650
    %v3652 = vtanh.pop %v3651
    %v3653 = vsub.f32 1.0, %v3645
    %v3654 = vmul.f32 %v3653, %v3652
    %v3655 = vrot.slane %v3196, 6
    %v3657 = vmul.f32 %v3645, %v3655
    %v3658 = vadd.f32 %v3654, %v3657
    %v3659 = vld [vmem:[#allocation5] sm:$0xff]
    %v3660 = vld [vmem:[#allocation5 + $0x8] sm:$0xff]
    %v3661 = vld [vmem:[#allocation5 + $0x10] sm:$0xff]
    %v3662 = vld [vmem:[#allocation5 + $0x18] sm:$0xff]
    %v3663 = vld [vmem:[#allocation5 + $0x20] sm:$0xff]
    %v3664 = vld [vmem:[#allocation5 + $0x28] sm:$0xff]
    %v3665 = vld [vmem:[#allocation5 + $0x30] sm:$0xff]
    %v3666 = vld [vmem:[#allocation5 + $0x38] sm:$0xff]
    %v3667 = vld [vmem:[#allocation5 + $0x40] sm:$0xff]
    %v3668 = vld [vmem:[#allocation5 + $0x48] sm:$0xff]
    %v3669 = vld [vmem:[#allocation5 + $0x50] sm:$0xff]
    %v3670 = vld [vmem:[#allocation5 + $0x58] sm:$0xff]
    %v3671 = vld [vmem:[#allocation5 + $0x60] sm:$0xff]
    %v3672 = vld [vmem:[#allocation5 + $0x68] sm:$0xff]
    %v3673 = vld [vmem:[#allocation5 + $0x70] sm:$0xff]
    %v3674 = vld [vmem:[#allocation5 + $0x78] sm:$0xff]
    %v3675 = vld [vmem:[#allocation5 + $0x80] sm:$0xff]
    %v3676 = vld [vmem:[#allocation5 + $0x88] sm:$0xff]
    %v3677 = vld [vmem:[#allocation5 + $0x90] sm:$0xff]
    %v3678 = vld [vmem:[#allocation5 + $0x98] sm:$0xff]
    %v3679 = vld [vmem:[#allocation5 + $0xa0] sm:$0xff]
    %v3680 = vld [vmem:[#allocation5 + $0xa8] sm:$0xff]
    %v3681 = vld [vmem:[#allocation5 + $0xb0] sm:$0xff]
    %v3682 = vld [vmem:[#allocation5 + $0xb8] sm:$0xff]
    %v3683 = vld [vmem:[#allocation5 + $0xc0] sm:$0xff]
    %v3684 = vld [vmem:[#allocation5 + $0xc8] sm:$0xff]
    %v3685 = vld [vmem:[#allocation5 + $0xd0] sm:$0xff]
    %v3686 = vld [vmem:[#allocation5 + $0xd8] sm:$0xff]
    %v3687 = vld [vmem:[#allocation5 + $0xe0] sm:$0xff]
    %v3688 = vld [vmem:[#allocation5 + $0xe8] sm:$0xff]
    %v3689 = vld [vmem:[#allocation5 + $0xf0] sm:$0xff]
    %v3690 = vld [vmem:[#allocation5 + $0xf8] sm:$0xff]
    %v3691 = vld [vmem:[#allocation5 + $0x100] sm:$0xff]
    %v3692 = vld [vmem:[#allocation5 + $0x108] sm:$0xff]
    %v3693 = vld [vmem:[#allocation5 + $0x110] sm:$0xff]
    %v3694 = vld [vmem:[#allocation5 + $0x118] sm:$0xff]
    %v3695 = vld [vmem:[#allocation5 + $0x120] sm:$0xff]
    %v3696 = vld [vmem:[#allocation5 + $0x128] sm:$0xff]
    %v3697 = vld [vmem:[#allocation5 + $0x130] sm:$0xff]
    %v3698 = vld [vmem:[#allocation5 + $0x138] sm:$0xff]
    %v3699 = vld [vmem:[#allocation5 + $0x140] sm:$0xff]
    %v3700 = vld [vmem:[#allocation5 + $0x148] sm:$0xff]
    %v3701 = vld [vmem:[#allocation5 + $0x150] sm:$0xff]
    %v3702 = vld [vmem:[#allocation5 + $0x158] sm:$0xff]
    %v3703 = vld [vmem:[#allocation5 + $0x160] sm:$0xff]
    %v3704 = vld [vmem:[#allocation5 + $0x168] sm:$0xff]
    %v3705 = vld [vmem:[#allocation5 + $0x170] sm:$0xff]
    %v3706 = vld [vmem:[#allocation5 + $0x178] sm:$0xff]
    %v3708 = vrot.slane %v3421, 4
    %3710 = vmatprep.subr.mxu0 %v3660
    %3711 = vmatpush1.msra.mxu0 %v3659
    %3712 = vmatprep.subr.mxu0 %v3663
    %3713 = vmatpush1.msra.mxu0 %v3662
    %3714 = vmatprep.subr.mxu0 %v3666
    %3715 = vmatpush1.msra.mxu0 %v3665
    %3716 = vmatprep.subr.mxu0 %v3669
    %3717 = vmatpush1.msra.mxu0 %v3668
    %3718 = vmatprep.subr.mxu0 %v3672
    %3719 = vmatpush1.msra.mxu0 %v3671
    %3720 = vmatprep.subr.mxu0 %v3675
    %3721 = vmatpush1.msra.mxu0 %v3674
    %3722 = vmatprep.subr.mxu0 %v3678
    %3723 = vmatpush1.msra.mxu0 %v3677
    %3724 = vmatprep.subr.mxu0 %v3681
    %3725 = vmatpush1.msra.mxu0 %v3680
    %3726 = vmatprep.subr.mxu0 %v3684
    %3727 = vmatpush1.msra.mxu0 %v3683
    %3728 = vmatprep.subr.mxu0 %v3687
    %3729 = vmatpush1.msra.mxu0 %v3686
    %3730 = vmatprep.subr.mxu0 %v3690
    %3731 = vmatpush1.msra.mxu0 %v3689
    %3732 = vmatprep.subr.mxu0 %v3693
    %3733 = vmatpush1.msra.mxu0 %v3692
    %3734 = vmatprep.subr.mxu0 %v3696
    %3735 = vmatpush1.msra.mxu0 %v3695
    %3736 = vmatprep.subr.mxu0 %v3699
    %3737 = vmatpush1.msra.mxu0 %v3698
    %3738 = vmatprep.subr.mxu0 %v3702
    %3739 = vmatpush1.msra.mxu0 %v3701
    %3740 = vmatprep.subr.mxu0 %v3705
    %3741 = vmatpush1.msra.mxu0 %v3704
    %3742 = vmatprep.subr.mxu0 0.0
    %3743 = vmatpush1.msra.mxu0 0.0
    %3744 = vmatprep.subr.mxu0 0.0
    %3745 = vmatpush1.msra.mxu0 0.0
    %3746 = vmatprep.subr.mxu0 0.0
    %3747 = vmatpush1.msra.mxu0 0.0
    %3748 = vmatprep.subr.mxu0 0.0
    %3749 = vmatpush1.msra.mxu0 0.0
    %3750 = vmatprep.subr.mxu0 0.0
    %3751 = vmatpush1.msra.mxu0 0.0
    %3752 = vmatprep.subr.mxu0 0.0
    %3753 = vmatpush1.msra.mxu0 0.0
    %3754 = vmatprep.subr.mxu0 0.0
    %3755 = vmatpush1.msra.mxu0 0.0
    %3756 = vmatprep.subr.mxu0 0.0
    %3757 = vmatpush1.msra.mxu0 0.0
    %3758 = vmatprep.subr.mxu0 0.0
    %3759 = vmatpush1.msra.mxu0 0.0
    %3760 = vmatprep.subr.mxu0 0.0
    %3761 = vmatpush1.msra.mxu0 0.0
    %3762 = vmatprep.subr.mxu0 0.0
    %3763 = vmatpush1.msra.mxu0 0.0
    %3764 = vmatprep.subr.mxu0 0.0
    %3765 = vmatpush1.msra.mxu0 0.0
    %3766 = vmatprep.subr.mxu0 0.0
    %3767 = vmatpush1.msra.mxu0 0.0
    %3768 = vmatprep.subr.mxu0 0.0
    %3769 = vmatpush1.msra.mxu0 0.0
    %3770 = vmatprep.subr.mxu0 0.0
    %3771 = vmatpush1.msra.mxu0 0.0
    %3772 = vmatprep.subr.mxu0 0.0
    %3773 = vmatpush1.msra.mxu0 0.0
    %3774 = vmatprep.mubr.f32.mxu0 0.0
    %3775 = vmatmul.mubr.f32.gmra.mrb[0].mxu0 %v3708
    %v3776 = vpop.f32.mrb[0].mxu0
    %v3777 = vadd.f32 0.0, %v3776
    %v3778 = vpop.f32.mrb[0].mxu0
    %v3779 = vadd.f32 0.0, %v3778
    %3780 = vdwg.mxu0
    %3781 = vmatprep.subr.mxu0 0.0
    %3782 = vmatpush1.msra.mxu0 %v3661
    %3783 = vmatprep.subr.mxu0 0.0
    %3784 = vmatpush1.msra.mxu0 %v3664
    %3785 = vmatprep.subr.mxu0 0.0
    %3786 = vmatpush1.msra.mxu0 %v3667
    %3787 = vmatprep.subr.mxu0 0.0
    %3788 = vmatpush1.msra.mxu0 %v3670
    %3789 = vmatprep.subr.mxu0 0.0
    %3790 = vmatpush1.msra.mxu0 %v3673
    %3791 = vmatprep.subr.mxu0 0.0
    %3792 = vmatpush1.msra.mxu0 %v3676
    %3793 = vmatprep.subr.mxu0 0.0
    %3794 = vmatpush1.msra.mxu0 %v3679
    %3795 = vmatprep.subr.mxu0 0.0
    %3796 = vmatpush1.msra.mxu0 %v3682
    %3797 = vmatprep.subr.mxu0 0.0
    %3798 = vmatpush1.msra.mxu0 %v3685
    %3799 = vmatprep.subr.mxu0 0.0
    %3800 = vmatpush1.msra.mxu0 %v3688
    %3801 = vmatprep.subr.mxu0 0.0
    %3802 = vmatpush1.msra.mxu0 %v3691
    %3803 = vmatprep.subr.mxu0 0.0
    %3804 = vmatpush1.msra.mxu0 %v3694
    %3805 = vmatprep.subr.mxu0 0.0
    %3806 = vmatpush1.msra.mxu0 %v3697
    %3807 = vmatprep.subr.mxu0 0.0
    %3808 = vmatpush1.msra.mxu0 %v3700
    %3809 = vmatprep.subr.mxu0 0.0
    %3810 = vmatpush1.msra.mxu0 %v3703
    %3811 = vmatprep.subr.mxu0 0.0
    %3812 = vmatpush1.msra.mxu0 %v3706
    %3813 = vmatprep.subr.mxu0 0.0
    %3814 = vmatpush1.msra.mxu0 0.0
    %3815 = vmatprep.subr.mxu0 0.0
    %3816 = vmatpush1.msra.mxu0 0.0
    %3817 = vmatprep.subr.mxu0 0.0
    %3818 = vmatpush1.msra.mxu0 0.0
    %3819 = vmatprep.subr.mxu0 0.0
    %3820 = vmatpush1.msra.mxu0 0.0
    %3821 = vmatprep.subr.mxu0 0.0
    %3822 = vmatpush1.msra.mxu0 0.0
    %3823 = vmatprep.subr.mxu0 0.0
    %3824 = vmatpush1.msra.mxu0 0.0
    %3825 = vmatprep.subr.mxu0 0.0
    %3826 = vmatpush1.msra.mxu0 0.0
    %3827 = vmatprep.subr.mxu0 0.0
    %3828 = vmatpush1.msra.mxu0 0.0
    %3829 = vmatprep.subr.mxu0 0.0
    %3830 = vmatpush1.msra.mxu0 0.0
    %3831 = vmatprep.subr.mxu0 0.0
    %3832 = vmatpush1.msra.mxu0 0.0
    %3833 = vmatprep.subr.mxu0 0.0
    %3834 = vmatpush1.msra.mxu0 0.0
    %3835 = vmatprep.subr.mxu0 0.0
    %3836 = vmatpush1.msra.mxu0 0.0
    %3837 = vmatprep.subr.mxu0 0.0
    %3838 = vmatpush1.msra.mxu0 0.0
    %3839 = vmatprep.subr.mxu0 0.0
    %3840 = vmatpush1.msra.mxu0 0.0
    %3841 = vmatprep.subr.mxu0 0.0
    %3842 = vmatpush1.msra.mxu0 0.0
    %3843 = vmatprep.subr.mxu0 0.0
    %3844 = vmatpush1.msra.mxu0 0.0
    %3845 = vmatprep.mubr.f32.mxu0 0.0
    %3846 = vmatmul.mubr.f32.gmra.mrb[0].mxu0 %v3708
    %v3847 = vpop.f32.mrb[0].mxu0
    %v3848 = vadd.f32 0.0, %v3847
    %v3849 = vpop.f32.mrb[0].mxu0
    %3850 = vdwg.mxu0
    %v3852 = vrot.slane %v3777, 6
    %v3854 = vadd.f32 %v3431, %v3852
    %v3855 = vxor.u32 %v3854, 2147483648
    %v3856 = vmul.f32 %v3855, 1.442695
    %v3857 = vpow.pop %v3856
    %v3858 = vadd.f32 %v3857, 1.0
    %v3859 = vrcp.pop %v3858
    %v3860 = vmul.f32 1.0, %v3859
    %v3862 = vrot.slane %v3779, 6
    %v3864 = vadd.f32 %v3432, %v3862
    %v3865 = vxor.u32 %v3864, 2147483648
    %v3866 = vmul.f32 %v3865, 1.442695
    %v3867 = vpow.pop %v3866
    %v3868 = vadd.f32 %v3867, 1.0
    %v3869 = vrcp.pop %v3868
    %v3870 = vmul.f32 1.0, %v3869
    %v3871 = vadd.f32 %v3848, %v695
    %v3873 = vrot.slane %v3871, 6
    %v3875 = vmul.f32 %v3860, %v3873
    %v3876 = vadd.f32 %v3433, %v3875
    %v3877 = vtanh.pop %v3876
    %v3878 = vsub.f32 1.0, %v3870
    %v3879 = vmul.f32 %v3878, %v3877
    %v3880 = vrot.slane %v3421, 2
    %v3882 = vmul.f32 %v3870, %v3880
    %v3883 = vadd.f32 %v3879, %v3882
    %v3884 = vmax.f32 %v3658, -5.0
    %v3885 = vmin.f32 %v3884, 5.0
    %3886 = vst [vmem:[%s15 + $0x10] sm:$0x30] %v3885
    %v3887 = vmax.f32 %v3883, -5.0
    %v3888 = vmin.f32 %v3887, 5.0
    %3889 = vst [vmem:[%s15 + $0x8] sm:$0xc] %v3888
    %v3890 = vld [vmem:[#allocation2 + $0x30] sm:$0xc0]
    %v3891 = vld [vmem:[#allocation2 + $0x38] sm:$0xc0]
    %v3892 = vld [vmem:[#allocation2 + $0x40] sm:$0xc0]
    %v3893 = vld [vmem:[#allocation2 + $0x18] sm:$0x3]
    %v3894 = vld [vmem:[#allocation2 + $0x20] sm:$0x3]
    %v3895 = vld [vmem:[#allocation2 + $0x28] sm:$0x3]
    %v3896 = vld [vmem:[#allocation3] sm:$0xff]
    %v3897 = vld [vmem:[#allocation3 + $0x8] sm:$0xff]
    %v3898 = vld [vmem:[#allocation3 + $0x10] sm:$0xff]
    %v3899 = vld [vmem:[#allocation3 + $0x18] sm:$0xff]
    %v3900 = vld [vmem:[#allocation3 + $0x20] sm:$0xff]
    %v3901 = vld [vmem:[#allocation3 + $0x28] sm:$0xff]
    %v3902 = vld [vmem:[#allocation3 + $0x30] sm:$0xff]
    %v3903 = vld [vmem:[#allocation3 + $0x38] sm:$0xff]
    %v3904 = vld [vmem:[#allocation3 + $0x40] sm:$0xff]
    %v3905 = vld [vmem:[#allocation3 + $0x48] sm:$0xff]
    %v3906 = vld [vmem:[#allocation3 + $0x50] sm:$0xff]
    %v3907 = vld [vmem:[#allocation3 + $0x58] sm:$0xff]
    %v3908 = vld [vmem:[#allocation3 + $0x60] sm:$0xff]
    %v3909 = vld [vmem:[#allocation3 + $0x68] sm:$0xff]
    %v3910 = vld [vmem:[#allocation3 + $0x70] sm:$0xff]
    %v3911 = vld [vmem:[#allocation3 + $0x78] sm:$0xff]
    %v3912 = vld [vmem:[#allocation3 + $0x80] sm:$0xff]
    %v3913 = vld [vmem:[#allocation3 + $0x88] sm:$0xff]
    %v3914 = vld [vmem:[#allocation3 + $0x90] sm:$0xff]
    %v3915 = vld [vmem:[#allocation3 + $0x98] sm:$0xff]
    %v3916 = vld [vmem:[#allocation3 + $0xa0] sm:$0xff]
    %v3917 = vld [vmem:[#allocation3 + $0xa8] sm:$0xff]
    %v3918 = vld [vmem:[#allocation3 + $0xb0] sm:$0xff]
    %v3919 = vld [vmem:[#allocation3 + $0xb8] sm:$0xff]
    %v3920 = vld [vmem:[#allocation3 + $0xc0] sm:$0xff]
    %v3921 = vld [vmem:[#allocation3 + $0xc8] sm:$0xff]
    %v3922 = vld [vmem:[#allocation3 + $0xd0] sm:$0xff]
    %v3923 = vld [vmem:[#allocation3 + $0xd8] sm:$0xff]
    %v3924 = vld [vmem:[#allocation3 + $0xe0] sm:$0xff]
    %v3925 = vld [vmem:[#allocation3 + $0xe8] sm:$0xff]
    %v3926 = vld [vmem:[#allocation3 + $0xf0] sm:$0xff]
    %v3927 = vld [vmem:[#allocation3 + $0xf8] sm:$0xff]
    %v3928 = vld [vmem:[#allocation3 + $0x100] sm:$0xff]
    %v3929 = vld [vmem:[#allocation3 + $0x108] sm:$0xff]
    %v3930 = vld [vmem:[#allocation3 + $0x110] sm:$0xff]
    %v3931 = vld [vmem:[#allocation3 + $0x118] sm:$0xff]
    %v3932 = vld [vmem:[#allocation3 + $0x120] sm:$0xff]
    %v3933 = vld [vmem:[#allocation3 + $0x128] sm:$0xff]
    %v3934 = vld [vmem:[#allocation3 + $0x130] sm:$0xff]
    %v3935 = vld [vmem:[#allocation3 + $0x138] sm:$0xff]
    %v3936 = vld [vmem:[#allocation3 + $0x140] sm:$0xff]
    %v3937 = vld [vmem:[#allocation3 + $0x148] sm:$0xff]
    %v3938 = vld [vmem:[#allocation3 + $0x150] sm:$0xff]
    %v3939 = vld [vmem:[#allocation3 + $0x158] sm:$0xff]
    %v3940 = vld [vmem:[#allocation3 + $0x160] sm:$0xff]
    %v3941 = vld [vmem:[#allocation3 + $0x168] sm:$0xff]
    %v3942 = vld [vmem:[#allocation3 + $0x170] sm:$0xff]
    %v3943 = vld [vmem:[#allocation3 + $0x178] sm:$0xff]
    %v3945 = vrot.slane %v3658, 4
    %3947 = vmatprep.subr.mxu0 %v3897
    %3948 = vmatpush1.msra.mxu0 %v3896
    %3949 = vmatprep.subr.mxu0 %v3900
    %3950 = vmatpush1.msra.mxu0 %v3899
    %3951 = vmatprep.subr.mxu0 %v3903
    %3952 = vmatpush1.msra.mxu0 %v3902
    %3953 = vmatprep.subr.mxu0 %v3906
    %3954 = vmatpush1.msra.mxu0 %v3905
    %3955 = vmatprep.subr.mxu0 %v3909
    %3956 = vmatpush1.msra.mxu0 %v3908
    %3957 = vmatprep.subr.mxu0 %v3912
    %3958 = vmatpush1.msra.mxu0 %v3911
    %3959 = vmatprep.subr.mxu0 %v3915
    %3960 = vmatpush1.msra.mxu0 %v3914
    %3961 = vmatprep.subr.mxu0 %v3918
    %3962 = vmatpush1.msra.mxu0 %v3917
    %3963 = vmatprep.subr.mxu0 %v3921
    %3964 = vmatpush1.msra.mxu0 %v3920
    %3965 = vmatprep.subr.mxu0 %v3924
    %3966 = vmatpush1.msra.mxu0 %v3923
    %3967 = vmatprep.subr.mxu0 %v3927
    %3968 = vmatpush1.msra.mxu0 %v3926
    %3969 = vmatprep.subr.mxu0 %v3930
    %3970 = vmatpush1.msra.mxu0 %v3929
    %3971 = vmatprep.subr.mxu0 %v3933
    %3972 = vmatpush1.msra.mxu0 %v3932
    %3973 = vmatprep.subr.mxu0 %v3936
    %3974 = vmatpush1.msra.mxu0 %v3935
    %3975 = vmatprep.subr.mxu0 %v3939
    %3976 = vmatpush1.msra.mxu0 %v3938
    %3977 = vmatprep.subr.mxu0 %v3942
    %3978 = vmatpush1.msra.mxu0 %v3941
    %3979 = vmatprep.subr.mxu0 0.0
    %3980 = vmatpush1.msra.mxu0 0.0
    %3981 = vmatprep.subr.mxu0 0.0
    %3982 = vmatpush1.msra.mxu0 0.0
    %3983 = vmatprep.subr.mxu0 0.0
    %3984 = vmatpush1.msra.mxu0 0.0
    %3985 = vmatprep.subr.mxu0 0.0
    %3986 = vmatpush1.msra.mxu0 0.0
    %3987 = vmatprep.subr.mxu0 0.0
    %3988 = vmatpush1.msra.mxu0 0.0
    %3989 = vmatprep.subr.mxu0 0.0
    %3990 = vmatpush1.msra.mxu0 0.0
    %3991 = vmatprep.subr.mxu0 0.0
    %3992 = vmatpush1.msra.mxu0 0.0
    %3993 = vmatprep.subr.mxu0 0.0
    %3994 = vmatpush1.msra.mxu0 0.0
    %3995 = vmatprep.subr.mxu0 0.0
    %3996 = vmatpush1.msra.mxu0 0.0
    %3997 = vmatprep.subr.mxu0 0.0
    %3998 = vmatpush1.msra.mxu0 0.0
    %3999 = vmatprep.subr.mxu0 0.0
    %4000 = vmatpush1.msra.mxu0 0.0
    %4001 = vmatprep.subr.mxu0 0.0
    %4002 = vmatpush1.msra.mxu0 0.0
    %4003 = vmatprep.subr.mxu0 0.0
    %4004 = vmatpush1.msra.mxu0 0.0
    %4005 = vmatprep.subr.mxu0 0.0
    %4006 = vmatpush1.msra.mxu0 0.0
    %4007 = vmatprep.subr.mxu0 0.0
    %4008 = vmatpush1.msra.mxu0 0.0
    %4009 = vmatprep.subr.mxu0 0.0
    %4010 = vmatpush1.msra.mxu0 0.0
    %4011 = vmatprep.mubr.f32.mxu0 0.0
    %4012 = vmatmul.mubr.f32.gmra.mrb[0].mxu0 %v3945
    %v4013 = vpop.f32.mrb[0].mxu0
    %v4014 = vadd.f32 0.0, %v4013
    %v4015 = vpop.f32.mrb[0].mxu0
    %v4016 = vadd.f32 0.0, %v4015
    %4017 = vdwg.mxu0
    %4018 = vmatprep.subr.mxu0 0.0
    %4019 = vmatpush1.msra.mxu0 %v3898
    %4020 = vmatprep.subr.mxu0 0.0
    %4021 = vmatpush1.msra.mxu0 %v3901
    %4022 = vmatprep.subr.mxu0 0.0
    %4023 = vmatpush1.msra.mxu0 %v3904
    %4024 = vmatprep.subr.mxu0 0.0
    %4025 = vmatpush1.msra.mxu0 %v3907
    %4026 = vmatprep.subr.mxu0 0.0
    %4027 = vmatpush1.msra.mxu0 %v3910
    %4028 = vmatprep.subr.mxu0 0.0
    %4029 = vmatpush1.msra.mxu0 %v3913
    %4030 = vmatprep.subr.mxu0 0.0
    %4031 = vmatpush1.msra.mxu0 %v3916
    %4032 = vmatprep.subr.mxu0 0.0
    %4033 = vmatpush1.msra.mxu0 %v3919
    %4034 = vmatprep.subr.mxu0 0.0
    %4035 = vmatpush1.msra.mxu0 %v3922
    %4036 = vmatprep.subr.mxu0 0.0
    %4037 = vmatpush1.msra.mxu0 %v3925
    %4038 = vmatprep.subr.mxu0 0.0
    %4039 = vmatpush1.msra.mxu0 %v3928
    %4040 = vmatprep.subr.mxu0 0.0
    %4041 = vmatpush1.msra.mxu0 %v3931
    %4042 = vmatprep.subr.mxu0 0.0
    %4043 = vmatpush1.msra.mxu0 %v3934
    %4044 = vmatprep.subr.mxu0 0.0
    %4045 = vmatpush1.msra.mxu0 %v3937
    %4046 = vmatprep.subr.mxu0 0.0
    %4047 = vmatpush1.msra.mxu0 %v3940
    %4048 = vmatprep.subr.mxu0 0.0
    %4049 = vmatpush1.msra.mxu0 %v3943
    %4050 = vmatprep.subr.mxu0 0.0
    %4051 = vmatpush1.msra.mxu0 0.0
    %4052 = vmatprep.subr.mxu0 0.0
    %4053 = vmatpush1.msra.mxu0 0.0
    %4054 = vmatprep.subr.mxu0 0.0
    %4055 = vmatpush1.msra.mxu0 0.0
    %4056 = vmatprep.subr.mxu0 0.0
    %4057 = vmatpush1.msra.mxu0 0.0
    %4058 = vmatprep.subr.mxu0 0.0
    %4059 = vmatpush1.msra.mxu0 0.0
    %4060 = vmatprep.subr.mxu0 0.0
    %4061 = vmatpush1.msra.mxu0 0.0
    %4062 = vmatprep.subr.mxu0 0.0
    %4063 = vmatpush1.msra.mxu0 0.0
    %4064 = vmatprep.subr.mxu0 0.0
    %4065 = vmatpush1.msra.mxu0 0.0
    %4066 = vmatprep.subr.mxu0 0.0
    %4067 = vmatpush1.msra.mxu0 0.0
    %4068 = vmatprep.subr.mxu0 0.0
    %4069 = vmatpush1.msra.mxu0 0.0
    %4070 = vmatprep.subr.mxu0 0.0
    %4071 = vmatpush1.msra.mxu0 0.0
    %4072 = vmatprep.subr.mxu0 0.0
    %4073 = vmatpush1.msra.mxu0 0.0
    %4074 = vmatprep.subr.mxu0 0.0
    %4075 = vmatpush1.msra.mxu0 0.0
    %4076 = vmatprep.subr.mxu0 0.0
    %4077 = vmatpush1.msra.mxu0 0.0
    %4078 = vmatprep.subr.mxu0 0.0
    %4079 = vmatpush1.msra.mxu0 0.0
    %4080 = vmatprep.subr.mxu0 0.0
    %4081 = vmatpush1.msra.mxu0 0.0
    %4082 = vmatprep.mubr.f32.mxu0 0.0
    %4083 = vmatmul.mubr.f32.gmra.mrb[0].mxu0 %v3945
    %v4084 = vpop.f32.mrb[0].mxu0
    %v4085 = vadd.f32 0.0, %v4084
    %v4086 = vpop.f32.mrb[0].mxu0
    %4087 = vdwg.mxu0
    %v4089 = vrot.slane %v4014, 2
    %v4091 = vadd.f32 %v3890, %v4089
    %v4092 = vxor.u32 %v4091, 2147483648
    %v4093 = vmul.f32 %v4092, 1.442695
    %v4094 = vpow.pop %v4093
    %v4095 = vadd.f32 %v4094, 1.0
    %v4096 = vrcp.pop %v4095
    %v4097 = vmul.f32 1.0, %v4096
    %v4099 = vrot.slane %v4016, 2
    %v4101 = vadd.f32 %v3891, %v4099
    %v4102 = vxor.u32 %v4101, 2147483648
    %v4103 = vmul.f32 %v4102, 1.442695
    %v4104 = vpow.pop %v4103
    %v4105 = vadd.f32 %v4104, 1.0
    %v4106 = vrcp.pop %v4105
    %v4107 = vmul.f32 1.0, %v4106
    %v4108 = vadd.f32 %v4085, %v688
    %v4110 = vrot.slane %v4108, 2
    %v4112 = vmul.f32 %v4097, %v4110
    %v4113 = vadd.f32 %v3892, %v4112
    %v4114 = vtanh.pop %v4113
    %v4115 = vsub.f32 1.0, %v4107
    %v4116 = vmul.f32 %v4115, %v4114
    %v4117 = vrot.slane %v3658, 6
    %v4119 = vmul.f32 %v4107, %v4117
    %v4120 = vadd.f32 %v4116, %v4119
    %v4121 = vld [vmem:[#allocation5] sm:$0xff]
    %v4122 = vld [vmem:[#allocation5 + $0x8] sm:$0xff]
    %v4123 = vld [vmem:[#allocation5 + $0x10] sm:$0xff]
    %v4124 = vld [vmem:[#allocation5 + $0x18] sm:$0xff]
    %v4125 = vld [vmem:[#allocation5 + $0x20] sm:$0xff]
    %v4126 = vld [vmem:[#allocation5 + $0x28] sm:$0xff]
    %v4127 = vld [vmem:[#allocation5 + $0x30] sm:$0xff]
    %v4128 = vld [vmem:[#allocation5 + $0x38] sm:$0xff]
    %v4129 = vld [vmem:[#allocation5 + $0x40] sm:$0xff]
    %v4130 = vld [vmem:[#allocation5 + $0x48] sm:$0xff]
    %v4131 = vld [vmem:[#allocation5 + $0x50] sm:$0xff]
    %v4132 = vld [vmem:[#allocation5 + $0x58] sm:$0xff]
    %v4133 = vld [vmem:[#allocation5 + $0x60] sm:$0xff]
    %v4134 = vld [vmem:[#allocation5 + $0x68] sm:$0xff]
    %v4135 = vld [vmem:[#allocation5 + $0x70] sm:$0xff]
    %v4136 = vld [vmem:[#allocation5 + $0x78] sm:$0xff]
    %v4137 = vld [vmem:[#allocation5 + $0x80] sm:$0xff]
    %v4138 = vld [vmem:[#allocation5 + $0x88] sm:$0xff]
    %v4139 = vld [vmem:[#allocation5 + $0x90] sm:$0xff]
    %v4140 = vld [vmem:[#allocation5 + $0x98] sm:$0xff]
    %v4141 = vld [vmem:[#allocation5 + $0xa0] sm:$0xff]
    %v4142 = vld [vmem:[#allocation5 + $0xa8] sm:$0xff]
    %v4143 = vld [vmem:[#allocation5 + $0xb0] sm:$0xff]
    %v4144 = vld [vmem:[#allocation5 + $0xb8] sm:$0xff]
    %v4145 = vld [vmem:[#allocation5 + $0xc0] sm:$0xff]
    %v4146 = vld [vmem:[#allocation5 + $0xc8] sm:$0xff]
    %v4147 = vld [vmem:[#allocation5 + $0xd0] sm:$0xff]
    %v4148 = vld [vmem:[#allocation5 + $0xd8] sm:$0xff]
    %v4149 = vld [vmem:[#allocation5 + $0xe0] sm:$0xff]
    %v4150 = vld [vmem:[#allocation5 + $0xe8] sm:$0xff]
    %v4151 = vld [vmem:[#allocation5 + $0xf0] sm:$0xff]
    %v4152 = vld [vmem:[#allocation5 + $0xf8] sm:$0xff]
    %v4153 = vld [vmem:[#allocation5 + $0x100] sm:$0xff]
    %v4154 = vld [vmem:[#allocation5 + $0x108] sm:$0xff]
    %v4155 = vld [vmem:[#allocation5 + $0x110] sm:$0xff]
    %v4156 = vld [vmem:[#allocation5 + $0x118] sm:$0xff]
    %v4157 = vld [vmem:[#allocation5 + $0x120] sm:$0xff]
    %v4158 = vld [vmem:[#allocation5 + $0x128] sm:$0xff]
    %v4159 = vld [vmem:[#allocation5 + $0x130] sm:$0xff]
    %v4160 = vld [vmem:[#allocation5 + $0x138] sm:$0xff]
    %v4161 = vld [vmem:[#allocation5 + $0x140] sm:$0xff]
    %v4162 = vld [vmem:[#allocation5 + $0x148] sm:$0xff]
    %v4163 = vld [vmem:[#allocation5 + $0x150] sm:$0xff]
    %v4164 = vld [vmem:[#allocation5 + $0x158] sm:$0xff]
    %v4165 = vld [vmem:[#allocation5 + $0x160] sm:$0xff]
    %v4166 = vld [vmem:[#allocation5 + $0x168] sm:$0xff]
    %v4167 = vld [vmem:[#allocation5 + $0x170] sm:$0xff]
    %v4168 = vld [vmem:[#allocation5 + $0x178] sm:$0xff]
    %v4170 = vrot.slane %v3883, 2
    %4172 = vmatprep.subr.mxu0 %v4122
    %4173 = vmatpush1.msra.mxu0 %v4121
    %4174 = vmatprep.subr.mxu0 %v4125
    %4175 = vmatpush1.msra.mxu0 %v4124
    %4176 = vmatprep.subr.mxu0 %v4128
    %4177 = vmatpush1.msra.mxu0 %v4127
    %4178 = vmatprep.subr.mxu0 %v4131
    %4179 = vmatpush1.msra.mxu0 %v4130
    %4180 = vmatprep.subr.mxu0 %v4134
    %4181 = vmatpush1.msra.mxu0 %v4133
    %4182 = vmatprep.subr.mxu0 %v4137
    %4183 = vmatpush1.msra.mxu0 %v4136
    %4184 = vmatprep.subr.mxu0 %v4140
    %4185 = vmatpush1.msra.mxu0 %v4139
    %4186 = vmatprep.subr.mxu0 %v4143
    %4187 = vmatpush1.msra.mxu0 %v4142
    %4188 = vmatprep.subr.mxu0 %v4146
    %4189 = vmatpush1.msra.mxu0 %v4145
    %4190 = vmatprep.subr.mxu0 %v4149
    %4191 = vmatpush1.msra.mxu0 %v4148
    %4192 = vmatprep.subr.mxu0 %v4152
    %4193 = vmatpush1.msra.mxu0 %v4151
    %4194 = vmatprep.subr.mxu0 %v4155
    %4195 = vmatpush1.msra.mxu0 %v4154
    %4196 = vmatprep.subr.mxu0 %v4158
    %4197 = vmatpush1.msra.mxu0 %v4157
    %4198 = vmatprep.subr.mxu0 %v4161
    %4199 = vmatpush1.msra.mxu0 %v4160
    %4200 = vmatprep.subr.mxu0 %v4164
    %4201 = vmatpush1.msra.mxu0 %v4163
    %4202 = vmatprep.subr.mxu0 %v4167
    %4203 = vmatpush1.msra.mxu0 %v4166
    %4204 = vmatprep.subr.mxu0 0.0
    %4205 = vmatpush1.msra.mxu0 0.0
    %4206 = vmatprep.subr.mxu0 0.0
    %4207 = vmatpush1.msra.mxu0 0.0
    %4208 = vmatprep.subr.mxu0 0.0
    %4209 = vmatpush1.msra.mxu0 0.0
    %4210 = vmatprep.subr.mxu0 0.0
    %4211 = vmatpush1.msra.mxu0 0.0
    %4212 = vmatprep.subr.mxu0 0.0
    %4213 = vmatpush1.msra.mxu0 0.0
    %4214 = vmatprep.subr.mxu0 0.0
    %4215 = vmatpush1.msra.mxu0 0.0
    %4216 = vmatprep.subr.mxu0 0.0
    %4217 = vmatpush1.msra.mxu0 0.0
    %4218 = vmatprep.subr.mxu0 0.0
    %4219 = vmatpush1.msra.mxu0 0.0
    %4220 = vmatprep.subr.mxu0 0.0
    %4221 = vmatpush1.msra.mxu0 0.0
    %4222 = vmatprep.subr.mxu0 0.0
    %4223 = vmatpush1.msra.mxu0 0.0
    %4224 = vmatprep.subr.mxu0 0.0
    %4225 = vmatpush1.msra.mxu0 0.0
    %4226 = vmatprep.subr.mxu0 0.0
    %4227 = vmatpush1.msra.mxu0 0.0
    %4228 = vmatprep.subr.mxu0 0.0
    %4229 = vmatpush1.msra.mxu0 0.0
    %4230 = vmatprep.subr.mxu0 0.0
    %4231 = vmatpush1.msra.mxu0 0.0
    %4232 = vmatprep.subr.mxu0 0.0
    %4233 = vmatpush1.msra.mxu0 0.0
    %4234 = vmatprep.subr.mxu0 0.0
    %4235 = vmatpush1.msra.mxu0 0.0
    %4236 = vmatprep.mubr.f32.mxu0 0.0
    %4237 = vmatmul.mubr.f32.gmra.mrb[0].mxu0 %v4170
    %v4238 = vpop.f32.mrb[0].mxu0
    %v4239 = vadd.f32 0.0, %v4238
    %v4240 = vpop.f32.mrb[0].mxu0
    %v4241 = vadd.f32 0.0, %v4240
    %4242 = vdwg.mxu0
    %4243 = vmatprep.subr.mxu0 0.0
    %4244 = vmatpush1.msra.mxu0 %v4123
    %4245 = vmatprep.subr.mxu0 0.0
    %4246 = vmatpush1.msra.mxu0 %v4126
    %4247 = vmatprep.subr.mxu0 0.0
    %4248 = vmatpush1.msra.mxu0 %v4129
    %4249 = vmatprep.subr.mxu0 0.0
    %4250 = vmatpush1.msra.mxu0 %v4132
    %4251 = vmatprep.subr.mxu0 0.0
    %4252 = vmatpush1.msra.mxu0 %v4135
    %4253 = vmatprep.subr.mxu0 0.0
    %4254 = vmatpush1.msra.mxu0 %v4138
    %4255 = vmatprep.subr.mxu0 0.0
    %4256 = vmatpush1.msra.mxu0 %v4141
    %4257 = vmatprep.subr.mxu0 0.0
    %4258 = vmatpush1.msra.mxu0 %v4144
    %4259 = vmatprep.subr.mxu0 0.0
    %4260 = vmatpush1.msra.mxu0 %v4147
    %4261 = vmatprep.subr.mxu0 0.0
    %4262 = vmatpush1.msra.mxu0 %v4150
    %4263 = vmatprep.subr.mxu0 0.0
    %4264 = vmatpush1.msra.mxu0 %v4153
    %4265 = vmatprep.subr.mxu0 0.0
    %4266 = vmatpush1.msra.mxu0 %v4156
    %4267 = vmatprep.subr.mxu0 0.0
    %4268 = vmatpush1.msra.mxu0 %v4159
    %4269 = vmatprep.subr.mxu0 0.0
    %4270 = vmatpush1.msra.mxu0 %v4162
    %4271 = vmatprep.subr.mxu0 0.0
    %4272 = vmatpush1.msra.mxu0 %v4165
    %4273 = vmatprep.subr.mxu0 0.0
    %4274 = vmatpush1.msra.mxu0 %v4168
    %4275 = vmatprep.subr.mxu0 0.0
    %4276 = vmatpush1.msra.mxu0 0.0
    %4277 = vmatprep.subr.mxu0 0.0
    %4278 = vmatpush1.msra.mxu0 0.0
    %4279 = vmatprep.subr.mxu0 0.0
    %4280 = vmatpush1.msra.mxu0 0.0
    %4281 = vmatprep.subr.mxu0 0.0
    %4282 = vmatpush1.msra.mxu0 0.0
    %4283 = vmatprep.subr.mxu0 0.0
    %4284 = vmatpush1.msra.mxu0 0.0
    %4285 = vmatprep.subr.mxu0 0.0
    %4286 = vmatpush1.msra.mxu0 0.0
    %4287 = vmatprep.subr.mxu0 0.0
    %4288 = vmatpush1.msra.mxu0 0.0
    %4289 = vmatprep.subr.mxu0 0.0
    %4290 = vmatpush1.msra.mxu0 0.0
    %4291 = vmatprep.subr.mxu0 0.0
    %4292 = vmatpush1.msra.mxu0 0.0
    %4293 = vmatprep.subr.mxu0 0.0
    %4294 = vmatpush1.msra.mxu0 0.0
    %4295 = vmatprep.subr.mxu0 0.0
    %4296 = vmatpush1.msra.mxu0 0.0
    %4297 = vmatprep.subr.mxu0 0.0
    %4298 = vmatpush1.msra.mxu0 0.0
    %4299 = vmatprep.subr.mxu0 0.0
    %4300 = vmatpush1.msra.mxu0 0.0
    %4301 = vmatprep.subr.mxu0 0.0
    %4302 = vmatpush1.msra.mxu0 0.0
    %4303 = vmatprep.subr.mxu0 0.0
    %4304 = vmatpush1.msra.mxu0 0.0
    %4305 = vmatprep.subr.mxu0 0.0
    %4306 = vmatpush1.msra.mxu0 0.0
    %4307 = vmatprep.mubr.f32.mxu0 0.0
    %4308 = vmatmul.mubr.f32.gmra.mrb[0].mxu0 %v4170
    %v4309 = vpop.f32.mrb[0].mxu0
    %v4310 = vadd.f32 0.0, %v4309
    %v4311 = vpop.f32.mrb[0].mxu0
    %4312 = vdwg.mxu0
    %v4313 = vadd.f32 %v3893, %v4239
    %v4314 = vxor.u32 %v4313, 2147483648
    %v4315 = vmul.f32 %v4314, 1.442695
    %v4316 = vpow.pop %v4315
    %v4317 = vadd.f32 %v4316, 1.0
    %v4318 = vrcp.pop %v4317
    %v4319 = vmul.f32 1.0, %v4318
    %v4320 = vadd.f32 %v3894, %v4241
    %v4321 = vxor.u32 %v4320, 2147483648
    %v4322 = vmul.f32 %v4321, 1.442695
    %v4323 = vpow.pop %v4322
    %v4324 = vadd.f32 %v4323, 1.0
    %v4325 = vrcp.pop %v4324
    %v4326 = vmul.f32 1.0, %v4325
    %v4327 = vadd.f32 %v4310, %v695
    %v4328 = vmul.f32 %v4319, %v4327
    %v4329 = vadd.f32 %v3895, %v4328
    %v4330 = vtanh.pop %v4329
    %v4331 = vsub.f32 1.0, %v4326
    %v4332 = vmul.f32 %v4331, %v4330
    %v4333 = vmul.f32 %v4326, %v4170
    %v4334 = vadd.f32 %v4332, %v4333
    %v4335 = vmax.f32 %v4120, -5.0
    %v4336 = vmin.f32 %v4335, 5.0
    %4337 = vst [vmem:[%s15 + $0x10] sm:$0xc0] %v4336
    %v4338 = vmax.f32 %v4334, -5.0
    %v4339 = vmin.f32 %v4338, 5.0
    %4340 = vst [vmem:[%s15 + $0x8] sm:$0x3] %v4339
    // Predicated region
    $region70: #{calcium_net_forward.1} parent=1 // pred_check
      _
    $region71: #{calcium_net_forward.1} parent=1 // pred_check_branch
      %4342 = sbr.rel (0) target = $region73
    $region72: #{calcium_net_forward.1} parent=1 // pred_region
      _
    $region73: #{calcium_net_forward.1} parent=1 // pred_fallthru
      _
    // Predicated region
    $region74: #{calcium_net_forward.1} parent=1 // pred_check
      _
    $region75: #{calcium_net_forward.1} parent=1 // pred_check_branch
      %4344 = sbr.rel (0) target = $region77
    $region76: #{calcium_net_forward.1} parent=1 // pred_region
      _
    $region77: #{calcium_net_forward.1} parent=1 // pred_fallthru
      _
    // Predicated region
    $region78: #{calcium_net_forward.1} parent=1 // pred_check
      _
    $region79: #{calcium_net_forward.1} parent=1 // pred_check_branch
      %4346 = sbr.rel (0) target = $region81
    $region80: #{calcium_net_forward.1} parent=1 // pred_region
      _
    $region81: #{calcium_net_forward.1} parent=1 // pred_fallthru
      _
    // Predicated region
    $region82: #{calcium_net_forward.1} parent=1 // pred_check
      _
    $region83: #{calcium_net_forward.1} parent=1 // pred_check_branch
      %4348 = sbr.rel (0) target = $region85
    $region84: #{calcium_net_forward.1} parent=1 // pred_region
      _
    $region85: #{calcium_net_forward.1} parent=1 // pred_fallthru
      _
    // Predicated region
    $region86: #{calcium_net_forward.1} parent=1 // pred_check
      _
    $region87: #{calcium_net_forward.1} parent=1 // pred_check_branch
      %4350 = sbr.rel (0) target = $region89
    $region88: #{calcium_net_forward.1} parent=1 // pred_region
      _
    $region89: #{calcium_net_forward.1} parent=1 // pred_fallthru
      _
    // Predicated region
    $region90: #{calcium_net_forward.1} parent=1 // pred_check
      _
    $region91: #{calcium_net_forward.1} parent=1 // pred_check_branch
      %4352 = sbr.rel (0) target = $region93
    $region92: #{calcium_net_forward.1} parent=1 // pred_region
      _
    $region93: #{calcium_net_forward.1} parent=1 // pred_fallthru
      _
    %4353 = vsyncpa [#allocation4], 1
    %4354 = vsyncpa [#allocation6], 1

</llo_original>
